<compile_context>
chip_gen: v7x
topology: tpu7x:2x2x1
jax: 0.10.0
libtpu: 0.0.40
codegen_flags: <defaults>
</compile_context>

<pallas_src>
import functools

import jax
import jax.numpy as jnp
from jax.experimental import pallas as pl
from jax.experimental.pallas import tpu as pltpu

BN_EPS = 1e-5   # nn.BatchNorm1d default eps
LANE = 128      # TPU lane width; packed params / activations use this width


def _layer_dims(in_dim, hidden_dim, latent_dim):
    # (fan_in, fan_out, followed_by_batchnorm_relu) for the six Linear layers.
    return [
        (in_dim, hidden_dim, True),
        (hidden_dim, hidden_dim, True),
        (hidden_dim, latent_dim, False),
        (latent_dim, hidden_dim, True),
        (hidden_dim, hidden_dim, True),
        (hidden_dim, in_dim, False),
    ]


def init_params(key, in_dim, hidden_dim, latent_dim):
    """Deterministic init mirroring the module's layer shapes.

    Flat tuple, per layer: W [fi, fo], b [1, fo], and (gamma, beta) [1, fo]
    for layers followed by BatchNorm1d (gamma=1, beta=0 defaults).
    """
    dims = _layer_dims(in_dim, hidden_dim, latent_dim)
    keys = jax.random.split(key, 2 * len(dims))
    params, ki = [], 0
    for (fi, fo, has_bn) in dims:
        bound = 1.0 / (fi ** 0.5)
        w = jax.random.uniform(keys[ki], (fi, fo), jnp.float32, -bound, bound); ki += 1
        b = jax.random.uniform(keys[ki], (1, fo), jnp.float32, -bound, bound); ki += 1
        params += [w, b]
        if has_bn:
            params += [jnp.ones((1, fo), jnp.float32), jnp.zeros((1, fo), jnp.float32)]
    return tuple(params)


def pack_params(params, in_dim, hidden_dim, latent_dim):
    """Pack the 20 tiny tensors into two lane-dense arrays + static metadata.

    wpack: [6*P, P]  one zero-padded [P, P] weight block per Linear (P = 128*k).
    vpack: [R, P]    one zero-padded bias / BN-gamma / BN-beta row vector each.
    meta:  per layer (bias_row, gamma_row, beta_row, has_bn).
    """
    dims = _layer_dims(in_dim, hidden_dim, latent_dim)
    P = ((max(in_dim, hidden_dim, latent_dim) + LANE - 1) // LANE) * LANE
    idx, w_blocks, v_rows, meta = 0, [], [], []
    for (fi, fo, has_bn) in dims:
        w, b = params[idx], params[idx + 1]; idx += 2
        w_blocks.append(jnp.zeros((P, P), jnp.float32).at[:fi, :fo].set(w))
        b_row = len(v_rows)
        v_rows.append(jnp.zeros((1, P), jnp.float32).at[:, :fo].set(b))
        if has_bn:
            g, be = params[idx], params[idx + 1]; idx += 2
            g_row = len(v_rows)
            v_rows.append(jnp.zeros((1, P), jnp.float32).at[:, :fo].set(g))
            be_row = len(v_rows)
            v_rows.append(jnp.zeros((1, P), jnp.float32).at[:, :fo].set(be))
        else:
            g_row = be_row = -1
        meta.append((b_row, g_row, be_row, has_bn))
    while len(v_rows) % 8:                      # sublane-align the vector pack
        v_rows.append(jnp.zeros((1, P), jnp.float32))
    return jnp.concatenate(w_blocks, 0), jnp.concatenate(v_rows, 0), tuple(meta)


def topo_ae_kernel(x_ref, w_ref, v_ref, xr_ref, z_ref, loss_ref, *,
                   meta, in_dim, steps, max_edge_length, beta, lam):
    f32 = jnp.float32
    P = w_ref.shape[1]
    x = x_ref[0]                                   # [N, P]; lanes >= in_dim are zero
    N = x.shape[0]

    # ------------- encoder / decoder MLP at full 128-lane width -------------
    def linear(h, layer):
        w = w_ref[layer * P:(layer + 1) * P, :]    # static [P, P] slice
        b = v_ref[meta[layer][0]:meta[layer][0] + 1, :]
        return jnp.dot(h, w, preferred_element_type=f32) + b

    def bn_relu(h, layer):
        # BatchNorm1d training-mode forward: one-pass batch stats (biased var).
        _, g_row, be_row, _ = meta[layer]
        g = v_ref[g_row:g_row + 1, :]
        be = v_ref[be_row:be_row + 1, :]
        mu = jnp.mean(h, axis=0, keepdims=True)
        var = jnp.maximum(jnp.mean(h * h, axis=0, keepdims=True) - mu * mu, 0.0)
        return jnp.maximum((h - mu) * jax.lax.rsqrt(var + BN_EPS) * g + be, 0.0)

    def mlp(h, layers):
        for l in layers:
            h = linear(h, l)
            if meta[l][3]:
                h = bn_relu(h, l)
        return h

    z = mlp(x, (0, 1, 2))                          # [N, P]; lanes >= latent_dim stay 0
    x_recon = mlp(z, (3, 4, 5))                    # [N, P]; lanes >= in_dim stay 0

    xr_ref[0] = x_recon                            # full-width, unmasked stores
    z_ref[0] = z

    # MSE over the true [N, in_dim] entries (pad lanes are identically zero).
    diff = x - x_recon
    recon_loss = jnp.sum(diff * diff) * (1.0 / (N * in_dim))

    # ------- smooth Rips ECC loss via Gram-matrix pairwise distances -------
    ii = jax.lax.broadcasted_iota(jnp.int32, (N, N), 0)
    jj = jax.lax.broadcasted_iota(jnp.int32, (N, N), 1)
    diag = ii == jj

    def norm_dists(pts):
        c = pts - jnp.mean(pts, axis=0, keepdims=True)          # centered cloud [N, P]
        g = jnp.dot(c, c.T, preferred_element_type=f32)         # [N, N] Gram, one matmul
        sq_col = jnp.sum(c * c, axis=1, keepdims=True)          # [N, 1] squared norms
        sq_row = jnp.sum(jnp.where(diag, g, 0.0), axis=0,
                         keepdims=True)                         # [1, N] = diag(G)
        d2 = jnp.maximum(sq_col + sq_row - 2.0 * g, 0.0)        # clamp round-off negatives
        inv = 1.0 / jnp.maximum(jnp.sqrt(jnp.max(sq_col)), 1e-20)  # guarded 1/max_norm
        return jnp.where(diag, 0.0, jnp.sqrt(d2) * inv)         # exact-zero self distances

    d_x = norm_dists(x)
    d_z = norm_dists(z)

    #   ecc(t) = N*sig(t/b) - sum_{i<j} sig((t-d_ij)/b)
    #          = 1.5*N*sig(t/b) - 0.5*sum_{i,j} sig((t-d_ij)/b)   (d symmetric, d_ii = 0)
    # In ecc_x - ecc_z the vertex / diagonal terms and, with
    # sig(u/b) = 0.5*(tanh(u/2b)+1), the "+1" cancel exactly:
    #   |ecc_x - ecc_z| = 0.25 * |sum_{i,j} tanh((t-dx)/2b) - tanh((t-dz)/2b)|
    inv2beta = 0.5 / beta
    dt = max_edge_length / max(steps - 1, 1)       # tseq = linspace(0, mel, steps)
    acc = jnp.zeros((), f32)
    for s in range(steps):                         # static unroll; EUP tanh dominates
        t_s = s * dt
        step_diff = (jnp.tanh((t_s - d_x) * inv2beta)
                     - jnp.tanh((t_s - d_z) * inv2beta))
        acc = acc + jnp.abs(jnp.sum(step_diff))
    topo_loss = acc * (0.25 / steps)

    # Losses leave as one lane-dense [8, 128] tile: lane0=total, 1=recon, 2=lam*topo.
    lane = jax.lax.broadcasted_iota(jnp.int32, (8, LANE), 1)
    total = recon_loss + lam * topo_loss
    loss_ref[0] = jnp.where(lane == 0, total,
                            jnp.where(lane == 1, recon_loss, lam * topo_loss))


def topo_autoencoder_forward(xs, wpack, vpack, meta, *, in_dim, latent_dim,
                             steps, max_edge_length, beta, lam):
    """xs: [clouds, points, in_dim]; each cloud is one module forward()."""
    C, N, _ = xs.shape
    P = wpack.shape[1]
    x_pad = jnp.zeros((C, N, P), jnp.float32).at[:, :, :in_dim].set(
        xs.astype(jnp.float32))                     # lane-dense, zero-padded input

    kernel = functools.partial(
        topo_ae_kernel, meta=meta, in_dim=in_dim, steps=steps,
        max_edge_length=max_edge_length, beta=beta, lam=lam)

    xr_pad, z_pad, loss_tile = pl.pallas_call(
        kernel,
        grid=(C,),
        out_shape=(
            jax.ShapeDtypeStruct((C, N, P), jnp.float32),      # x_recon (padded lanes)
            jax.ShapeDtypeStruct((C, N, P), jnp.float32),      # z (padded lanes)
            jax.ShapeDtypeStruct((C, 8, LANE), jnp.float32),   # per-cloud loss tile
        ),
        in_specs=[
            pl.BlockSpec((1, N, P), lambda c: (c, 0, 0)),
            pl.BlockSpec(wpack.shape, lambda c: (0, 0)),       # VMEM-resident params
            pl.BlockSpec(vpack.shape, lambda c: (0, 0)),
        ],
        out_specs=(
            pl.BlockSpec((1, N, P), lambda c: (c, 0, 0)),
            pl.BlockSpec((1, N, P), lambda c: (c, 0, 0)),
            pl.BlockSpec((1, 8, LANE), lambda c: (c, 0, 0)),
        ),
        compiler_params=pltpu.CompilerParams(
            dimension_semantics=("parallel",)),
    )(x_pad, wpack, vpack)

    return (xr_pad[:, :, :in_dim],
            z_pad[:, :, :latent_dim],
            loss_tile[:, 0, :3])                    # [total, recon, lam*topo] per cloud


def reference_forward(x, params, steps, max_edge_length, beta, lam):
    """Pure-JAX single-cloud reference with the module's semantics."""
    (ew1, eb1, eg1, ebe1, ew2, eb2, eg2, ebe2, ew3, eb3,
     dw1, db1, dg1, dbe1, dw2, db2, dg2, dbe2, dw3, db3) = params

    def bn_relu(h, g, b):
        mu = h.mean(0, keepdims=True)
        var = ((h - mu) ** 2).mean(0, keepdims=True)
        return jnp.maximum((h - mu) / jnp.sqrt(var + BN_EPS) * g + b, 0.0)

    h = bn_relu(x @ ew1 + eb1, eg1, ebe1)
    h = bn_relu(h @ ew2 + eb2, eg2, ebe2)
    z = h @ ew3 + eb3
    h = bn_relu(z @ dw1 + db1, dg1, dbe1)
    h = bn_relu(h @ dw2 + db2, dg2, dbe2)
    xr = h @ dw3 + db3
    recon = jnp.mean((x - xr) ** 2)

    n = x.shape[0]
    tseq = jnp.linspace(0.0, max_edge_length, steps, dtype=jnp.float32)
    idx = jnp.arange(n)
    mask = (idx[:, None] < idx[None, :]).astype(jnp.float32)

    def ecc(pts):
        sq = jnp.sum(pts ** 2, axis=1)
        d = jnp.sqrt(jnp.maximum(sq[:, None] + sq[None, :] - 2.0 * pts @ pts.T, 0.0))
        sig = jax.nn.sigmoid((tseq[:, None, None] - d[None]) / beta) * mask[None]
        return n * jax.nn.sigmoid(tseq / beta) - sig.sum((1, 2))

    xc = x - x.mean(0, keepdims=True)
    zc = z - z.mean(0, keepdims=True)
    xn = jnp.max(jnp.sqrt(jnp.sum(xc ** 2, axis=1)))
    zn = jnp.max(jnp.sqrt(jnp.sum(zc ** 2, axis=1)))
    topo = jnp.mean(jnp.abs(ecc(xc / xn) - ecc(zc / zn)))
    return xr, z, recon + lam * topo, recon, lam * topo


if __name__ == "__main__":
    # Small shapes consistent with forward(x: [B, D]); 2 clouds exercise the grid.
    C, N, in_dim, hidden_dim, latent_dim = 2, 8, 32, 16, 2
    steps, max_edge_length, beta, lam = 32, 2.0, 0.01, 0.1

    key = jax.random.PRNGKey(0)
    k_x, k_p = jax.random.split(key)
    xs = jax.random.normal(k_x, (C, N, in_dim), jnp.float32)
    params = init_params(k_p, in_dim, hidden_dim, latent_dim)

    # Host-side packing: 20 tiny tensors -> 2 lane-dense arrays + static offsets.
    wpack, vpack, meta = pack_params(params, in_dim, hidden_dim, latent_dim)

    outs = topo_autoencoder_forward(
        xs, wpack, vpack, meta, in_dim=in_dim, latent_dim=latent_dim,
        steps=steps, max_edge_length=max_edge_length, beta=beta, lam=lam)
    x_recon, z, losses = jax.block_until_ready(outs)

    assert x_recon.shape == (C, N, in_dim)
    assert z.shape == (C, N, latent_dim)
    assert losses.shape == (C, 3)
    assert bool(jnp.isfinite(losses).all())

    # Verify each cloud against the pure-JAX reference.
    for c in range(C):
        r_xr, r_z, r_loss, r_rec, r_topo = reference_forward(
            xs[c], params, steps, max_edge_length, beta, lam)
        assert jnp.allclose(x_recon[c], r_xr, rtol=5e-3, atol=5e-3)
        assert jnp.allclose(z[c], r_z, rtol=5e-3, atol=5e-3)
        assert jnp.allclose(losses[c, 0], r_loss, rtol=1e-2, atol=1e-2)
        assert jnp.allclose(losses[c, 1], r_rec, rtol=1e-2, atol=1e-2)
        assert jnp.allclose(losses[c, 2], r_topo, rtol=1e-2, atol=1e-2)

    print("KERNEL_OK")
</pallas_src>

<mosaic_0001>
module attributes {stable_mosaic.version = 11 : i64} {
  func.func @topo_ae_kernel(%arg0: i32, %arg1: memref<1x8x128xf32, #tpu.memory_space<vmem>>, %arg2: memref<768x128xf32, #tpu.memory_space<vmem>>, %arg3: memref<16x128xf32, #tpu.memory_space<vmem>>, %arg4: memref<1x8x128xf32, #tpu.memory_space<vmem>>, %arg5: memref<1x8x128xf32, #tpu.memory_space<vmem>>, %arg6: memref<1x8x128xf32, #tpu.memory_space<vmem>>) attributes {dimension_semantics = [#tpu.dimension_semantics<parallel>], iteration_bounds = array<i64: 2>, scalar_prefetch = 0 : i64, scratch_operands = 0 : i64, tpu.core_type = #tpu.core_type<tc>, window_params = [{transform_indices = @transform_0, window_bounds = array<i64: 1, 8, 128>}, {pipeline_mode = #tpu.pipeline_mode<synchronous>, transform_indices = @transform_1, window_bounds = array<i64: 768, 128>}, {pipeline_mode = #tpu.pipeline_mode<synchronous>, transform_indices = @transform_2, window_bounds = array<i64: 16, 128>}, {transform_indices = @transform_3, window_bounds = array<i64: 1, 8, 128>}, {transform_indices = @transform_4, window_bounds = array<i64: 1, 8, 128>}, {transform_indices = @transform_5, window_bounds = array<i64: 1, 8, 128>}]} {
    %c0 = arith.constant 0 : index
    %c0_0 = arith.constant 0 : index
    %c0_1 = arith.constant 0 : index
    %0 = vector.load %arg1[%c0, %c0_0, %c0_1] : memref<1x8x128xf32, #tpu.memory_space<vmem>>, vector<1x8x128xf32>
    %1 = vector.shape_cast %0 : vector<1x8x128xf32> to vector<8x128xf32>
    %c0_2 = arith.constant 0 : index
    %c0_3 = arith.constant 0 : index
    %2 = vector.load %arg2[%c0_2, %c0_3] : memref<768x128xf32, #tpu.memory_space<vmem>>, vector<128x128xf32>
    %c0_4 = arith.constant 0 : index
    %c0_5 = arith.constant 0 : index
    %3 = vector.load %arg3[%c0_4, %c0_5] : memref<16x128xf32, #tpu.memory_space<vmem>>, vector<1x128xf32>
    %cst = arith.constant dense<0.000000e+00> : vector<8x128xf32>
    %4 = tpu.matmul %1, %2, %cst {dimension_numbers = #tpu.dot_dimension_numbers<[1], [0], [0], [1], [0, 0, 1, 1], [], []>} : vector<8x128xf32>, vector<128x128xf32>, vector<8x128xf32> -> vector<8x128xf32>
    %5 = vector.broadcast %3 : vector<1x128xf32> to vector<8x128xf32>
    %6 = arith.addf %4, %5 : vector<8x128xf32>
    %c1 = arith.constant 1 : index
    %c0_6 = arith.constant 0 : index
    %7 = vector.load %arg3[%c1, %c0_6] : memref<16x128xf32, #tpu.memory_space<vmem>>, vector<1x128xf32>
    %c2 = arith.constant 2 : index
    %c0_7 = arith.constant 0 : index
    %8 = vector.load %arg3[%c2, %c0_7] : memref<16x128xf32, #tpu.memory_space<vmem>>, vector<1x128xf32>
    %cst_8 = arith.constant dense<0.000000e+00> : vector<128xf32>
    %9 = vector.multi_reduction <add>, %6, %cst_8 [0] : vector<8x128xf32> to vector<128xf32>
    %10 = vector.shape_cast %9 : vector<128xf32> to vector<1x128xf32>
    %cst_9 = arith.constant 8.000000e+00 : f32
    %11 = vector.broadcast %cst_9 : f32 to vector<1x128xf32>
    %12 = arith.divf %10, %11 : vector<1x128xf32>
    %13 = arith.mulf %6, %6 : vector<8x128xf32>
    %cst_10 = arith.constant dense<0.000000e+00> : vector<128xf32>
    %14 = vector.multi_reduction <add>, %13, %cst_10 [0] : vector<8x128xf32> to vector<128xf32>
    %15 = vector.shape_cast %14 : vector<128xf32> to vector<1x128xf32>
    %cst_11 = arith.constant 8.000000e+00 : f32
    %16 = vector.broadcast %cst_11 : f32 to vector<1x128xf32>
    %17 = arith.divf %15, %16 : vector<1x128xf32>
    %18 = arith.mulf %12, %12 : vector<1x128xf32>
    %19 = arith.subf %17, %18 : vector<1x128xf32>
    %cst_12 = arith.constant 0.000000e+00 : f32
    %20 = vector.broadcast %cst_12 : f32 to vector<1x128xf32>
    %21 = arith.maximumf %19, %20 : vector<1x128xf32>
    %22 = vector.broadcast %12 : vector<1x128xf32> to vector<8x128xf32>
    %23 = arith.subf %6, %22 : vector<8x128xf32>
    %cst_13 = arith.constant 9.99999974E-6 : f32
    %24 = vector.broadcast %cst_13 : f32 to vector<1x128xf32>
    %25 = arith.addf %21, %24 : vector<1x128xf32>
    %26 = math.rsqrt %25 : vector<1x128xf32>
    %27 = vector.broadcast %26 : vector<1x128xf32> to vector<8x128xf32>
    %28 = arith.mulf %23, %27 : vector<8x128xf32>
    %29 = vector.broadcast %7 : vector<1x128xf32> to vector<8x128xf32>
    %30 = arith.mulf %28, %29 : vector<8x128xf32>
    %31 = vector.broadcast %8 : vector<1x128xf32> to vector<8x128xf32>
    %32 = arith.addf %30, %31 : vector<8x128xf32>
    %cst_14 = arith.constant 0.000000e+00 : f32
    %33 = vector.broadcast %cst_14 : f32 to vector<8x128xf32>
    %34 = arith.maximumf %32, %33 : vector<8x128xf32>
    %c128 = arith.constant 128 : index
    %c0_15 = arith.constant 0 : index
    %35 = vector.load %arg2[%c128, %c0_15] : memref<768x128xf32, #tpu.memory_space<vmem>>, vector<128x128xf32>
    %c3 = arith.constant 3 : index
    %c0_16 = arith.constant 0 : index
    %36 = vector.load %arg3[%c3, %c0_16] : memref<16x128xf32, #tpu.memory_space<vmem>>, vector<1x128xf32>
    %cst_17 = arith.constant dense<0.000000e+00> : vector<8x128xf32>
    %37 = tpu.matmul %34, %35, %cst_17 {dimension_numbers = #tpu.dot_dimension_numbers<[1], [0], [0], [1], [0, 0, 1, 1], [], []>} : vector<8x128xf32>, vector<128x128xf32>, vector<8x128xf32> -> vector<8x128xf32>
    %38 = vector.broadcast %36 : vector<1x128xf32> to vector<8x128xf32>
    %39 = arith.addf %37, %38 : vector<8x128xf32>
    %c4 = arith.constant 4 : index
    %c0_18 = arith.constant 0 : index
    %40 = vector.load %arg3[%c4, %c0_18] : memref<16x128xf32, #tpu.memory_space<vmem>>, vector<1x128xf32>
    %c5 = arith.constant 5 : index
    %c0_19 = arith.constant 0 : index
    %41 = vector.load %arg3[%c5, %c0_19] : memref<16x128xf32, #tpu.memory_space<vmem>>, vector<1x128xf32>
    %cst_20 = arith.constant dense<0.000000e+00> : vector<128xf32>
    %42 = vector.multi_reduction <add>, %39, %cst_20 [0] : vector<8x128xf32> to vector<128xf32>
    %43 = vector.shape_cast %42 : vector<128xf32> to vector<1x128xf32>
    %cst_21 = arith.constant 8.000000e+00 : f32
    %44 = vector.broadcast %cst_21 : f32 to vector<1x128xf32>
    %45 = arith.divf %43, %44 : vector<1x128xf32>
    %46 = arith.mulf %39, %39 : vector<8x128xf32>
    %cst_22 = arith.constant dense<0.000000e+00> : vector<128xf32>
    %47 = vector.multi_reduction <add>, %46, %cst_22 [0] : vector<8x128xf32> to vector<128xf32>
    %48 = vector.shape_cast %47 : vector<128xf32> to vector<1x128xf32>
    %cst_23 = arith.constant 8.000000e+00 : f32
    %49 = vector.broadcast %cst_23 : f32 to vector<1x128xf32>
    %50 = arith.divf %48, %49 : vector<1x128xf32>
    %51 = arith.mulf %45, %45 : vector<1x128xf32>
    %52 = arith.subf %50, %51 : vector<1x128xf32>
    %cst_24 = arith.constant 0.000000e+00 : f32
    %53 = vector.broadcast %cst_24 : f32 to vector<1x128xf32>
    %54 = arith.maximumf %52, %53 : vector<1x128xf32>
    %55 = vector.broadcast %45 : vector<1x128xf32> to vector<8x128xf32>
    %56 = arith.subf %39, %55 : vector<8x128xf32>
    %cst_25 = arith.constant 9.99999974E-6 : f32
    %57 = vector.broadcast %cst_25 : f32 to vector<1x128xf32>
    %58 = arith.addf %54, %57 : vector<1x128xf32>
    %59 = math.rsqrt %58 : vector<1x128xf32>
    %60 = vector.broadcast %59 : vector<1x128xf32> to vector<8x128xf32>
    %61 = arith.mulf %56, %60 : vector<8x128xf32>
    %62 = vector.broadcast %40 : vector<1x128xf32> to vector<8x128xf32>
    %63 = arith.mulf %61, %62 : vector<8x128xf32>
    %64 = vector.broadcast %41 : vector<1x128xf32> to vector<8x128xf32>
    %65 = arith.addf %63, %64 : vector<8x128xf32>
    %cst_26 = arith.constant 0.000000e+00 : f32
    %66 = vector.broadcast %cst_26 : f32 to vector<8x128xf32>
    %67 = arith.maximumf %65, %66 : vector<8x128xf32>
    %c256 = arith.constant 256 : index
    %c0_27 = arith.constant 0 : index
    %68 = vector.load %arg2[%c256, %c0_27] : memref<768x128xf32, #tpu.memory_space<vmem>>, vector<128x128xf32>
    %c6 = arith.constant 6 : index
    %c0_28 = arith.constant 0 : index
    %69 = vector.load %arg3[%c6, %c0_28] : memref<16x128xf32, #tpu.memory_space<vmem>>, vector<1x128xf32>
    %cst_29 = arith.constant dense<0.000000e+00> : vector<8x128xf32>
    %70 = tpu.matmul %67, %68, %cst_29 {dimension_numbers = #tpu.dot_dimension_numbers<[1], [0], [0], [1], [0, 0, 1, 1], [], []>} : vector<8x128xf32>, vector<128x128xf32>, vector<8x128xf32> -> vector<8x128xf32>
    %71 = vector.broadcast %69 : vector<1x128xf32> to vector<8x128xf32>
    %72 = arith.addf %70, %71 : vector<8x128xf32>
    %c384 = arith.constant 384 : index
    %c0_30 = arith.constant 0 : index
    %73 = vector.load %arg2[%c384, %c0_30] : memref<768x128xf32, #tpu.memory_space<vmem>>, vector<128x128xf32>
    %c7 = arith.constant 7 : index
    %c0_31 = arith.constant 0 : index
    %74 = vector.load %arg3[%c7, %c0_31] : memref<16x128xf32, #tpu.memory_space<vmem>>, vector<1x128xf32>
    %cst_32 = arith.constant dense<0.000000e+00> : vector<8x128xf32>
    %75 = tpu.matmul %72, %73, %cst_32 {dimension_numbers = #tpu.dot_dimension_numbers<[1], [0], [0], [1], [0, 0, 1, 1], [], []>} : vector<8x128xf32>, vector<128x128xf32>, vector<8x128xf32> -> vector<8x128xf32>
    %76 = vector.broadcast %74 : vector<1x128xf32> to vector<8x128xf32>
    %77 = arith.addf %75, %76 : vector<8x128xf32>
    %c8 = arith.constant 8 : index
    %c0_33 = arith.constant 0 : index
    %78 = vector.load %arg3[%c8, %c0_33] : memref<16x128xf32, #tpu.memory_space<vmem>>, vector<1x128xf32>
    %c9 = arith.constant 9 : index
    %c0_34 = arith.constant 0 : index
    %79 = vector.load %arg3[%c9, %c0_34] : memref<16x128xf32, #tpu.memory_space<vmem>>, vector<1x128xf32>
    %cst_35 = arith.constant dense<0.000000e+00> : vector<128xf32>
    %80 = vector.multi_reduction <add>, %77, %cst_35 [0] : vector<8x128xf32> to vector<128xf32>
    %81 = vector.shape_cast %80 : vector<128xf32> to vector<1x128xf32>
    %cst_36 = arith.constant 8.000000e+00 : f32
    %82 = vector.broadcast %cst_36 : f32 to vector<1x128xf32>
    %83 = arith.divf %81, %82 : vector<1x128xf32>
    %84 = arith.mulf %77, %77 : vector<8x128xf32>
    %cst_37 = arith.constant dense<0.000000e+00> : vector<128xf32>
    %85 = vector.multi_reduction <add>, %84, %cst_37 [0] : vector<8x128xf32> to vector<128xf32>
    %86 = vector.shape_cast %85 : vector<128xf32> to vector<1x128xf32>
    %cst_38 = arith.constant 8.000000e+00 : f32
    %87 = vector.broadcast %cst_38 : f32 to vector<1x128xf32>
    %88 = arith.divf %86, %87 : vector<1x128xf32>
    %89 = arith.mulf %83, %83 : vector<1x128xf32>
    %90 = arith.subf %88, %89 : vector<1x128xf32>
    %cst_39 = arith.constant 0.000000e+00 : f32
    %91 = vector.broadcast %cst_39 : f32 to vector<1x128xf32>
    %92 = arith.maximumf %90, %91 : vector<1x128xf32>
    %93 = vector.broadcast %83 : vector<1x128xf32> to vector<8x128xf32>
    %94 = arith.subf %77, %93 : vector<8x128xf32>
    %cst_40 = arith.constant 9.99999974E-6 : f32
    %95 = vector.broadcast %cst_40 : f32 to vector<1x128xf32>
    %96 = arith.addf %92, %95 : vector<1x128xf32>
    %97 = math.rsqrt %96 : vector<1x128xf32>
    %98 = vector.broadcast %97 : vector<1x128xf32> to vector<8x128xf32>
    %99 = arith.mulf %94, %98 : vector<8x128xf32>
    %100 = vector.broadcast %78 : vector<1x128xf32> to vector<8x128xf32>
    %101 = arith.mulf %99, %100 : vector<8x128xf32>
    %102 = vector.broadcast %79 : vector<1x128xf32> to vector<8x128xf32>
    %103 = arith.addf %101, %102 : vector<8x128xf32>
    %cst_41 = arith.constant 0.000000e+00 : f32
    %104 = vector.broadcast %cst_41 : f32 to vector<8x128xf32>
    %105 = arith.maximumf %103, %104 : vector<8x128xf32>
    %c512 = arith.constant 512 : index
    %c0_42 = arith.constant 0 : index
    %106 = vector.load %arg2[%c512, %c0_42] : memref<768x128xf32, #tpu.memory_space<vmem>>, vector<128x128xf32>
    %c10 = arith.constant 10 : index
    %c0_43 = arith.constant 0 : index
    %107 = vector.load %arg3[%c10, %c0_43] : memref<16x128xf32, #tpu.memory_space<vmem>>, vector<1x128xf32>
    %cst_44 = arith.constant dense<0.000000e+00> : vector<8x128xf32>
    %108 = tpu.matmul %105, %106, %cst_44 {dimension_numbers = #tpu.dot_dimension_numbers<[1], [0], [0], [1], [0, 0, 1, 1], [], []>} : vector<8x128xf32>, vector<128x128xf32>, vector<8x128xf32> -> vector<8x128xf32>
    %109 = vector.broadcast %107 : vector<1x128xf32> to vector<8x128xf32>
    %110 = arith.addf %108, %109 : vector<8x128xf32>
    %c11 = arith.constant 11 : index
    %c0_45 = arith.constant 0 : index
    %111 = vector.load %arg3[%c11, %c0_45] : memref<16x128xf32, #tpu.memory_space<vmem>>, vector<1x128xf32>
    %c12 = arith.constant 12 : index
    %c0_46 = arith.constant 0 : index
    %112 = vector.load %arg3[%c12, %c0_46] : memref<16x128xf32, #tpu.memory_space<vmem>>, vector<1x128xf32>
    %cst_47 = arith.constant dense<0.000000e+00> : vector<128xf32>
    %113 = vector.multi_reduction <add>, %110, %cst_47 [0] : vector<8x128xf32> to vector<128xf32>
    %114 = vector.shape_cast %113 : vector<128xf32> to vector<1x128xf32>
    %cst_48 = arith.constant 8.000000e+00 : f32
    %115 = vector.broadcast %cst_48 : f32 to vector<1x128xf32>
    %116 = arith.divf %114, %115 : vector<1x128xf32>
    %117 = arith.mulf %110, %110 : vector<8x128xf32>
    %cst_49 = arith.constant dense<0.000000e+00> : vector<128xf32>
    %118 = vector.multi_reduction <add>, %117, %cst_49 [0] : vector<8x128xf32> to vector<128xf32>
    %119 = vector.shape_cast %118 : vector<128xf32> to vector<1x128xf32>
    %cst_50 = arith.constant 8.000000e+00 : f32
    %120 = vector.broadcast %cst_50 : f32 to vector<1x128xf32>
    %121 = arith.divf %119, %120 : vector<1x128xf32>
    %122 = arith.mulf %116, %116 : vector<1x128xf32>
    %123 = arith.subf %121, %122 : vector<1x128xf32>
    %cst_51 = arith.constant 0.000000e+00 : f32
    %124 = vector.broadcast %cst_51 : f32 to vector<1x128xf32>
    %125 = arith.maximumf %123, %124 : vector<1x128xf32>
    %126 = vector.broadcast %116 : vector<1x128xf32> to vector<8x128xf32>
    %127 = arith.subf %110, %126 : vector<8x128xf32>
    %cst_52 = arith.constant 9.99999974E-6 : f32
    %128 = vector.broadcast %cst_52 : f32 to vector<1x128xf32>
    %129 = arith.addf %125, %128 : vector<1x128xf32>
    %130 = math.rsqrt %129 : vector<1x128xf32>
    %131 = vector.broadcast %130 : vector<1x128xf32> to vector<8x128xf32>
    %132 = arith.mulf %127, %131 : vector<8x128xf32>
    %133 = vector.broadcast %111 : vector<1x128xf32> to vector<8x128xf32>
    %134 = arith.mulf %132, %133 : vector<8x128xf32>
    %135 = vector.broadcast %112 : vector<1x128xf32> to vector<8x128xf32>
    %136 = arith.addf %134, %135 : vector<8x128xf32>
    %cst_53 = arith.constant 0.000000e+00 : f32
    %137 = vector.broadcast %cst_53 : f32 to vector<8x128xf32>
    %138 = arith.maximumf %136, %137 : vector<8x128xf32>
    %c640 = arith.constant 640 : index
    %c0_54 = arith.constant 0 : index
    %139 = vector.load %arg2[%c640, %c0_54] : memref<768x128xf32, #tpu.memory_space<vmem>>, vector<128x128xf32>
    %c13 = arith.constant 13 : index
    %c0_55 = arith.constant 0 : index
    %140 = vector.load %arg3[%c13, %c0_55] : memref<16x128xf32, #tpu.memory_space<vmem>>, vector<1x128xf32>
    %cst_56 = arith.constant dense<0.000000e+00> : vector<8x128xf32>
    %141 = tpu.matmul %138, %139, %cst_56 {dimension_numbers = #tpu.dot_dimension_numbers<[1], [0], [0], [1], [0, 0, 1, 1], [], []>} : vector<8x128xf32>, vector<128x128xf32>, vector<8x128xf32> -> vector<8x128xf32>
    %142 = vector.broadcast %140 : vector<1x128xf32> to vector<8x128xf32>
    %143 = arith.addf %141, %142 : vector<8x128xf32>
    %c0_57 = arith.constant 0 : index
    %c0_58 = arith.constant 0 : index
    %c0_59 = arith.constant 0 : index
    %144 = vector.load %arg4[%c0_57, %c0_58, %c0_59] : memref<1x8x128xf32, #tpu.memory_space<vmem>>, vector<1x8x128xf32>
    %145 = vector.shape_cast %144 : vector<1x8x128xf32> to vector<8x128xf32>
    %146 = vector.shape_cast %143 : vector<8x128xf32> to vector<1x8x128xf32>
    tpu.vector_store %arg4[%c0_57, %c0_58, %c0_59], %146 {strides = array<i32>} : memref<1x8x128xf32, #tpu.memory_space<vmem>>, vector<1x8x128xf32>,
    %c0_60 = arith.constant 0 : index
    %c0_61 = arith.constant 0 : index
    %c0_62 = arith.constant 0 : index
    %147 = vector.load %arg5[%c0_60, %c0_61, %c0_62] : memref<1x8x128xf32, #tpu.memory_space<vmem>>, vector<1x8x128xf32>
    %148 = vector.shape_cast %147 : vector<1x8x128xf32> to vector<8x128xf32>
    %149 = vector.shape_cast %72 : vector<8x128xf32> to vector<1x8x128xf32>
    tpu.vector_store %arg5[%c0_60, %c0_61, %c0_62], %149 {strides = array<i32>} : memref<1x8x128xf32, #tpu.memory_space<vmem>>, vector<1x8x128xf32>,
    %150 = arith.subf %1, %143 : vector<8x128xf32>
    %151 = arith.mulf %150, %150 : vector<8x128xf32>
    %152 = vector.shape_cast %151 : vector<8x128xf32> to vector<1x8x128xf32>
    %cst_63 = arith.constant dense<0.000000e+00> : vector<1xf32>
    %153 = vector.multi_reduction <add>, %152, %cst_63 [1, 2] : vector<1x8x128xf32> to vector<1xf32>
    %154 = vector.shape_cast %153 : vector<1xf32> to vector<1x1x1xf32>
    %155 = vector.extract %154[0, 0, 0] : f32 from vector<1x1x1xf32>
    %cst_64 = arith.constant 3.906250e-03 : f32
    %156 = arith.mulf %155, %cst_64 : f32
    %157 = tpu.iota {dimensions = array<i32: 0>} : vector<8x8xi32>
    %158 = tpu.iota {dimensions = array<i32: 1>} : vector<8x8xi32>
    %159 = arith.cmpi eq, %157, %158 : vector<8x8xi32>
    %cst_65 = arith.constant dense<0.000000e+00> : vector<128xf32>
    %160 = vector.multi_reduction <add>, %1, %cst_65 [0] : vector<8x128xf32> to vector<128xf32>
    %161 = vector.shape_cast %160 : vector<128xf32> to vector<1x128xf32>
    %cst_66 = arith.constant 8.000000e+00 : f32
    %162 = vector.broadcast %cst_66 : f32 to vector<1x128xf32>
    %163 = arith.divf %161, %162 : vector<1x128xf32>
    %164 = vector.broadcast %163 : vector<1x128xf32> to vector<8x128xf32>
    %165 = arith.subf %1, %164 : vector<8x128xf32>
    %166 = tpu.transpose %165, [1, 0] : vector<8x128xf32> -> vector<128x8xf32>
    %cst_67 = arith.constant dense<0.000000e+00> : vector<8x8xf32>
    %167 = tpu.matmul %165, %166, %cst_67 {dimension_numbers = #tpu.dot_dimension_numbers<[1], [0], [0], [1], [0, 0, 1, 1], [], []>} : vector<8x128xf32>, vector<128x8xf32>, vector<8x8xf32> -> vector<8x8xf32>
    %168 = arith.mulf %165, %165 : vector<8x128xf32>
    %cst_68 = arith.constant dense<0.000000e+00> : vector<8xf32>
    %169 = vector.multi_reduction <add>, %168, %cst_68 [1] : vector<8x128xf32> to vector<8xf32>
    %170 = vector.shape_cast %169 : vector<8xf32> to vector<8x1xf32>
    %cst_69 = arith.constant 0.000000e+00 : f32
    %171 = vector.broadcast %cst_69 : f32 to vector<8x8xf32>
    %172 = arith.select %159, %167, %171 : vector<8x8xi1>, vector<8x8xf32>
    %cst_70 = arith.constant dense<0.000000e+00> : vector<8xf32>
    %173 = vector.multi_reduction <add>, %172, %cst_70 [0] : vector<8x8xf32> to vector<8xf32>
    %174 = vector.shape_cast %173 : vector<8xf32> to vector<1x8xf32>
    %175 = vector.broadcast %170 : vector<8x1xf32> to vector<8x8xf32>
    %176 = vector.broadcast %174 : vector<1x8xf32> to vector<8x8xf32>
    %177 = arith.addf %175, %176 : vector<8x8xf32>
    %cst_71 = arith.constant 2.000000e+00 : f32
    %178 = vector.broadcast %cst_71 : f32 to vector<8x8xf32>
    %179 = arith.mulf %178, %167 : vector<8x8xf32>
    %180 = arith.subf %177, %179 : vector<8x8xf32>
    %cst_72 = arith.constant 0.000000e+00 : f32
    %181 = vector.broadcast %cst_72 : f32 to vector<8x8xf32>
    %182 = arith.maximumf %180, %181 : vector<8x8xf32>
    %183 = vector.shape_cast %170 : vector<8x1xf32> to vector<1x8x1xf32>
    %cst_73 = arith.constant dense<0xFF800000> : vector<1xf32>
    %184 = vector.multi_reduction <maximumf>, %183, %cst_73 [1, 2] : vector<1x8x1xf32> to vector<1xf32>
    %185 = vector.shape_cast %184 : vector<1xf32> to vector<1x1x1xf32>
    %186 = vector.extract %185[0, 0, 0] : f32 from vector<1x1x1xf32>
    %187 = math.sqrt %186 : f32
    %cst_74 = arith.constant 9.99999968E-21 : f32
    %188 = arith.maximumf %187, %cst_74 : f32
    %cst_75 = arith.constant 1.000000e+00 : f32
    %189 = arith.divf %cst_75, %188 : f32
    %190 = math.sqrt %182 : vector<8x8xf32>
    %191 = vector.broadcast %189 : f32 to vector<8x8xf32>
    %192 = arith.mulf %190, %191 : vector<8x8xf32>
    %cst_76 = arith.constant 0.000000e+00 : f32
    %193 = vector.broadcast %cst_76 : f32 to vector<8x8xf32>
    %194 = arith.select %159, %193, %192 : vector<8x8xi1>, vector<8x8xf32>
    %cst_77 = arith.constant dense<0.000000e+00> : vector<128xf32>
    %195 = vector.multi_reduction <add>, %72, %cst_77 [0] : vector<8x128xf32> to vector<128xf32>
    %196 = vector.shape_cast %195 : vector<128xf32> to vector<1x128xf32>
    %cst_78 = arith.constant 8.000000e+00 : f32
    %197 = vector.broadcast %cst_78 : f32 to vector<1x128xf32>
    %198 = arith.divf %196, %197 : vector<1x128xf32>
    %199 = vector.broadcast %198 : vector<1x128xf32> to vector<8x128xf32>
    %200 = arith.subf %72, %199 : vector<8x128xf32>
    %201 = tpu.transpose %200, [1, 0] : vector<8x128xf32> -> vector<128x8xf32>
    %cst_79 = arith.constant dense<0.000000e+00> : vector<8x8xf32>
    %202 = tpu.matmul %200, %201, %cst_79 {dimension_numbers = #tpu.dot_dimension_numbers<[1], [0], [0], [1], [0, 0, 1, 1], [], []>} : vector<8x128xf32>, vector<128x8xf32>, vector<8x8xf32> -> vector<8x8xf32>
    %203 = arith.mulf %200, %200 : vector<8x128xf32>
    %cst_80 = arith.constant dense<0.000000e+00> : vector<8xf32>
    %204 = vector.multi_reduction <add>, %203, %cst_80 [1] : vector<8x128xf32> to vector<8xf32>
    %205 = vector.shape_cast %204 : vector<8xf32> to vector<8x1xf32>
    %cst_81 = arith.constant 0.000000e+00 : f32
    %206 = vector.broadcast %cst_81 : f32 to vector<8x8xf32>
    %207 = arith.select %159, %202, %206 : vector<8x8xi1>, vector<8x8xf32>
    %cst_82 = arith.constant dense<0.000000e+00> : vector<8xf32>
    %208 = vector.multi_reduction <add>, %207, %cst_82 [0] : vector<8x8xf32> to vector<8xf32>
    %209 = vector.shape_cast %208 : vector<8xf32> to vector<1x8xf32>
    %210 = vector.broadcast %205 : vector<8x1xf32> to vector<8x8xf32>
    %211 = vector.broadcast %209 : vector<1x8xf32> to vector<8x8xf32>
    %212 = arith.addf %210, %211 : vector<8x8xf32>
    %cst_83 = arith.constant 2.000000e+00 : f32
    %213 = vector.broadcast %cst_83 : f32 to vector<8x8xf32>
    %214 = arith.mulf %213, %202 : vector<8x8xf32>
    %215 = arith.subf %212, %214 : vector<8x8xf32>
    %cst_84 = arith.constant 0.000000e+00 : f32
    %216 = vector.broadcast %cst_84 : f32 to vector<8x8xf32>
    %217 = arith.maximumf %215, %216 : vector<8x8xf32>
    %218 = vector.shape_cast %205 : vector<8x1xf32> to vector<1x8x1xf32>
    %cst_85 = arith.constant dense<0xFF800000> : vector<1xf32>
    %219 = vector.multi_reduction <maximumf>, %218, %cst_85 [1, 2] : vector<1x8x1xf32> to vector<1xf32>
    %220 = vector.shape_cast %219 : vector<1xf32> to vector<1x1x1xf32>
    %221 = vector.extract %220[0, 0, 0] : f32 from vector<1x1x1xf32>
    %222 = math.sqrt %221 : f32
    %cst_86 = arith.constant 9.99999968E-21 : f32
    %223 = arith.maximumf %222, %cst_86 : f32
    %cst_87 = arith.constant 1.000000e+00 : f32
    %224 = arith.divf %cst_87, %223 : f32
    %225 = math.sqrt %217 : vector<8x8xf32>
    %226 = vector.broadcast %224 : f32 to vector<8x8xf32>
    %227 = arith.mulf %225, %226 : vector<8x8xf32>
    %cst_88 = arith.constant 0.000000e+00 : f32
    %228 = vector.broadcast %cst_88 : f32 to vector<8x8xf32>
    %229 = arith.select %159, %228, %227 : vector<8x8xi1>, vector<8x8xf32>
    %cst_89 = arith.constant 0.000000e+00 : f32
    %230 = vector.broadcast %cst_89 : f32 to vector<8x8xf32>
    %231 = arith.subf %230, %194 : vector<8x8xf32>
    %cst_90 = arith.constant 5.000000e+01 : f32
    %232 = vector.broadcast %cst_90 : f32 to vector<8x8xf32>
    %233 = arith.mulf %231, %232 : vector<8x8xf32>
    %234 = math.tanh %233 : vector<8x8xf32>
    %cst_91 = arith.constant 0.000000e+00 : f32
    %235 = vector.broadcast %cst_91 : f32 to vector<8x8xf32>
    %236 = arith.subf %235, %229 : vector<8x8xf32>
    %cst_92 = arith.constant 5.000000e+01 : f32
    %237 = vector.broadcast %cst_92 : f32 to vector<8x8xf32>
    %238 = arith.mulf %236, %237 : vector<8x8xf32>
    %239 = math.tanh %238 : vector<8x8xf32>
    %240 = arith.subf %234, %239 : vector<8x8xf32>
    %241 = vector.shape_cast %240 : vector<8x8xf32> to vector<1x8x8xf32>
    %cst_93 = arith.constant dense<0.000000e+00> : vector<1xf32>
    %242 = vector.multi_reduction <add>, %241, %cst_93 [1, 2] : vector<1x8x8xf32> to vector<1xf32>
    %243 = vector.shape_cast %242 : vector<1xf32> to vector<1x1x1xf32>
    %244 = vector.extract %243[0, 0, 0] : f32 from vector<1x1x1xf32>
    %245 = math.absf %244 : f32
    %cst_94 = arith.constant 0.000000e+00 : f32
    %246 = arith.addf %cst_94, %245 : f32
    %cst_95 = arith.constant 0.0645161271 : f32
    %247 = vector.broadcast %cst_95 : f32 to vector<8x8xf32>
    %248 = arith.subf %247, %194 : vector<8x8xf32>
    %cst_96 = arith.constant 5.000000e+01 : f32
    %249 = vector.broadcast %cst_96 : f32 to vector<8x8xf32>
    %250 = arith.mulf %248, %249 : vector<8x8xf32>
    %251 = math.tanh %250 : vector<8x8xf32>
    %cst_97 = arith.constant 0.0645161271 : f32
    %252 = vector.broadcast %cst_97 : f32 to vector<8x8xf32>
    %253 = arith.subf %252, %229 : vector<8x8xf32>
    %cst_98 = arith.constant 5.000000e+01 : f32
    %254 = vector.broadcast %cst_98 : f32 to vector<8x8xf32>
    %255 = arith.mulf %253, %254 : vector<8x8xf32>
    %256 = math.tanh %255 : vector<8x8xf32>
    %257 = arith.subf %251, %256 : vector<8x8xf32>
    %258 = vector.shape_cast %257 : vector<8x8xf32> to vector<1x8x8xf32>
    %cst_99 = arith.constant dense<0.000000e+00> : vector<1xf32>
    %259 = vector.multi_reduction <add>, %258, %cst_99 [1, 2] : vector<1x8x8xf32> to vector<1xf32>
    %260 = vector.shape_cast %259 : vector<1xf32> to vector<1x1x1xf32>
    %261 = vector.extract %260[0, 0, 0] : f32 from vector<1x1x1xf32>
    %262 = math.absf %261 : f32
    %263 = arith.addf %246, %262 : f32
    %cst_100 = arith.constant 0.129032254 : f32
    %264 = vector.broadcast %cst_100 : f32 to vector<8x8xf32>
    %265 = arith.subf %264, %194 : vector<8x8xf32>
    %cst_101 = arith.constant 5.000000e+01 : f32
    %266 = vector.broadcast %cst_101 : f32 to vector<8x8xf32>
    %267 = arith.mulf %265, %266 : vector<8x8xf32>
    %268 = math.tanh %267 : vector<8x8xf32>
    %cst_102 = arith.constant 0.129032254 : f32
    %269 = vector.broadcast %cst_102 : f32 to vector<8x8xf32>
    %270 = arith.subf %269, %229 : vector<8x8xf32>
    %cst_103 = arith.constant 5.000000e+01 : f32
    %271 = vector.broadcast %cst_103 : f32 to vector<8x8xf32>
    %272 = arith.mulf %270, %271 : vector<8x8xf32>
    %273 = math.tanh %272 : vector<8x8xf32>
    %274 = arith.subf %268, %273 : vector<8x8xf32>
    %275 = vector.shape_cast %274 : vector<8x8xf32> to vector<1x8x8xf32>
    %cst_104 = arith.constant dense<0.000000e+00> : vector<1xf32>
    %276 = vector.multi_reduction <add>, %275, %cst_104 [1, 2] : vector<1x8x8xf32> to vector<1xf32>
    %277 = vector.shape_cast %276 : vector<1xf32> to vector<1x1x1xf32>
    %278 = vector.extract %277[0, 0, 0] : f32 from vector<1x1x1xf32>
    %279 = math.absf %278 : f32
    %280 = arith.addf %263, %279 : f32
    %cst_105 = arith.constant 0.193548381 : f32
    %281 = vector.broadcast %cst_105 : f32 to vector<8x8xf32>
    %282 = arith.subf %281, %194 : vector<8x8xf32>
    %cst_106 = arith.constant 5.000000e+01 : f32
    %283 = vector.broadcast %cst_106 : f32 to vector<8x8xf32>
    %284 = arith.mulf %282, %283 : vector<8x8xf32>
    %285 = math.tanh %284 : vector<8x8xf32>
    %cst_107 = arith.constant 0.193548381 : f32
    %286 = vector.broadcast %cst_107 : f32 to vector<8x8xf32>
    %287 = arith.subf %286, %229 : vector<8x8xf32>
    %cst_108 = arith.constant 5.000000e+01 : f32
    %288 = vector.broadcast %cst_108 : f32 to vector<8x8xf32>
    %289 = arith.mulf %287, %288 : vector<8x8xf32>
    %290 = math.tanh %289 : vector<8x8xf32>
    %291 = arith.subf %285, %290 : vector<8x8xf32>
    %292 = vector.shape_cast %291 : vector<8x8xf32> to vector<1x8x8xf32>
    %cst_109 = arith.constant dense<0.000000e+00> : vector<1xf32>
    %293 = vector.multi_reduction <add>, %292, %cst_109 [1, 2] : vector<1x8x8xf32> to vector<1xf32>
    %294 = vector.shape_cast %293 : vector<1xf32> to vector<1x1x1xf32>
    %295 = vector.extract %294[0, 0, 0] : f32 from vector<1x1x1xf32>
    %296 = math.absf %295 : f32
    %297 = arith.addf %280, %296 : f32
    %cst_110 = arith.constant 0.258064508 : f32
    %298 = vector.broadcast %cst_110 : f32 to vector<8x8xf32>
    %299 = arith.subf %298, %194 : vector<8x8xf32>
    %cst_111 = arith.constant 5.000000e+01 : f32
    %300 = vector.broadcast %cst_111 : f32 to vector<8x8xf32>
    %301 = arith.mulf %299, %300 : vector<8x8xf32>
    %302 = math.tanh %301 : vector<8x8xf32>
    %cst_112 = arith.constant 0.258064508 : f32
    %303 = vector.broadcast %cst_112 : f32 to vector<8x8xf32>
    %304 = arith.subf %303, %229 : vector<8x8xf32>
    %cst_113 = arith.constant 5.000000e+01 : f32
    %305 = vector.broadcast %cst_113 : f32 to vector<8x8xf32>
    %306 = arith.mulf %304, %305 : vector<8x8xf32>
    %307 = math.tanh %306 : vector<8x8xf32>
    %308 = arith.subf %302, %307 : vector<8x8xf32>
    %309 = vector.shape_cast %308 : vector<8x8xf32> to vector<1x8x8xf32>
    %cst_114 = arith.constant dense<0.000000e+00> : vector<1xf32>
    %310 = vector.multi_reduction <add>, %309, %cst_114 [1, 2] : vector<1x8x8xf32> to vector<1xf32>
    %311 = vector.shape_cast %310 : vector<1xf32> to vector<1x1x1xf32>
    %312 = vector.extract %311[0, 0, 0] : f32 from vector<1x1x1xf32>
    %313 = math.absf %312 : f32
    %314 = arith.addf %297, %313 : f32
    %cst_115 = arith.constant 0.322580636 : f32
    %315 = vector.broadcast %cst_115 : f32 to vector<8x8xf32>
    %316 = arith.subf %315, %194 : vector<8x8xf32>
    %cst_116 = arith.constant 5.000000e+01 : f32
    %317 = vector.broadcast %cst_116 : f32 to vector<8x8xf32>
    %318 = arith.mulf %316, %317 : vector<8x8xf32>
    %319 = math.tanh %318 : vector<8x8xf32>
    %cst_117 = arith.constant 0.322580636 : f32
    %320 = vector.broadcast %cst_117 : f32 to vector<8x8xf32>
    %321 = arith.subf %320, %229 : vector<8x8xf32>
    %cst_118 = arith.constant 5.000000e+01 : f32
    %322 = vector.broadcast %cst_118 : f32 to vector<8x8xf32>
    %323 = arith.mulf %321, %322 : vector<8x8xf32>
    %324 = math.tanh %323 : vector<8x8xf32>
    %325 = arith.subf %319, %324 : vector<8x8xf32>
    %326 = vector.shape_cast %325 : vector<8x8xf32> to vector<1x8x8xf32>
    %cst_119 = arith.constant dense<0.000000e+00> : vector<1xf32>
    %327 = vector.multi_reduction <add>, %326, %cst_119 [1, 2] : vector<1x8x8xf32> to vector<1xf32>
    %328 = vector.shape_cast %327 : vector<1xf32> to vector<1x1x1xf32>
    %329 = vector.extract %328[0, 0, 0] : f32 from vector<1x1x1xf32>
    %330 = math.absf %329 : f32
    %331 = arith.addf %314, %330 : f32
    %cst_120 = arith.constant 0.387096763 : f32
    %332 = vector.broadcast %cst_120 : f32 to vector<8x8xf32>
    %333 = arith.subf %332, %194 : vector<8x8xf32>
    %cst_121 = arith.constant 5.000000e+01 : f32
    %334 = vector.broadcast %cst_121 : f32 to vector<8x8xf32>
    %335 = arith.mulf %333, %334 : vector<8x8xf32>
    %336 = math.tanh %335 : vector<8x8xf32>
    %cst_122 = arith.constant 0.387096763 : f32
    %337 = vector.broadcast %cst_122 : f32 to vector<8x8xf32>
    %338 = arith.subf %337, %229 : vector<8x8xf32>
    %cst_123 = arith.constant 5.000000e+01 : f32
    %339 = vector.broadcast %cst_123 : f32 to vector<8x8xf32>
    %340 = arith.mulf %338, %339 : vector<8x8xf32>
    %341 = math.tanh %340 : vector<8x8xf32>
    %342 = arith.subf %336, %341 : vector<8x8xf32>
    %343 = vector.shape_cast %342 : vector<8x8xf32> to vector<1x8x8xf32>
    %cst_124 = arith.constant dense<0.000000e+00> : vector<1xf32>
    %344 = vector.multi_reduction <add>, %343, %cst_124 [1, 2] : vector<1x8x8xf32> to vector<1xf32>
    %345 = vector.shape_cast %344 : vector<1xf32> to vector<1x1x1xf32>
    %346 = vector.extract %345[0, 0, 0] : f32 from vector<1x1x1xf32>
    %347 = math.absf %346 : f32
    %348 = arith.addf %331, %347 : f32
    %cst_125 = arith.constant 0.45161289 : f32
    %349 = vector.broadcast %cst_125 : f32 to vector<8x8xf32>
    %350 = arith.subf %349, %194 : vector<8x8xf32>
    %cst_126 = arith.constant 5.000000e+01 : f32
    %351 = vector.broadcast %cst_126 : f32 to vector<8x8xf32>
    %352 = arith.mulf %350, %351 : vector<8x8xf32>
    %353 = math.tanh %352 : vector<8x8xf32>
    %cst_127 = arith.constant 0.45161289 : f32
    %354 = vector.broadcast %cst_127 : f32 to vector<8x8xf32>
    %355 = arith.subf %354, %229 : vector<8x8xf32>
    %cst_128 = arith.constant 5.000000e+01 : f32
    %356 = vector.broadcast %cst_128 : f32 to vector<8x8xf32>
    %357 = arith.mulf %355, %356 : vector<8x8xf32>
    %358 = math.tanh %357 : vector<8x8xf32>
    %359 = arith.subf %353, %358 : vector<8x8xf32>
    %360 = vector.shape_cast %359 : vector<8x8xf32> to vector<1x8x8xf32>
    %cst_129 = arith.constant dense<0.000000e+00> : vector<1xf32>
    %361 = vector.multi_reduction <add>, %360, %cst_129 [1, 2] : vector<1x8x8xf32> to vector<1xf32>
    %362 = vector.shape_cast %361 : vector<1xf32> to vector<1x1x1xf32>
    %363 = vector.extract %362[0, 0, 0] : f32 from vector<1x1x1xf32>
    %364 = math.absf %363 : f32
    %365 = arith.addf %348, %364 : f32
    %cst_130 = arith.constant 5.161290e-01 : f32
    %366 = vector.broadcast %cst_130 : f32 to vector<8x8xf32>
    %367 = arith.subf %366, %194 : vector<8x8xf32>
    %cst_131 = arith.constant 5.000000e+01 : f32
    %368 = vector.broadcast %cst_131 : f32 to vector<8x8xf32>
    %369 = arith.mulf %367, %368 : vector<8x8xf32>
    %370 = math.tanh %369 : vector<8x8xf32>
    %cst_132 = arith.constant 5.161290e-01 : f32
    %371 = vector.broadcast %cst_132 : f32 to vector<8x8xf32>
    %372 = arith.subf %371, %229 : vector<8x8xf32>
    %cst_133 = arith.constant 5.000000e+01 : f32
    %373 = vector.broadcast %cst_133 : f32 to vector<8x8xf32>
    %374 = arith.mulf %372, %373 : vector<8x8xf32>
    %375 = math.tanh %374 : vector<8x8xf32>
    %376 = arith.subf %370, %375 : vector<8x8xf32>
    %377 = vector.shape_cast %376 : vector<8x8xf32> to vector<1x8x8xf32>
    %cst_134 = arith.constant dense<0.000000e+00> : vector<1xf32>
    %378 = vector.multi_reduction <add>, %377, %cst_134 [1, 2] : vector<1x8x8xf32> to vector<1xf32>
    %379 = vector.shape_cast %378 : vector<1xf32> to vector<1x1x1xf32>
    %380 = vector.extract %379[0, 0, 0] : f32 from vector<1x1x1xf32>
    %381 = math.absf %380 : f32
    %382 = arith.addf %365, %381 : f32
    %cst_135 = arith.constant 0.580645144 : f32
    %383 = vector.broadcast %cst_135 : f32 to vector<8x8xf32>
    %384 = arith.subf %383, %194 : vector<8x8xf32>
    %cst_136 = arith.constant 5.000000e+01 : f32
    %385 = vector.broadcast %cst_136 : f32 to vector<8x8xf32>
    %386 = arith.mulf %384, %385 : vector<8x8xf32>
    %387 = math.tanh %386 : vector<8x8xf32>
    %cst_137 = arith.constant 0.580645144 : f32
    %388 = vector.broadcast %cst_137 : f32 to vector<8x8xf32>
    %389 = arith.subf %388, %229 : vector<8x8xf32>
    %cst_138 = arith.constant 5.000000e+01 : f32
    %390 = vector.broadcast %cst_138 : f32 to vector<8x8xf32>
    %391 = arith.mulf %389, %390 : vector<8x8xf32>
    %392 = math.tanh %391 : vector<8x8xf32>
    %393 = arith.subf %387, %392 : vector<8x8xf32>
    %394 = vector.shape_cast %393 : vector<8x8xf32> to vector<1x8x8xf32>
    %cst_139 = arith.constant dense<0.000000e+00> : vector<1xf32>
    %395 = vector.multi_reduction <add>, %394, %cst_139 [1, 2] : vector<1x8x8xf32> to vector<1xf32>
    %396 = vector.shape_cast %395 : vector<1xf32> to vector<1x1x1xf32>
    %397 = vector.extract %396[0, 0, 0] : f32 from vector<1x1x1xf32>
    %398 = math.absf %397 : f32
    %399 = arith.addf %382, %398 : f32
    %cst_140 = arith.constant 0.645161271 : f32
    %400 = vector.broadcast %cst_140 : f32 to vector<8x8xf32>
    %401 = arith.subf %400, %194 : vector<8x8xf32>
    %cst_141 = arith.constant 5.000000e+01 : f32
    %402 = vector.broadcast %cst_141 : f32 to vector<8x8xf32>
    %403 = arith.mulf %401, %402 : vector<8x8xf32>
    %404 = math.tanh %403 : vector<8x8xf32>
    %cst_142 = arith.constant 0.645161271 : f32
    %405 = vector.broadcast %cst_142 : f32 to vector<8x8xf32>
    %406 = arith.subf %405, %229 : vector<8x8xf32>
    %cst_143 = arith.constant 5.000000e+01 : f32
    %407 = vector.broadcast %cst_143 : f32 to vector<8x8xf32>
    %408 = arith.mulf %406, %407 : vector<8x8xf32>
    %409 = math.tanh %408 : vector<8x8xf32>
    %410 = arith.subf %404, %409 : vector<8x8xf32>
    %411 = vector.shape_cast %410 : vector<8x8xf32> to vector<1x8x8xf32>
    %cst_144 = arith.constant dense<0.000000e+00> : vector<1xf32>
    %412 = vector.multi_reduction <add>, %411, %cst_144 [1, 2] : vector<1x8x8xf32> to vector<1xf32>
    %413 = vector.shape_cast %412 : vector<1xf32> to vector<1x1x1xf32>
    %414 = vector.extract %413[0, 0, 0] : f32 from vector<1x1x1xf32>
    %415 = math.absf %414 : f32
    %416 = arith.addf %399, %415 : f32
    %cst_145 = arith.constant 0.709677398 : f32
    %417 = vector.broadcast %cst_145 : f32 to vector<8x8xf32>
    %418 = arith.subf %417, %194 : vector<8x8xf32>
    %cst_146 = arith.constant 5.000000e+01 : f32
    %419 = vector.broadcast %cst_146 : f32 to vector<8x8xf32>
    %420 = arith.mulf %418, %419 : vector<8x8xf32>
    %421 = math.tanh %420 : vector<8x8xf32>
    %cst_147 = arith.constant 0.709677398 : f32
    %422 = vector.broadcast %cst_147 : f32 to vector<8x8xf32>
    %423 = arith.subf %422, %229 : vector<8x8xf32>
    %cst_148 = arith.constant 5.000000e+01 : f32
    %424 = vector.broadcast %cst_148 : f32 to vector<8x8xf32>
    %425 = arith.mulf %423, %424 : vector<8x8xf32>
    %426 = math.tanh %425 : vector<8x8xf32>
    %427 = arith.subf %421, %426 : vector<8x8xf32>
    %428 = vector.shape_cast %427 : vector<8x8xf32> to vector<1x8x8xf32>
    %cst_149 = arith.constant dense<0.000000e+00> : vector<1xf32>
    %429 = vector.multi_reduction <add>, %428, %cst_149 [1, 2] : vector<1x8x8xf32> to vector<1xf32>
    %430 = vector.shape_cast %429 : vector<1xf32> to vector<1x1x1xf32>
    %431 = vector.extract %430[0, 0, 0] : f32 from vector<1x1x1xf32>
    %432 = math.absf %431 : f32
    %433 = arith.addf %416, %432 : f32
    %cst_150 = arith.constant 0.774193525 : f32
    %434 = vector.broadcast %cst_150 : f32 to vector<8x8xf32>
    %435 = arith.subf %434, %194 : vector<8x8xf32>
    %cst_151 = arith.constant 5.000000e+01 : f32
    %436 = vector.broadcast %cst_151 : f32 to vector<8x8xf32>
    %437 = arith.mulf %435, %436 : vector<8x8xf32>
    %438 = math.tanh %437 : vector<8x8xf32>
    %cst_152 = arith.constant 0.774193525 : f32
    %439 = vector.broadcast %cst_152 : f32 to vector<8x8xf32>
    %440 = arith.subf %439, %229 : vector<8x8xf32>
    %cst_153 = arith.constant 5.000000e+01 : f32
    %441 = vector.broadcast %cst_153 : f32 to vector<8x8xf32>
    %442 = arith.mulf %440, %441 : vector<8x8xf32>
    %443 = math.tanh %442 : vector<8x8xf32>
    %444 = arith.subf %438, %443 : vector<8x8xf32>
    %445 = vector.shape_cast %444 : vector<8x8xf32> to vector<1x8x8xf32>
    %cst_154 = arith.constant dense<0.000000e+00> : vector<1xf32>
    %446 = vector.multi_reduction <add>, %445, %cst_154 [1, 2] : vector<1x8x8xf32> to vector<1xf32>
    %447 = vector.shape_cast %446 : vector<1xf32> to vector<1x1x1xf32>
    %448 = vector.extract %447[0, 0, 0] : f32 from vector<1x1x1xf32>
    %449 = math.absf %448 : f32
    %450 = arith.addf %433, %449 : f32
    %cst_155 = arith.constant 0.838709652 : f32
    %451 = vector.broadcast %cst_155 : f32 to vector<8x8xf32>
    %452 = arith.subf %451, %194 : vector<8x8xf32>
    %cst_156 = arith.constant 5.000000e+01 : f32
    %453 = vector.broadcast %cst_156 : f32 to vector<8x8xf32>
    %454 = arith.mulf %452, %453 : vector<8x8xf32>
    %455 = math.tanh %454 : vector<8x8xf32>
    %cst_157 = arith.constant 0.838709652 : f32
    %456 = vector.broadcast %cst_157 : f32 to vector<8x8xf32>
    %457 = arith.subf %456, %229 : vector<8x8xf32>
    %cst_158 = arith.constant 5.000000e+01 : f32
    %458 = vector.broadcast %cst_158 : f32 to vector<8x8xf32>
    %459 = arith.mulf %457, %458 : vector<8x8xf32>
    %460 = math.tanh %459 : vector<8x8xf32>
    %461 = arith.subf %455, %460 : vector<8x8xf32>
    %462 = vector.shape_cast %461 : vector<8x8xf32> to vector<1x8x8xf32>
    %cst_159 = arith.constant dense<0.000000e+00> : vector<1xf32>
    %463 = vector.multi_reduction <add>, %462, %cst_159 [1, 2] : vector<1x8x8xf32> to vector<1xf32>
    %464 = vector.shape_cast %463 : vector<1xf32> to vector<1x1x1xf32>
    %465 = vector.extract %464[0, 0, 0] : f32 from vector<1x1x1xf32>
    %466 = math.absf %465 : f32
    %467 = arith.addf %450, %466 : f32
    %cst_160 = arith.constant 0.903225779 : f32
    %468 = vector.broadcast %cst_160 : f32 to vector<8x8xf32>
    %469 = arith.subf %468, %194 : vector<8x8xf32>
    %cst_161 = arith.constant 5.000000e+01 : f32
    %470 = vector.broadcast %cst_161 : f32 to vector<8x8xf32>
    %471 = arith.mulf %469, %470 : vector<8x8xf32>
    %472 = math.tanh %471 : vector<8x8xf32>
    %cst_162 = arith.constant 0.903225779 : f32
    %473 = vector.broadcast %cst_162 : f32 to vector<8x8xf32>
    %474 = arith.subf %473, %229 : vector<8x8xf32>
    %cst_163 = arith.constant 5.000000e+01 : f32
    %475 = vector.broadcast %cst_163 : f32 to vector<8x8xf32>
    %476 = arith.mulf %474, %475 : vector<8x8xf32>
    %477 = math.tanh %476 : vector<8x8xf32>
    %478 = arith.subf %472, %477 : vector<8x8xf32>
    %479 = vector.shape_cast %478 : vector<8x8xf32> to vector<1x8x8xf32>
    %cst_164 = arith.constant dense<0.000000e+00> : vector<1xf32>
    %480 = vector.multi_reduction <add>, %479, %cst_164 [1, 2] : vector<1x8x8xf32> to vector<1xf32>
    %481 = vector.shape_cast %480 : vector<1xf32> to vector<1x1x1xf32>
    %482 = vector.extract %481[0, 0, 0] : f32 from vector<1x1x1xf32>
    %483 = math.absf %482 : f32
    %484 = arith.addf %467, %483 : f32
    %cst_165 = arith.constant 0.967741906 : f32
    %485 = vector.broadcast %cst_165 : f32 to vector<8x8xf32>
    %486 = arith.subf %485, %194 : vector<8x8xf32>
    %cst_166 = arith.constant 5.000000e+01 : f32
    %487 = vector.broadcast %cst_166 : f32 to vector<8x8xf32>
    %488 = arith.mulf %486, %487 : vector<8x8xf32>
    %489 = math.tanh %488 : vector<8x8xf32>
    %cst_167 = arith.constant 0.967741906 : f32
    %490 = vector.broadcast %cst_167 : f32 to vector<8x8xf32>
    %491 = arith.subf %490, %229 : vector<8x8xf32>
    %cst_168 = arith.constant 5.000000e+01 : f32
    %492 = vector.broadcast %cst_168 : f32 to vector<8x8xf32>
    %493 = arith.mulf %491, %492 : vector<8x8xf32>
    %494 = math.tanh %493 : vector<8x8xf32>
    %495 = arith.subf %489, %494 : vector<8x8xf32>
    %496 = vector.shape_cast %495 : vector<8x8xf32> to vector<1x8x8xf32>
    %cst_169 = arith.constant dense<0.000000e+00> : vector<1xf32>
    %497 = vector.multi_reduction <add>, %496, %cst_169 [1, 2] : vector<1x8x8xf32> to vector<1xf32>
    %498 = vector.shape_cast %497 : vector<1xf32> to vector<1x1x1xf32>
    %499 = vector.extract %498[0, 0, 0] : f32 from vector<1x1x1xf32>
    %500 = math.absf %499 : f32
    %501 = arith.addf %484, %500 : f32
    %cst_170 = arith.constant 1.03225803 : f32
    %502 = vector.broadcast %cst_170 : f32 to vector<8x8xf32>
    %503 = arith.subf %502, %194 : vector<8x8xf32>
    %cst_171 = arith.constant 5.000000e+01 : f32
    %504 = vector.broadcast %cst_171 : f32 to vector<8x8xf32>
    %505 = arith.mulf %503, %504 : vector<8x8xf32>
    %506 = math.tanh %505 : vector<8x8xf32>
    %cst_172 = arith.constant 1.03225803 : f32
    %507 = vector.broadcast %cst_172 : f32 to vector<8x8xf32>
    %508 = arith.subf %507, %229 : vector<8x8xf32>
    %cst_173 = arith.constant 5.000000e+01 : f32
    %509 = vector.broadcast %cst_173 : f32 to vector<8x8xf32>
    %510 = arith.mulf %508, %509 : vector<8x8xf32>
    %511 = math.tanh %510 : vector<8x8xf32>
    %512 = arith.subf %506, %511 : vector<8x8xf32>
    %513 = vector.shape_cast %512 : vector<8x8xf32> to vector<1x8x8xf32>
    %cst_174 = arith.constant dense<0.000000e+00> : vector<1xf32>
    %514 = vector.multi_reduction <add>, %513, %cst_174 [1, 2] : vector<1x8x8xf32> to vector<1xf32>
    %515 = vector.shape_cast %514 : vector<1xf32> to vector<1x1x1xf32>
    %516 = vector.extract %515[0, 0, 0] : f32 from vector<1x1x1xf32>
    %517 = math.absf %516 : f32
    %518 = arith.addf %501, %517 : f32
    %cst_175 = arith.constant 1.09677422 : f32
    %519 = vector.broadcast %cst_175 : f32 to vector<8x8xf32>
    %520 = arith.subf %519, %194 : vector<8x8xf32>
    %cst_176 = arith.constant 5.000000e+01 : f32
    %521 = vector.broadcast %cst_176 : f32 to vector<8x8xf32>
    %522 = arith.mulf %520, %521 : vector<8x8xf32>
    %523 = math.tanh %522 : vector<8x8xf32>
    %cst_177 = arith.constant 1.09677422 : f32
    %524 = vector.broadcast %cst_177 : f32 to vector<8x8xf32>
    %525 = arith.subf %524, %229 : vector<8x8xf32>
    %cst_178 = arith.constant 5.000000e+01 : f32
    %526 = vector.broadcast %cst_178 : f32 to vector<8x8xf32>
    %527 = arith.mulf %525, %526 : vector<8x8xf32>
    %528 = math.tanh %527 : vector<8x8xf32>
    %529 = arith.subf %523, %528 : vector<8x8xf32>
    %530 = vector.shape_cast %529 : vector<8x8xf32> to vector<1x8x8xf32>
    %cst_179 = arith.constant dense<0.000000e+00> : vector<1xf32>
    %531 = vector.multi_reduction <add>, %530, %cst_179 [1, 2] : vector<1x8x8xf32> to vector<1xf32>
    %532 = vector.shape_cast %531 : vector<1xf32> to vector<1x1x1xf32>
    %533 = vector.extract %532[0, 0, 0] : f32 from vector<1x1x1xf32>
    %534 = math.absf %533 : f32
    %535 = arith.addf %518, %534 : f32
    %cst_180 = arith.constant 1.16129029 : f32
    %536 = vector.broadcast %cst_180 : f32 to vector<8x8xf32>
    %537 = arith.subf %536, %194 : vector<8x8xf32>
    %cst_181 = arith.constant 5.000000e+01 : f32
    %538 = vector.broadcast %cst_181 : f32 to vector<8x8xf32>
    %539 = arith.mulf %537, %538 : vector<8x8xf32>
    %540 = math.tanh %539 : vector<8x8xf32>
    %cst_182 = arith.constant 1.16129029 : f32
    %541 = vector.broadcast %cst_182 : f32 to vector<8x8xf32>
    %542 = arith.subf %541, %229 : vector<8x8xf32>
    %cst_183 = arith.constant 5.000000e+01 : f32
    %543 = vector.broadcast %cst_183 : f32 to vector<8x8xf32>
    %544 = arith.mulf %542, %543 : vector<8x8xf32>
    %545 = math.tanh %544 : vector<8x8xf32>
    %546 = arith.subf %540, %545 : vector<8x8xf32>
    %547 = vector.shape_cast %546 : vector<8x8xf32> to vector<1x8x8xf32>
    %cst_184 = arith.constant dense<0.000000e+00> : vector<1xf32>
    %548 = vector.multi_reduction <add>, %547, %cst_184 [1, 2] : vector<1x8x8xf32> to vector<1xf32>
    %549 = vector.shape_cast %548 : vector<1xf32> to vector<1x1x1xf32>
    %550 = vector.extract %549[0, 0, 0] : f32 from vector<1x1x1xf32>
    %551 = math.absf %550 : f32
    %552 = arith.addf %535, %551 : f32
    %cst_185 = arith.constant 1.22580647 : f32
    %553 = vector.broadcast %cst_185 : f32 to vector<8x8xf32>
    %554 = arith.subf %553, %194 : vector<8x8xf32>
    %cst_186 = arith.constant 5.000000e+01 : f32
    %555 = vector.broadcast %cst_186 : f32 to vector<8x8xf32>
    %556 = arith.mulf %554, %555 : vector<8x8xf32>
    %557 = math.tanh %556 : vector<8x8xf32>
    %cst_187 = arith.constant 1.22580647 : f32
    %558 = vector.broadcast %cst_187 : f32 to vector<8x8xf32>
    %559 = arith.subf %558, %229 : vector<8x8xf32>
    %cst_188 = arith.constant 5.000000e+01 : f32
    %560 = vector.broadcast %cst_188 : f32 to vector<8x8xf32>
    %561 = arith.mulf %559, %560 : vector<8x8xf32>
    %562 = math.tanh %561 : vector<8x8xf32>
    %563 = arith.subf %557, %562 : vector<8x8xf32>
    %564 = vector.shape_cast %563 : vector<8x8xf32> to vector<1x8x8xf32>
    %cst_189 = arith.constant dense<0.000000e+00> : vector<1xf32>
    %565 = vector.multi_reduction <add>, %564, %cst_189 [1, 2] : vector<1x8x8xf32> to vector<1xf32>
    %566 = vector.shape_cast %565 : vector<1xf32> to vector<1x1x1xf32>
    %567 = vector.extract %566[0, 0, 0] : f32 from vector<1x1x1xf32>
    %568 = math.absf %567 : f32
    %569 = arith.addf %552, %568 : f32
    %cst_190 = arith.constant 1.29032254 : f32
    %570 = vector.broadcast %cst_190 : f32 to vector<8x8xf32>
    %571 = arith.subf %570, %194 : vector<8x8xf32>
    %cst_191 = arith.constant 5.000000e+01 : f32
    %572 = vector.broadcast %cst_191 : f32 to vector<8x8xf32>
    %573 = arith.mulf %571, %572 : vector<8x8xf32>
    %574 = math.tanh %573 : vector<8x8xf32>
    %cst_192 = arith.constant 1.29032254 : f32
    %575 = vector.broadcast %cst_192 : f32 to vector<8x8xf32>
    %576 = arith.subf %575, %229 : vector<8x8xf32>
    %cst_193 = arith.constant 5.000000e+01 : f32
    %577 = vector.broadcast %cst_193 : f32 to vector<8x8xf32>
    %578 = arith.mulf %576, %577 : vector<8x8xf32>
    %579 = math.tanh %578 : vector<8x8xf32>
    %580 = arith.subf %574, %579 : vector<8x8xf32>
    %581 = vector.shape_cast %580 : vector<8x8xf32> to vector<1x8x8xf32>
    %cst_194 = arith.constant dense<0.000000e+00> : vector<1xf32>
    %582 = vector.multi_reduction <add>, %581, %cst_194 [1, 2] : vector<1x8x8xf32> to vector<1xf32>
    %583 = vector.shape_cast %582 : vector<1xf32> to vector<1x1x1xf32>
    %584 = vector.extract %583[0, 0, 0] : f32 from vector<1x1x1xf32>
    %585 = math.absf %584 : f32
    %586 = arith.addf %569, %585 : f32
    %cst_195 = arith.constant 1.35483873 : f32
    %587 = vector.broadcast %cst_195 : f32 to vector<8x8xf32>
    %588 = arith.subf %587, %194 : vector<8x8xf32>
    %cst_196 = arith.constant 5.000000e+01 : f32
    %589 = vector.broadcast %cst_196 : f32 to vector<8x8xf32>
    %590 = arith.mulf %588, %589 : vector<8x8xf32>
    %591 = math.tanh %590 : vector<8x8xf32>
    %cst_197 = arith.constant 1.35483873 : f32
    %592 = vector.broadcast %cst_197 : f32 to vector<8x8xf32>
    %593 = arith.subf %592, %229 : vector<8x8xf32>
    %cst_198 = arith.constant 5.000000e+01 : f32
    %594 = vector.broadcast %cst_198 : f32 to vector<8x8xf32>
    %595 = arith.mulf %593, %594 : vector<8x8xf32>
    %596 = math.tanh %595 : vector<8x8xf32>
    %597 = arith.subf %591, %596 : vector<8x8xf32>
    %598 = vector.shape_cast %597 : vector<8x8xf32> to vector<1x8x8xf32>
    %cst_199 = arith.constant dense<0.000000e+00> : vector<1xf32>
    %599 = vector.multi_reduction <add>, %598, %cst_199 [1, 2] : vector<1x8x8xf32> to vector<1xf32>
    %600 = vector.shape_cast %599 : vector<1xf32> to vector<1x1x1xf32>
    %601 = vector.extract %600[0, 0, 0] : f32 from vector<1x1x1xf32>
    %602 = math.absf %601 : f32
    %603 = arith.addf %586, %602 : f32
    %cst_200 = arith.constant 1.4193548 : f32
    %604 = vector.broadcast %cst_200 : f32 to vector<8x8xf32>
    %605 = arith.subf %604, %194 : vector<8x8xf32>
    %cst_201 = arith.constant 5.000000e+01 : f32
    %606 = vector.broadcast %cst_201 : f32 to vector<8x8xf32>
    %607 = arith.mulf %605, %606 : vector<8x8xf32>
    %608 = math.tanh %607 : vector<8x8xf32>
    %cst_202 = arith.constant 1.4193548 : f32
    %609 = vector.broadcast %cst_202 : f32 to vector<8x8xf32>
    %610 = arith.subf %609, %229 : vector<8x8xf32>
    %cst_203 = arith.constant 5.000000e+01 : f32
    %611 = vector.broadcast %cst_203 : f32 to vector<8x8xf32>
    %612 = arith.mulf %610, %611 : vector<8x8xf32>
    %613 = math.tanh %612 : vector<8x8xf32>
    %614 = arith.subf %608, %613 : vector<8x8xf32>
    %615 = vector.shape_cast %614 : vector<8x8xf32> to vector<1x8x8xf32>
    %cst_204 = arith.constant dense<0.000000e+00> : vector<1xf32>
    %616 = vector.multi_reduction <add>, %615, %cst_204 [1, 2] : vector<1x8x8xf32> to vector<1xf32>
    %617 = vector.shape_cast %616 : vector<1xf32> to vector<1x1x1xf32>
    %618 = vector.extract %617[0, 0, 0] : f32 from vector<1x1x1xf32>
    %619 = math.absf %618 : f32
    %620 = arith.addf %603, %619 : f32
    %cst_205 = arith.constant 1.48387098 : f32
    %621 = vector.broadcast %cst_205 : f32 to vector<8x8xf32>
    %622 = arith.subf %621, %194 : vector<8x8xf32>
    %cst_206 = arith.constant 5.000000e+01 : f32
    %623 = vector.broadcast %cst_206 : f32 to vector<8x8xf32>
    %624 = arith.mulf %622, %623 : vector<8x8xf32>
    %625 = math.tanh %624 : vector<8x8xf32>
    %cst_207 = arith.constant 1.48387098 : f32
    %626 = vector.broadcast %cst_207 : f32 to vector<8x8xf32>
    %627 = arith.subf %626, %229 : vector<8x8xf32>
    %cst_208 = arith.constant 5.000000e+01 : f32
    %628 = vector.broadcast %cst_208 : f32 to vector<8x8xf32>
    %629 = arith.mulf %627, %628 : vector<8x8xf32>
    %630 = math.tanh %629 : vector<8x8xf32>
    %631 = arith.subf %625, %630 : vector<8x8xf32>
    %632 = vector.shape_cast %631 : vector<8x8xf32> to vector<1x8x8xf32>
    %cst_209 = arith.constant dense<0.000000e+00> : vector<1xf32>
    %633 = vector.multi_reduction <add>, %632, %cst_209 [1, 2] : vector<1x8x8xf32> to vector<1xf32>
    %634 = vector.shape_cast %633 : vector<1xf32> to vector<1x1x1xf32>
    %635 = vector.extract %634[0, 0, 0] : f32 from vector<1x1x1xf32>
    %636 = math.absf %635 : f32
    %637 = arith.addf %620, %636 : f32
    %cst_210 = arith.constant 1.54838705 : f32
    %638 = vector.broadcast %cst_210 : f32 to vector<8x8xf32>
    %639 = arith.subf %638, %194 : vector<8x8xf32>
    %cst_211 = arith.constant 5.000000e+01 : f32
    %640 = vector.broadcast %cst_211 : f32 to vector<8x8xf32>
    %641 = arith.mulf %639, %640 : vector<8x8xf32>
    %642 = math.tanh %641 : vector<8x8xf32>
    %cst_212 = arith.constant 1.54838705 : f32
    %643 = vector.broadcast %cst_212 : f32 to vector<8x8xf32>
    %644 = arith.subf %643, %229 : vector<8x8xf32>
    %cst_213 = arith.constant 5.000000e+01 : f32
    %645 = vector.broadcast %cst_213 : f32 to vector<8x8xf32>
    %646 = arith.mulf %644, %645 : vector<8x8xf32>
    %647 = math.tanh %646 : vector<8x8xf32>
    %648 = arith.subf %642, %647 : vector<8x8xf32>
    %649 = vector.shape_cast %648 : vector<8x8xf32> to vector<1x8x8xf32>
    %cst_214 = arith.constant dense<0.000000e+00> : vector<1xf32>
    %650 = vector.multi_reduction <add>, %649, %cst_214 [1, 2] : vector<1x8x8xf32> to vector<1xf32>
    %651 = vector.shape_cast %650 : vector<1xf32> to vector<1x1x1xf32>
    %652 = vector.extract %651[0, 0, 0] : f32 from vector<1x1x1xf32>
    %653 = math.absf %652 : f32
    %654 = arith.addf %637, %653 : f32
    %cst_215 = arith.constant 1.61290324 : f32
    %655 = vector.broadcast %cst_215 : f32 to vector<8x8xf32>
    %656 = arith.subf %655, %194 : vector<8x8xf32>
    %cst_216 = arith.constant 5.000000e+01 : f32
    %657 = vector.broadcast %cst_216 : f32 to vector<8x8xf32>
    %658 = arith.mulf %656, %657 : vector<8x8xf32>
    %659 = math.tanh %658 : vector<8x8xf32>
    %cst_217 = arith.constant 1.61290324 : f32
    %660 = vector.broadcast %cst_217 : f32 to vector<8x8xf32>
    %661 = arith.subf %660, %229 : vector<8x8xf32>
    %cst_218 = arith.constant 5.000000e+01 : f32
    %662 = vector.broadcast %cst_218 : f32 to vector<8x8xf32>
    %663 = arith.mulf %661, %662 : vector<8x8xf32>
    %664 = math.tanh %663 : vector<8x8xf32>
    %665 = arith.subf %659, %664 : vector<8x8xf32>
    %666 = vector.shape_cast %665 : vector<8x8xf32> to vector<1x8x8xf32>
    %cst_219 = arith.constant dense<0.000000e+00> : vector<1xf32>
    %667 = vector.multi_reduction <add>, %666, %cst_219 [1, 2] : vector<1x8x8xf32> to vector<1xf32>
    %668 = vector.shape_cast %667 : vector<1xf32> to vector<1x1x1xf32>
    %669 = vector.extract %668[0, 0, 0] : f32 from vector<1x1x1xf32>
    %670 = math.absf %669 : f32
    %671 = arith.addf %654, %670 : f32
    %cst_220 = arith.constant 1.6774193 : f32
    %672 = vector.broadcast %cst_220 : f32 to vector<8x8xf32>
    %673 = arith.subf %672, %194 : vector<8x8xf32>
    %cst_221 = arith.constant 5.000000e+01 : f32
    %674 = vector.broadcast %cst_221 : f32 to vector<8x8xf32>
    %675 = arith.mulf %673, %674 : vector<8x8xf32>
    %676 = math.tanh %675 : vector<8x8xf32>
    %cst_222 = arith.constant 1.6774193 : f32
    %677 = vector.broadcast %cst_222 : f32 to vector<8x8xf32>
    %678 = arith.subf %677, %229 : vector<8x8xf32>
    %cst_223 = arith.constant 5.000000e+01 : f32
    %679 = vector.broadcast %cst_223 : f32 to vector<8x8xf32>
    %680 = arith.mulf %678, %679 : vector<8x8xf32>
    %681 = math.tanh %680 : vector<8x8xf32>
    %682 = arith.subf %676, %681 : vector<8x8xf32>
    %683 = vector.shape_cast %682 : vector<8x8xf32> to vector<1x8x8xf32>
    %cst_224 = arith.constant dense<0.000000e+00> : vector<1xf32>
    %684 = vector.multi_reduction <add>, %683, %cst_224 [1, 2] : vector<1x8x8xf32> to vector<1xf32>
    %685 = vector.shape_cast %684 : vector<1xf32> to vector<1x1x1xf32>
    %686 = vector.extract %685[0, 0, 0] : f32 from vector<1x1x1xf32>
    %687 = math.absf %686 : f32
    %688 = arith.addf %671, %687 : f32
    %cst_225 = arith.constant 1.74193549 : f32
    %689 = vector.broadcast %cst_225 : f32 to vector<8x8xf32>
    %690 = arith.subf %689, %194 : vector<8x8xf32>
    %cst_226 = arith.constant 5.000000e+01 : f32
    %691 = vector.broadcast %cst_226 : f32 to vector<8x8xf32>
    %692 = arith.mulf %690, %691 : vector<8x8xf32>
    %693 = math.tanh %692 : vector<8x8xf32>
    %cst_227 = arith.constant 1.74193549 : f32
    %694 = vector.broadcast %cst_227 : f32 to vector<8x8xf32>
    %695 = arith.subf %694, %229 : vector<8x8xf32>
    %cst_228 = arith.constant 5.000000e+01 : f32
    %696 = vector.broadcast %cst_228 : f32 to vector<8x8xf32>
    %697 = arith.mulf %695, %696 : vector<8x8xf32>
    %698 = math.tanh %697 : vector<8x8xf32>
    %699 = arith.subf %693, %698 : vector<8x8xf32>
    %700 = vector.shape_cast %699 : vector<8x8xf32> to vector<1x8x8xf32>
    %cst_229 = arith.constant dense<0.000000e+00> : vector<1xf32>
    %701 = vector.multi_reduction <add>, %700, %cst_229 [1, 2] : vector<1x8x8xf32> to vector<1xf32>
    %702 = vector.shape_cast %701 : vector<1xf32> to vector<1x1x1xf32>
    %703 = vector.extract %702[0, 0, 0] : f32 from vector<1x1x1xf32>
    %704 = math.absf %703 : f32
    %705 = arith.addf %688, %704 : f32
    %cst_230 = arith.constant 1.80645156 : f32
    %706 = vector.broadcast %cst_230 : f32 to vector<8x8xf32>
    %707 = arith.subf %706, %194 : vector<8x8xf32>
    %cst_231 = arith.constant 5.000000e+01 : f32
    %708 = vector.broadcast %cst_231 : f32 to vector<8x8xf32>
    %709 = arith.mulf %707, %708 : vector<8x8xf32>
    %710 = math.tanh %709 : vector<8x8xf32>
    %cst_232 = arith.constant 1.80645156 : f32
    %711 = vector.broadcast %cst_232 : f32 to vector<8x8xf32>
    %712 = arith.subf %711, %229 : vector<8x8xf32>
    %cst_233 = arith.constant 5.000000e+01 : f32
    %713 = vector.broadcast %cst_233 : f32 to vector<8x8xf32>
    %714 = arith.mulf %712, %713 : vector<8x8xf32>
    %715 = math.tanh %714 : vector<8x8xf32>
    %716 = arith.subf %710, %715 : vector<8x8xf32>
    %717 = vector.shape_cast %716 : vector<8x8xf32> to vector<1x8x8xf32>
    %cst_234 = arith.constant dense<0.000000e+00> : vector<1xf32>
    %718 = vector.multi_reduction <add>, %717, %cst_234 [1, 2] : vector<1x8x8xf32> to vector<1xf32>
    %719 = vector.shape_cast %718 : vector<1xf32> to vector<1x1x1xf32>
    %720 = vector.extract %719[0, 0, 0] : f32 from vector<1x1x1xf32>
    %721 = math.absf %720 : f32
    %722 = arith.addf %705, %721 : f32
    %cst_235 = arith.constant 1.87096775 : f32
    %723 = vector.broadcast %cst_235 : f32 to vector<8x8xf32>
    %724 = arith.subf %723, %194 : vector<8x8xf32>
    %cst_236 = arith.constant 5.000000e+01 : f32
    %725 = vector.broadcast %cst_236 : f32 to vector<8x8xf32>
    %726 = arith.mulf %724, %725 : vector<8x8xf32>
    %727 = math.tanh %726 : vector<8x8xf32>
    %cst_237 = arith.constant 1.87096775 : f32
    %728 = vector.broadcast %cst_237 : f32 to vector<8x8xf32>
    %729 = arith.subf %728, %229 : vector<8x8xf32>
    %cst_238 = arith.constant 5.000000e+01 : f32
    %730 = vector.broadcast %cst_238 : f32 to vector<8x8xf32>
    %731 = arith.mulf %729, %730 : vector<8x8xf32>
    %732 = math.tanh %731 : vector<8x8xf32>
    %733 = arith.subf %727, %732 : vector<8x8xf32>
    %734 = vector.shape_cast %733 : vector<8x8xf32> to vector<1x8x8xf32>
    %cst_239 = arith.constant dense<0.000000e+00> : vector<1xf32>
    %735 = vector.multi_reduction <add>, %734, %cst_239 [1, 2] : vector<1x8x8xf32> to vector<1xf32>
    %736 = vector.shape_cast %735 : vector<1xf32> to vector<1x1x1xf32>
    %737 = vector.extract %736[0, 0, 0] : f32 from vector<1x1x1xf32>
    %738 = math.absf %737 : f32
    %739 = arith.addf %722, %738 : f32
    %cst_240 = arith.constant 1.93548381 : f32
    %740 = vector.broadcast %cst_240 : f32 to vector<8x8xf32>
    %741 = arith.subf %740, %194 : vector<8x8xf32>
    %cst_241 = arith.constant 5.000000e+01 : f32
    %742 = vector.broadcast %cst_241 : f32 to vector<8x8xf32>
    %743 = arith.mulf %741, %742 : vector<8x8xf32>
    %744 = math.tanh %743 : vector<8x8xf32>
    %cst_242 = arith.constant 1.93548381 : f32
    %745 = vector.broadcast %cst_242 : f32 to vector<8x8xf32>
    %746 = arith.subf %745, %229 : vector<8x8xf32>
    %cst_243 = arith.constant 5.000000e+01 : f32
    %747 = vector.broadcast %cst_243 : f32 to vector<8x8xf32>
    %748 = arith.mulf %746, %747 : vector<8x8xf32>
    %749 = math.tanh %748 : vector<8x8xf32>
    %750 = arith.subf %744, %749 : vector<8x8xf32>
    %751 = vector.shape_cast %750 : vector<8x8xf32> to vector<1x8x8xf32>
    %cst_244 = arith.constant dense<0.000000e+00> : vector<1xf32>
    %752 = vector.multi_reduction <add>, %751, %cst_244 [1, 2] : vector<1x8x8xf32> to vector<1xf32>
    %753 = vector.shape_cast %752 : vector<1xf32> to vector<1x1x1xf32>
    %754 = vector.extract %753[0, 0, 0] : f32 from vector<1x1x1xf32>
    %755 = math.absf %754 : f32
    %756 = arith.addf %739, %755 : f32
    %cst_245 = arith.constant 2.000000e+00 : f32
    %757 = vector.broadcast %cst_245 : f32 to vector<8x8xf32>
    %758 = arith.subf %757, %194 : vector<8x8xf32>
    %cst_246 = arith.constant 5.000000e+01 : f32
    %759 = vector.broadcast %cst_246 : f32 to vector<8x8xf32>
    %760 = arith.mulf %758, %759 : vector<8x8xf32>
    %761 = math.tanh %760 : vector<8x8xf32>
    %cst_247 = arith.constant 2.000000e+00 : f32
    %762 = vector.broadcast %cst_247 : f32 to vector<8x8xf32>
    %763 = arith.subf %762, %229 : vector<8x8xf32>
    %cst_248 = arith.constant 5.000000e+01 : f32
    %764 = vector.broadcast %cst_248 : f32 to vector<8x8xf32>
    %765 = arith.mulf %763, %764 : vector<8x8xf32>
    %766 = math.tanh %765 : vector<8x8xf32>
    %767 = arith.subf %761, %766 : vector<8x8xf32>
    %768 = vector.shape_cast %767 : vector<8x8xf32> to vector<1x8x8xf32>
    %cst_249 = arith.constant dense<0.000000e+00> : vector<1xf32>
    %769 = vector.multi_reduction <add>, %768, %cst_249 [1, 2] : vector<1x8x8xf32> to vector<1xf32>
    %770 = vector.shape_cast %769 : vector<1xf32> to vector<1x1x1xf32>
    %771 = vector.extract %770[0, 0, 0] : f32 from vector<1x1x1xf32>
    %772 = math.absf %771 : f32
    %773 = arith.addf %756, %772 : f32
    %cst_250 = arith.constant 7.812500e-03 : f32
    %774 = arith.mulf %773, %cst_250 : f32
    %775 = tpu.iota {dimensions = array<i32: 1>} : vector<8x128xi32>
    %cst_251 = arith.constant 1.000000e-01 : f32
    %776 = arith.mulf %cst_251, %774 : f32
    %777 = arith.addf %156, %776 : f32
    %c0_i32 = arith.constant 0 : i32
    %778 = vector.broadcast %c0_i32 : i32 to vector<8x128xi32>
    %779 = arith.cmpi eq, %775, %778 : vector<8x128xi32>
    %c1_i32 = arith.constant 1 : i32
    %780 = vector.broadcast %c1_i32 : i32 to vector<8x128xi32>
    %781 = arith.cmpi eq, %775, %780 : vector<8x128xi32>
    %cst_252 = arith.constant 1.000000e-01 : f32
    %782 = arith.mulf %cst_252, %774 : f32
    %783 = vector.broadcast %156 : f32 to vector<8x128xf32>
    %784 = vector.broadcast %782 : f32 to vector<8x128xf32>
    %785 = arith.select %781, %783, %784 : vector<8x128xi1>, vector<8x128xf32>
    %786 = vector.broadcast %777 : f32 to vector<8x128xf32>
    %787 = arith.select %779, %786, %785 : vector<8x128xi1>, vector<8x128xf32>
    %c0_253 = arith.constant 0 : index
    %c0_254 = arith.constant 0 : index
    %c0_255 = arith.constant 0 : index
    %788 = vector.load %arg6[%c0_253, %c0_254, %c0_255] : memref<1x8x128xf32, #tpu.memory_space<vmem>>, vector<1x8x128xf32>
    %789 = vector.shape_cast %788 : vector<1x8x128xf32> to vector<8x128xf32>
    %790 = vector.shape_cast %787 : vector<8x128xf32> to vector<1x8x128xf32>
    tpu.vector_store %arg6[%c0_253, %c0_254, %c0_255], %790 {strides = array<i32>} : memref<1x8x128xf32, #tpu.memory_space<vmem>>, vector<1x8x128xf32>,
    return
  }
  func.func @transform_0(%arg0: i32) -> (i32, i32, i32) {
    %c0_i32 = arith.constant 0 : i32
    %c0_i32_0 = arith.constant 0 : i32
    %c0_i32_1 = arith.constant 0 : i32
    return %arg0, %c0_i32, %c0_i32_0 : i32, i32, i32
  }
  func.func @transform_1(%arg0: i32) -> (i32, i32) {
    %c0_i32 = arith.constant 0 : i32
    %c0_i32_0 = arith.constant 0 : i32
    %c0_i32_1 = arith.constant 0 : i32
    return %c0_i32, %c0_i32_0 : i32, i32
  }
  func.func @transform_2(%arg0: i32) -> (i32, i32) {
    %c0_i32 = arith.constant 0 : i32
    %c0_i32_0 = arith.constant 0 : i32
    %c0_i32_1 = arith.constant 0 : i32
    return %c0_i32, %c0_i32_0 : i32, i32
  }
  func.func @transform_3(%arg0: i32) -> (i32, i32, i32) {
    %c0_i32 = arith.constant 0 : i32
    %c0_i32_0 = arith.constant 0 : i32
    %c0_i32_1 = arith.constant 0 : i32
    return %arg0, %c0_i32, %c0_i32_0 : i32, i32, i32
  }
  func.func @transform_4(%arg0: i32) -> (i32, i32, i32) {
    %c0_i32 = arith.constant 0 : i32
    %c0_i32_0 = arith.constant 0 : i32
    %c0_i32_1 = arith.constant 0 : i32
    return %arg0, %c0_i32, %c0_i32_0 : i32, i32, i32
  }
  func.func @transform_5(%arg0: i32) -> (i32, i32, i32) {
    %c0_i32 = arith.constant 0 : i32
    %c0_i32_0 = arith.constant 0 : i32
    %c0_i32_1 = arith.constant 0 : i32
    return %arg0, %c0_i32, %c0_i32_0 : i32, i32, i32
  }
}

</mosaic_0001>

<llo_original>
// kernel: tpu_custom_call.1
$region0: #{tpu_custom_call.1}
  #allocation0 [shape = 'u32[]', space=smem, size = 0x4, offset = 0x4, fixed_abs, tag = 'smem constant byte address 0x4 - core index']
  #allocation1 [shape = 'u32[144,128]{1,0:T(1,128)}', space=vmem, size = 0x12000, scoped, tag = 'internal scratch']
  %s0 = inlined_call_operand.hbm [shape: f32[2,8,128], index: 0, kind: input, shape index: {}]
  %s1 = inlined_call_operand.hbm [shape: f32[768,128], index: 1, kind: input, shape index: {}]
  %s2 = inlined_call_operand.hbm [shape: f32[16,128], index: 2, kind: input, shape index: {}]
  %s3 = inlined_call_operand.hbm [shape: f32[2,8,128], index: 3, kind: output, shape index: {0}]
  %s4 = inlined_call_operand.hbm [shape: f32[2,8,128], index: 4, kind: output, shape index: {1}]
  %s5 = inlined_call_operand.hbm [shape: f32[2,8,128], index: 5, kind: output, shape index: {2}]
  %6 = xla_tuple %s3, %s4, %s5
  %s7 = sld [smem:[#allocation0]]
  $region73: #{tpu_custom_call.1} parent=0
    _
  %s9 = ssub.s32 1, %s7
  %s10 = scalar_select 0, %s9, %s7
  $region1: #{tpu_custom_call.1} parent=0
    #allocation2 [shape = 'u8[8192]{0}', space=vmem, size = 0x2000, scoped, tag = 'input window, operand 0']
    #allocation3 [shape = 's32[2]{0}', space=sflag, size = 0x8, scoped, tag = 'scoped memory for tpu_custom_call.1']
    #allocation4 [shape = 's32[2]{0}', space=sflag, size = 0x8, scoped, tag = 'scoped memory for tpu_custom_call.1']
    #allocation5 [shape = 'u8[393216]{0}', space=vmem, size = 0x60000, scoped, tag = 'input window, operand 1, single buffered']
    #allocation6 [shape = 's32[1]{0}', space=sflag, size = 0x4, scoped, tag = 'scoped memory for tpu_custom_call.1']
    #allocation7 [shape = 'u8[8192]{0}', space=vmem, size = 0x2000, scoped, tag = 'input window, operand 2, single buffered']
    #allocation8 [shape = 'u8[8192]{0}', space=vmem, size = 0x2000, scoped, tag = 'output window, operand 0']
    #allocation9 [shape = 'u8[8192]{0}', space=vmem, size = 0x2000, scoped, tag = 'output window, operand 1']
    #allocation10 [shape = 's32[2]{0}', space=sflag, size = 0x8, scoped, tag = 'scoped memory for tpu_custom_call.1']
    #allocation11 [shape = 'u8[8192]{0}', space=vmem, size = 0x2000, scoped, tag = 'output window, operand 2']
    %11 = vsyncpa [#allocation3], 0
    %s12 = scalar_lea.sflag [#allocation3], 1
    %13 = vsyncpa %s12, 0
    %14 = vsyncpa [#allocation6], 0
    %15 = vsyncpa [#allocation4], 0
    %s16 = scalar_lea.sflag [#allocation4], 1
    %17 = vsyncpa %s16, 0
    %18 = vsyncpa [#allocation10], 0
    %s19 = scalar_lea.sflag [#allocation10], 1
    %20 = vsyncpa %s19, 0
    loop: start=0, step=1, limit=4
    $region2: #{tpu_custom_call.1} parent=1 // loop_pre_header
      _
    $region3: #{tpu_custom_call.1} parent=1 // loop_header
      %s22 = sphi 0, %s26
      %p23 = scmp.ge.s32.totalorder %s22, 4
      %s32 = sphi 0, %s34
      %s35 = sphi 0, %s32
      %s36 = sphi 0, %s35
      %s52 = sphi 0, %s36
      %s56 = sphi 0, %s56
      %s58 = sphi 0, %s56
      %s59 = sphi 0, %s58
      %s73 = sphi 0, %s59
      %s77 = sphi 0, %s77
      %s79 = sphi 0, %s77
      %s80 = sphi 0, %s79
      %s94 = sphi 0, %s80
      %s100 = sphi 0, %s102
      %s103 = sphi 0, %s100
      %s104 = sphi 0, %s103
      %s120 = sphi 0, %s104
      %s126 = sphi 0, %s128
      %s129 = sphi 0, %s126
      %s130 = sphi 0, %s129
      %s146 = sphi 0, %s130
      %s152 = sphi 0, %s154
      %s155 = sphi 0, %s152
      %s156 = sphi 0, %s155
      %s172 = sphi 0, %s156
    $region4: #{tpu_custom_call.1} parent=1 // loop_header_branch
      %25 = sbr.rel (%p23) target = $region8
    $region5: #{tpu_custom_call.1} parent=1 // loop_body
      %s27 = ssub.s32 %s22, 1
      %s28 = ssub.s32 %s22, 2
      %s29 = sadd.s32 %s22, 1
      %s30 = ssub.s32 %s22, %s29
      %p31 = scmp.eq.s32.totalorder %s30, 0
      %s33 = sadd.s32 %s32, 1
      %s34 = scalar_select %p31, %s32, %s33
      %p37 = pneg %p31
      %p38 = scmp.eq.s32.totalorder %s22, 1
      %p39 = por %p37, %p38
      %p40 = scmp.ne.s32.totalorder %s32, %s35
      %p41 = scmp.eq.s32.totalorder %s22, 0
      %p42 = por %p40, %p41
      %p43 = scmp.ne.s32.totalorder %s32, %s35
      %p44 = scmp.eq.s32.totalorder %s27, 1
      %p45 = por %p43, %p44
      %p46 = scmp.ne.s32.totalorder %s35, %s36
      %p47 = scmp.eq.s32.totalorder %s27, 0
      %p48 = por %p46, %p47
      %p49 = scmp.ne.s32.totalorder %s35, %s36
      %p50 = scmp.eq.s32.totalorder %s28, 1
      %p51 = por %p49, %p50
      %p53 = scmp.ne.s32.totalorder %s36, %s52
      %p54 = scmp.eq.s32.totalorder %s28, 0
      %p55 = por %p53, %p54
      %s57 = sadd.s32 %s56, 1
      %p60 = scmp.eq.s32.totalorder %s22, 1
      %p61 = scmp.ne.s32.totalorder %s56, %s58
      %p62 = scmp.eq.s32.totalorder %s22, 0
      %p63 = por %p61, %p62
      %p64 = scmp.ne.s32.totalorder %s56, %s58
      %p65 = scmp.eq.s32.totalorder %s27, 1
      %p66 = por %p64, %p65
      %p67 = scmp.ne.s32.totalorder %s58, %s59
      %p68 = scmp.eq.s32.totalorder %s27, 0
      %p69 = por %p67, %p68
      %p70 = scmp.ne.s32.totalorder %s58, %s59
      %p71 = scmp.eq.s32.totalorder %s28, 1
      %p72 = por %p70, %p71
      %p74 = scmp.ne.s32.totalorder %s59, %s73
      %p75 = scmp.eq.s32.totalorder %s28, 0
      %p76 = por %p74, %p75
      %s78 = sadd.s32 %s77, 1
      %p81 = scmp.eq.s32.totalorder %s22, 1
      %p82 = scmp.ne.s32.totalorder %s77, %s79
      %p83 = scmp.eq.s32.totalorder %s22, 0
      %p84 = por %p82, %p83
      %p85 = scmp.ne.s32.totalorder %s77, %s79
      %p86 = scmp.eq.s32.totalorder %s27, 1
      %p87 = por %p85, %p86
      %p88 = scmp.ne.s32.totalorder %s79, %s80
      %p89 = scmp.eq.s32.totalorder %s27, 0
      %p90 = por %p88, %p89
      %p91 = scmp.ne.s32.totalorder %s79, %s80
      %p92 = scmp.eq.s32.totalorder %s28, 1
      %p93 = por %p91, %p92
      %p95 = scmp.ne.s32.totalorder %s80, %s94
      %p96 = scmp.eq.s32.totalorder %s28, 0
      %p97 = por %p95, %p96
      %s98 = ssub.s32 %s22, %s29
      %p99 = scmp.eq.s32.totalorder %s98, 0
      %s101 = sadd.s32 %s100, 1
      %s102 = scalar_select %p99, %s100, %s101
      %p105 = pneg %p99
      %p106 = scmp.eq.s32.totalorder %s22, 1
      %p107 = por %p105, %p106
      %p108 = scmp.ne.s32.totalorder %s100, %s103
      %p109 = scmp.eq.s32.totalorder %s22, 0
      %p110 = por %p108, %p109
      %p111 = scmp.ne.s32.totalorder %s100, %s103
      %p112 = scmp.eq.s32.totalorder %s27, 1
      %p113 = por %p111, %p112
      %p114 = scmp.ne.s32.totalorder %s103, %s104
      %p115 = scmp.eq.s32.totalorder %s27, 0
      %p116 = por %p114, %p115
      %p117 = scmp.ne.s32.totalorder %s103, %s104
      %p118 = scmp.eq.s32.totalorder %s28, 1
      %p119 = por %p117, %p118
      %p121 = scmp.ne.s32.totalorder %s104, %s120
      %p122 = scmp.eq.s32.totalorder %s28, 0
      %p123 = por %p121, %p122
      %s124 = ssub.s32 %s22, %s29
      %p125 = scmp.eq.s32.totalorder %s124, 0
      %s127 = sadd.s32 %s126, 1
      %s128 = scalar_select %p125, %s126, %s127
      %p131 = pneg %p125
      %p132 = scmp.eq.s32.totalorder %s22, 1
      %p133 = por %p131, %p132
      %p134 = scmp.ne.s32.totalorder %s126, %s129
      %p135 = scmp.eq.s32.totalorder %s22, 0
      %p136 = por %p134, %p135
      %p137 = scmp.ne.s32.totalorder %s126, %s129
      %p138 = scmp.eq.s32.totalorder %s27, 1
      %p139 = por %p137, %p138
      %p140 = scmp.ne.s32.totalorder %s129, %s130
      %p141 = scmp.eq.s32.totalorder %s27, 0
      %p142 = por %p140, %p141
      %p143 = scmp.ne.s32.totalorder %s129, %s130
      %p144 = scmp.eq.s32.totalorder %s28, 1
      %p145 = por %p143, %p144
      %p147 = scmp.ne.s32.totalorder %s130, %s146
      %p148 = scmp.eq.s32.totalorder %s28, 0
      %p149 = por %p147, %p148
      %s150 = ssub.s32 %s22, %s29
      %p151 = scmp.eq.s32.totalorder %s150, 0
      %s153 = sadd.s32 %s152, 1
      %s154 = scalar_select %p151, %s152, %s153
      %p157 = pneg %p151
      %p158 = scmp.eq.s32.totalorder %s22, 1
      %p159 = por %p157, %p158
      %p160 = scmp.ne.s32.totalorder %s152, %s155
      %p161 = scmp.eq.s32.totalorder %s22, 0
      %p162 = por %p160, %p161
      %p163 = scmp.ne.s32.totalorder %s152, %s155
      %p164 = scmp.eq.s32.totalorder %s27, 1
      %p165 = por %p163, %p164
      %p166 = scmp.ne.s32.totalorder %s155, %s156
      %p167 = scmp.eq.s32.totalorder %s27, 0
      %p168 = por %p166, %p167
      %p169 = scmp.ne.s32.totalorder %s155, %s156
      %p170 = scmp.eq.s32.totalorder %s28, 1
      %p171 = por %p169, %p170
      %p173 = scmp.ne.s32.totalorder %s156, %s172
      %p174 = scmp.eq.s32.totalorder %s28, 0
      %p175 = por %p173, %p174
      %p176 = scmp.le.s32.totalorder 1, %s22
      %p177 = scmp.lt.s32.totalorder %s22, 3
      %p178 = pnand %p176, %p177
      %p179 = pneg %p178
      // Predicated region
      $region9: #{tpu_custom_call.1} parent=5 // pred_check
        _
      $region10: #{tpu_custom_call.1} parent=5 // pred_check_branch
        %181 = sbr.rel (%p178) target = $region12
      $region11: #{tpu_custom_call.1} parent=5 // pred_region
        %s182 = ssub.s32 %s22, 1
        // Predicated region
        $region13: #{tpu_custom_call.1} parent=11 // pred_check
          %p183 = pneg %p69
        $region14: #{tpu_custom_call.1} parent=11 // pred_check_branch
          %185 = sbr.rel (%p183) target = $region16
        $region15: #{tpu_custom_call.1} parent=11 // pred_region
          %s187 = ssub.s32 12288, 12288
          %188 = vsyncadd [#allocation6], %s187
          %s189 = sshll.u32 [#allocation5], 4
          %s190 = int_to_ptr.vmem [resolvable:$true] %s189
          %195 = dma.hbm_to_vmem [thread:$0]  %s1, 12288, %s190, [#allocation6], 128, 128, 8
        $region16: #{tpu_custom_call.1} parent=11 // pred_fallthru
          _
        // Predicated region
        $region17: #{tpu_custom_call.1} parent=11 // pred_check
          %p196 = pneg %p90
        $region18: #{tpu_custom_call.1} parent=11 // pred_check_branch
          %198 = sbr.rel (%p196) target = $region20
        $region19: #{tpu_custom_call.1} parent=11 // pred_region
          %s200 = ssub.s32 256, 256
          %201 = vsyncadd [#allocation6], %s200
          %s202 = sshll.u32 [#allocation7], 4
          %s203 = int_to_ptr.vmem [resolvable:$true] %s202
          %208 = dma.hbm_to_vmem [thread:$0]  %s2, 256, %s203, [#allocation6], 128, 128, 8
        $region20: #{tpu_custom_call.1} parent=11 // pred_fallthru
          _
      $region12: #{tpu_custom_call.1} parent=5 // pred_fallthru
        _
      %p209 = scmp.lt.s32.totalorder %s22, 2
      // Predicated region
      $region21: #{tpu_custom_call.1} parent=5 // pred_check
        %p210 = pneg %p209
      $region22: #{tpu_custom_call.1} parent=5 // pred_check_branch
        %212 = sbr.rel (%p210) target = $region24
      $region23: #{tpu_custom_call.1} parent=5 // pred_region
        // Predicated region
        $region25: #{tpu_custom_call.1} parent=23 // pred_check
          %p213 = pneg %p42
        $region26: #{tpu_custom_call.1} parent=23 // pred_check_branch
          %215 = sbr.rel (%p213) target = $region28
        $region27: #{tpu_custom_call.1} parent=23 // pred_region
          %s216 = sand.u32 %s32, 1
          %s217 = scalar_lea.sflag [#allocation3], %s216
          %s218 = sand.u32 %s32, 1
          %s219 = smul.addr %s218, 8
          %s220 = scalar_lea.vmem [#allocation2], %s219
          %s222 = ssub.s32 128, 128
          %223 = vsyncadd %s217, %s222
          %s224 = smul.addr %s22, 128
          %s225 = scalar_lea.hbm %s0, %s224
          %s227 = sshll.u32 %s220, 4
          %s228 = int_to_ptr.vmem [resolvable:$true] %s227
          %230 = dma.hbm_to_vmem [thread:$0]  %s225, 128, %s228, %s217
        $region28: #{tpu_custom_call.1} parent=23 // pred_fallthru
          _
      $region24: #{tpu_custom_call.1} parent=5 // pred_fallthru
        _
      %p231 = scmp.le.s32.totalorder 1, %s22
      %p232 = scmp.lt.s32.totalorder %s22, 3
      %p233 = pnand %p231, %p232
      %p234 = pneg %p233
      // Predicated region
      $region29: #{tpu_custom_call.1} parent=5 // pred_check
        _
      $region30: #{tpu_custom_call.1} parent=5 // pred_check_branch
        %236 = sbr.rel (%p233) target = $region32
      $region31: #{tpu_custom_call.1} parent=5 // pred_region
        %s237 = ssub.s32 %s22, 1
        %s238 = sand.u32 %s35, 1
        %s239 = scalar_lea.sflag [#allocation3], %s238
        %s240 = sand.u32 %s35, 1
        %s241 = smul.addr %s240, 8
        %s242 = scalar_lea.vmem [#allocation2], %s241
        // Predicated region
        $region33: #{tpu_custom_call.1} parent=31 // pred_check
          %p243 = pneg %p48
        $region34: #{tpu_custom_call.1} parent=31 // pred_check_branch
          %245 = sbr.rel (%p243) target = $region36
        $region35: #{tpu_custom_call.1} parent=31 // pred_region
          %246 = dma.done %s239, 128
        $region36: #{tpu_custom_call.1} parent=31 // pred_fallthru
          _
        // Predicated region
        $region37: #{tpu_custom_call.1} parent=31 // pred_check
          %p247 = pneg %p69
        $region38: #{tpu_custom_call.1} parent=31 // pred_check_branch
          %249 = sbr.rel (%p247) target = $region40
        $region39: #{tpu_custom_call.1} parent=31 // pred_region
          %250 = dma.done [#allocation6], 12288
        $region40: #{tpu_custom_call.1} parent=31 // pred_fallthru
          _
        // Predicated region
        $region41: #{tpu_custom_call.1} parent=31 // pred_check
          %p251 = pneg %p90
        $region42: #{tpu_custom_call.1} parent=31 // pred_check_branch
          %253 = sbr.rel (%p251) target = $region44
        $region43: #{tpu_custom_call.1} parent=31 // pred_region
          %254 = dma.done [#allocation6], 256
        $region44: #{tpu_custom_call.1} parent=31 // pred_fallthru
          _
        %s255 = sand.u32 %s35, 1
        %s256 = scalar_lea.sflag [#allocation3], %s255
        %s257 = sand.u32 %s35, 1
        %s258 = smul.addr %s257, 8
        %s259 = scalar_lea.vmem [#allocation2], %s258
        %p260 = pneg %p48
        %p261 = pneg %p45
        %p262 = pneg %p69
        %p263 = pneg %p66
        %p264 = pneg %p90
        %p265 = pneg %p87
        %p266 = pneg %p116
        %p267 = pneg %p113
        %s268 = sand.u32 %s103, 1
        %s269 = scalar_lea.sflag [#allocation4], %s268
        %s270 = sand.u32 %s103, 1
        %s271 = smul.addr %s270, 8
        %s272 = scalar_lea.vmem [#allocation8], %s271
        %p273 = pneg %p142
        %p274 = pneg %p139
        %s275 = sand.u32 %s27, 1
        %s276 = scalar_lea.sflag [#allocation10], %s275
        %s277 = sand.u32 %s129, 1
        %s278 = smul.addr %s277, 8
        %s279 = scalar_lea.vmem [#allocation9], %s278
        %p280 = pneg %p168
        %p281 = pneg %p165
        %s282 = sand.u32 %s27, 1
        %s283 = scalar_lea.sflag [#allocation10], %s282
        %s284 = sand.u32 %s155, 1
        %s285 = smul.addr %s284, 8
        %s286 = scalar_lea.vmem [#allocation11], %s285
        %v287 = vld [vmem:[%s242] sm:$0xff]
        %v288 = vld [vmem:[#allocation5] sm:$0xff]
        %v289 = vld [vmem:[#allocation5 + $0x8] sm:$0xff]
        %v290 = vld [vmem:[#allocation5 + $0x10] sm:$0xff]
        %v291 = vld [vmem:[#allocation5 + $0x18] sm:$0xff]
        %v292 = vld [vmem:[#allocation5 + $0x20] sm:$0xff]
        %v293 = vld [vmem:[#allocation5 + $0x28] sm:$0xff]
        %v294 = vld [vmem:[#allocation5 + $0x30] sm:$0xff]
        %v295 = vld [vmem:[#allocation5 + $0x38] sm:$0xff]
        %v296 = vld [vmem:[#allocation5 + $0x40] sm:$0xff]
        %v297 = vld [vmem:[#allocation5 + $0x48] sm:$0xff]
        %v298 = vld [vmem:[#allocation5 + $0x50] sm:$0xff]
        %v299 = vld [vmem:[#allocation5 + $0x58] sm:$0xff]
        %v300 = vld [vmem:[#allocation5 + $0x60] sm:$0xff]
        %v301 = vld [vmem:[#allocation5 + $0x68] sm:$0xff]
        %v302 = vld [vmem:[#allocation5 + $0x70] sm:$0xff]
        %v303 = vld [vmem:[#allocation5 + $0x78] sm:$0xff]
        %v304 = vld [vmem:[#allocation7] sm:$0x1]
        %v305 = vlaneseq
        %v306 = vshrl.u32 %v305, 7
        %v307 = vsub.s32 0, %v306
        %v308 = vrot.slane %v304, %v307
        %309 = vmatprep.subr.mxu0 0.0
        %310 = vmatpush1.msra.mxu0 %v288
        %311 = vmatprep.subr.mxu0 0.0
        %312 = vmatpush1.msra.mxu0 %v289
        %313 = vmatprep.subr.mxu0 0.0
        %314 = vmatpush1.msra.mxu0 %v290
        %315 = vmatprep.subr.mxu0 0.0
        %316 = vmatpush1.msra.mxu0 %v291
        %317 = vmatprep.subr.mxu0 0.0
        %318 = vmatpush1.msra.mxu0 %v292
        %319 = vmatprep.subr.mxu0 0.0
        %320 = vmatpush1.msra.mxu0 %v293
        %321 = vmatprep.subr.mxu0 0.0
        %322 = vmatpush1.msra.mxu0 %v294
        %323 = vmatprep.subr.mxu0 0.0
        %324 = vmatpush1.msra.mxu0 %v295
        %325 = vmatprep.subr.mxu0 0.0
        %326 = vmatpush1.msra.mxu0 %v296
        %327 = vmatprep.subr.mxu0 0.0
        %328 = vmatpush1.msra.mxu0 %v297
        %329 = vmatprep.subr.mxu0 0.0
        %330 = vmatpush1.msra.mxu0 %v298
        %331 = vmatprep.subr.mxu0 0.0
        %332 = vmatpush1.msra.mxu0 %v299
        %333 = vmatprep.subr.mxu0 0.0
        %334 = vmatpush1.msra.mxu0 %v300
        %335 = vmatprep.subr.mxu0 0.0
        %336 = vmatpush1.msra.mxu0 %v301
        %337 = vmatprep.subr.mxu0 0.0
        %338 = vmatpush1.msra.mxu0 %v302
        %339 = vmatprep.subr.mxu0 0.0
        %340 = vmatpush1.msra.mxu0 %v303
        %341 = vmatprep.subr.mxu0 0.0
        %342 = vmatpush1.msra.mxu0 0.0
        %343 = vmatprep.subr.mxu0 0.0
        %344 = vmatpush1.msra.mxu0 0.0
        %345 = vmatprep.subr.mxu0 0.0
        %346 = vmatpush1.msra.mxu0 0.0
        %347 = vmatprep.subr.mxu0 0.0
        %348 = vmatpush1.msra.mxu0 0.0
        %349 = vmatprep.subr.mxu0 0.0
        %350 = vmatpush1.msra.mxu0 0.0
        %351 = vmatprep.subr.mxu0 0.0
        %352 = vmatpush1.msra.mxu0 0.0
        %353 = vmatprep.subr.mxu0 0.0
        %354 = vmatpush1.msra.mxu0 0.0
        %355 = vmatprep.subr.mxu0 0.0
        %356 = vmatpush1.msra.mxu0 0.0
        %357 = vmatprep.subr.mxu0 0.0
        %358 = vmatpush1.msra.mxu0 0.0
        %359 = vmatprep.subr.mxu0 0.0
        %360 = vmatpush1.msra.mxu0 0.0
        %361 = vmatprep.subr.mxu0 0.0
        %362 = vmatpush1.msra.mxu0 0.0
        %363 = vmatprep.subr.mxu0 0.0
        %364 = vmatpush1.msra.mxu0 0.0
        %365 = vmatprep.subr.mxu0 0.0
        %366 = vmatpush1.msra.mxu0 0.0
        %367 = vmatprep.subr.mxu0 0.0
        %368 = vmatpush1.msra.mxu0 0.0
        %369 = vmatprep.subr.mxu0 0.0
        %370 = vmatpush1.msra.mxu0 0.0
        %371 = vmatprep.subr.mxu0 0.0
        %372 = vmatpush1.msra.mxu0 0.0
        %373 = vmatprep.mubr.f32.mxu0 0.0
        %374 = vmatmul.mubr.f32.gmra.mrb[0].mxu0 %v287
        %v375 = vpop.f32.mrb[0].mxu0
        %v376 = vadd.f32 %v308, %v375
        %v377 = vpop.f32.mrb[0].mxu0
        %378 = vdwg.mxu0
        %v379 = vld [vmem:[#allocation7 + $0x1] sm:$0x1]
        %v380 = vld [vmem:[#allocation7 + $0x2] sm:$0x1]
        %v381 = vrot.slane %v376, 4
        %v382 = vadd.f32 %v376, %v381
        %v383 = vrot.slane %v382, 2
        %v384 = vadd.f32 %v382, %v383
        %v385 = vrot.slane %v384, 1
        %v386 = vadd.f32 %v384, %v385
        %v387 = vrcp.pop 8.0
        %v388 = vmul.f32 %v386, %v387
        %v389 = vmul.f32 %v376, %v376
        %v390 = vrot.slane %v389, 4
        %v391 = vadd.f32 %v389, %v390
        %v392 = vrot.slane %v391, 2
        %v393 = vadd.f32 %v391, %v392
        %v394 = vrot.slane %v393, 1
        %v395 = vadd.f32 %v393, %v394
        %v396 = vmul.f32 %v395, %v387
        %v397 = vmul.f32 %v388, %v388
        %v398 = vsub.f32 %v396, %v397
        %v399 = vmax.f32 %v398, 0.0
        %v400 = vsub.f32 %v376, %v388
        %v401 = vadd.f32 %v399, 1e-05
        %v402 = vrsqrt.pop %v401
        %v403 = vmul.f32 %v400, %v402
        %v404 = vlaneseq
        %v405 = vshrl.u32 %v404, 7
        %v406 = vsub.s32 0, %v405
        %v407 = vrot.slane %v379, %v406
        %v408 = vmul.f32 %v403, %v407
        %v409 = vlaneseq
        %v410 = vshrl.u32 %v409, 7
        %v411 = vsub.s32 0, %v410
        %v412 = vrot.slane %v380, %v411
        %v413 = vadd.f32 %v408, %v412
        %v414 = vmax.f32 %v413, 0.0
        %v415 = vld [vmem:[#allocation5 + $0x80] sm:$0xff]
        %v416 = vld [vmem:[#allocation5 + $0x88] sm:$0xff]
        %v417 = vld [vmem:[#allocation5 + $0x90] sm:$0xff]
        %v418 = vld [vmem:[#allocation5 + $0x98] sm:$0xff]
        %v419 = vld [vmem:[#allocation5 + $0xa0] sm:$0xff]
        %v420 = vld [vmem:[#allocation5 + $0xa8] sm:$0xff]
        %v421 = vld [vmem:[#allocation5 + $0xb0] sm:$0xff]
        %v422 = vld [vmem:[#allocation5 + $0xb8] sm:$0xff]
        %v423 = vld [vmem:[#allocation5 + $0xc0] sm:$0xff]
        %v424 = vld [vmem:[#allocation5 + $0xc8] sm:$0xff]
        %v425 = vld [vmem:[#allocation5 + $0xd0] sm:$0xff]
        %v426 = vld [vmem:[#allocation5 + $0xd8] sm:$0xff]
        %v427 = vld [vmem:[#allocation5 + $0xe0] sm:$0xff]
        %v428 = vld [vmem:[#allocation5 + $0xe8] sm:$0xff]
        %v429 = vld [vmem:[#allocation5 + $0xf0] sm:$0xff]
        %v430 = vld [vmem:[#allocation5 + $0xf8] sm:$0xff]
        %v431 = vld [vmem:[#allocation7 + $0x3] sm:$0x1]
        %v432 = vlaneseq
        %v433 = vshrl.u32 %v432, 7
        %v434 = vsub.s32 0, %v433
        %v435 = vrot.slane %v431, %v434
        %436 = vmatprep.subr.mxu0 0.0
        %437 = vmatpush1.msra.mxu0 %v415
        %438 = vmatprep.subr.mxu0 0.0
        %439 = vmatpush1.msra.mxu0 %v416
        %440 = vmatprep.subr.mxu0 0.0
        %441 = vmatpush1.msra.mxu0 %v417
        %442 = vmatprep.subr.mxu0 0.0
        %443 = vmatpush1.msra.mxu0 %v418
        %444 = vmatprep.subr.mxu0 0.0
        %445 = vmatpush1.msra.mxu0 %v419
        %446 = vmatprep.subr.mxu0 0.0
        %447 = vmatpush1.msra.mxu0 %v420
        %448 = vmatprep.subr.mxu0 0.0
        %449 = vmatpush1.msra.mxu0 %v421
        %450 = vmatprep.subr.mxu0 0.0
        %451 = vmatpush1.msra.mxu0 %v422
        %452 = vmatprep.subr.mxu0 0.0
        %453 = vmatpush1.msra.mxu0 %v423
        %454 = vmatprep.subr.mxu0 0.0
        %455 = vmatpush1.msra.mxu0 %v424
        %456 = vmatprep.subr.mxu0 0.0
        %457 = vmatpush1.msra.mxu0 %v425
        %458 = vmatprep.subr.mxu0 0.0
        %459 = vmatpush1.msra.mxu0 %v426
        %460 = vmatprep.subr.mxu0 0.0
        %461 = vmatpush1.msra.mxu0 %v427
        %462 = vmatprep.subr.mxu0 0.0
        %463 = vmatpush1.msra.mxu0 %v428
        %464 = vmatprep.subr.mxu0 0.0
        %465 = vmatpush1.msra.mxu0 %v429
        %466 = vmatprep.subr.mxu0 0.0
        %467 = vmatpush1.msra.mxu0 %v430
        %468 = vmatprep.subr.mxu0 0.0
        %469 = vmatpush1.msra.mxu0 0.0
        %470 = vmatprep.subr.mxu0 0.0
        %471 = vmatpush1.msra.mxu0 0.0
        %472 = vmatprep.subr.mxu0 0.0
        %473 = vmatpush1.msra.mxu0 0.0
        %474 = vmatprep.subr.mxu0 0.0
        %475 = vmatpush1.msra.mxu0 0.0
        %476 = vmatprep.subr.mxu0 0.0
        %477 = vmatpush1.msra.mxu0 0.0
        %478 = vmatprep.subr.mxu0 0.0
        %479 = vmatpush1.msra.mxu0 0.0
        %480 = vmatprep.subr.mxu0 0.0
        %481 = vmatpush1.msra.mxu0 0.0
        %482 = vmatprep.subr.mxu0 0.0
        %483 = vmatpush1.msra.mxu0 0.0
        %484 = vmatprep.subr.mxu0 0.0
        %485 = vmatpush1.msra.mxu0 0.0
        %486 = vmatprep.subr.mxu0 0.0
        %487 = vmatpush1.msra.mxu0 0.0
        %488 = vmatprep.subr.mxu0 0.0
        %489 = vmatpush1.msra.mxu0 0.0
        %490 = vmatprep.subr.mxu0 0.0
        %491 = vmatpush1.msra.mxu0 0.0
        %492 = vmatprep.subr.mxu0 0.0
        %493 = vmatpush1.msra.mxu0 0.0
        %494 = vmatprep.subr.mxu0 0.0
        %495 = vmatpush1.msra.mxu0 0.0
        %496 = vmatprep.subr.mxu0 0.0
        %497 = vmatpush1.msra.mxu0 0.0
        %498 = vmatprep.subr.mxu0 0.0
        %499 = vmatpush1.msra.mxu0 0.0
        %500 = vmatprep.mubr.f32.mxu0 0.0
        %501 = vmatmul.mubr.f32.gmra.mrb[0].mxu0 %v414
        %v502 = vpop.f32.mrb[0].mxu0
        %v503 = vadd.f32 %v435, %v502
        %v504 = vpop.f32.mrb[0].mxu0
        %505 = vdwg.mxu0
        %v506 = vld [vmem:[#allocation7 + $0x4] sm:$0x1]
        %v507 = vld [vmem:[#allocation7 + $0x5] sm:$0x1]
        %v508 = vrot.slane %v503, 4
        %v509 = vadd.f32 %v503, %v508
        %v510 = vrot.slane %v509, 2
        %v511 = vadd.f32 %v509, %v510
        %v512 = vrot.slane %v511, 1
        %v513 = vadd.f32 %v511, %v512
        %v514 = vmul.f32 %v513, %v387
        %v515 = vmul.f32 %v503, %v503
        %v516 = vrot.slane %v515, 4
        %v517 = vadd.f32 %v515, %v516
        %v518 = vrot.slane %v517, 2
        %v519 = vadd.f32 %v517, %v518
        %v520 = vrot.slane %v519, 1
        %v521 = vadd.f32 %v519, %v520
        %v522 = vmul.f32 %v521, %v387
        %v523 = vmul.f32 %v514, %v514
        %v524 = vsub.f32 %v522, %v523
        %v525 = vmax.f32 %v524, 0.0
        %v526 = vsub.f32 %v503, %v514
        %v527 = vadd.f32 %v525, 1e-05
        %v528 = vrsqrt.pop %v527
        %v529 = vmul.f32 %v526, %v528
        %v530 = vlaneseq
        %v531 = vshrl.u32 %v530, 7
        %v532 = vsub.s32 0, %v531
        %v533 = vrot.slane %v506, %v532
        %v534 = vmul.f32 %v529, %v533
        %v535 = vlaneseq
        %v536 = vshrl.u32 %v535, 7
        %v537 = vsub.s32 0, %v536
        %v538 = vrot.slane %v507, %v537
        %v539 = vadd.f32 %v534, %v538
        %v540 = vmax.f32 %v539, 0.0
        %v541 = vld [vmem:[#allocation5 + $0x100] sm:$0xff]
        %v542 = vld [vmem:[#allocation5 + $0x108] sm:$0xff]
        %v543 = vld [vmem:[#allocation5 + $0x110] sm:$0xff]
        %v544 = vld [vmem:[#allocation5 + $0x118] sm:$0xff]
        %v545 = vld [vmem:[#allocation5 + $0x120] sm:$0xff]
        %v546 = vld [vmem:[#allocation5 + $0x128] sm:$0xff]
        %v547 = vld [vmem:[#allocation5 + $0x130] sm:$0xff]
        %v548 = vld [vmem:[#allocation5 + $0x138] sm:$0xff]
        %v549 = vld [vmem:[#allocation5 + $0x140] sm:$0xff]
        %v550 = vld [vmem:[#allocation5 + $0x148] sm:$0xff]
        %v551 = vld [vmem:[#allocation5 + $0x150] sm:$0xff]
        %v552 = vld [vmem:[#allocation5 + $0x158] sm:$0xff]
        %v553 = vld [vmem:[#allocation5 + $0x160] sm:$0xff]
        %v554 = vld [vmem:[#allocation5 + $0x168] sm:$0xff]
        %v555 = vld [vmem:[#allocation5 + $0x170] sm:$0xff]
        %v556 = vld [vmem:[#allocation5 + $0x178] sm:$0xff]
        %v557 = vld [vmem:[#allocation7 + $0x6] sm:$0x1]
        %v558 = vlaneseq
        %v559 = vshrl.u32 %v558, 7
        %v560 = vsub.s32 0, %v559
        %v561 = vrot.slane %v557, %v560
        %562 = vmatprep.subr.mxu0 0.0
        %563 = vmatpush1.msra.mxu0 %v541
        %564 = vmatprep.subr.mxu0 0.0
        %565 = vmatpush1.msra.mxu0 %v542
        %566 = vmatprep.subr.mxu0 0.0
        %567 = vmatpush1.msra.mxu0 %v543
        %568 = vmatprep.subr.mxu0 0.0
        %569 = vmatpush1.msra.mxu0 %v544
        %570 = vmatprep.subr.mxu0 0.0
        %571 = vmatpush1.msra.mxu0 %v545
        %572 = vmatprep.subr.mxu0 0.0
        %573 = vmatpush1.msra.mxu0 %v546
        %574 = vmatprep.subr.mxu0 0.0
        %575 = vmatpush1.msra.mxu0 %v547
        %576 = vmatprep.subr.mxu0 0.0
        %577 = vmatpush1.msra.mxu0 %v548
        %578 = vmatprep.subr.mxu0 0.0
        %579 = vmatpush1.msra.mxu0 %v549
        %580 = vmatprep.subr.mxu0 0.0
        %581 = vmatpush1.msra.mxu0 %v550
        %582 = vmatprep.subr.mxu0 0.0
        %583 = vmatpush1.msra.mxu0 %v551
        %584 = vmatprep.subr.mxu0 0.0
        %585 = vmatpush1.msra.mxu0 %v552
        %586 = vmatprep.subr.mxu0 0.0
        %587 = vmatpush1.msra.mxu0 %v553
        %588 = vmatprep.subr.mxu0 0.0
        %589 = vmatpush1.msra.mxu0 %v554
        %590 = vmatprep.subr.mxu0 0.0
        %591 = vmatpush1.msra.mxu0 %v555
        %592 = vmatprep.subr.mxu0 0.0
        %593 = vmatpush1.msra.mxu0 %v556
        %594 = vmatprep.subr.mxu0 0.0
        %595 = vmatpush1.msra.mxu0 0.0
        %596 = vmatprep.subr.mxu0 0.0
        %597 = vmatpush1.msra.mxu0 0.0
        %598 = vmatprep.subr.mxu0 0.0
        %599 = vmatpush1.msra.mxu0 0.0
        %600 = vmatprep.subr.mxu0 0.0
        %601 = vmatpush1.msra.mxu0 0.0
        %602 = vmatprep.subr.mxu0 0.0
        %603 = vmatpush1.msra.mxu0 0.0
        %604 = vmatprep.subr.mxu0 0.0
        %605 = vmatpush1.msra.mxu0 0.0
        %606 = vmatprep.subr.mxu0 0.0
        %607 = vmatpush1.msra.mxu0 0.0
        %608 = vmatprep.subr.mxu0 0.0
        %609 = vmatpush1.msra.mxu0 0.0
        %610 = vmatprep.subr.mxu0 0.0
        %611 = vmatpush1.msra.mxu0 0.0
        %612 = vmatprep.subr.mxu0 0.0
        %613 = vmatpush1.msra.mxu0 0.0
        %614 = vmatprep.subr.mxu0 0.0
        %615 = vmatpush1.msra.mxu0 0.0
        %616 = vmatprep.subr.mxu0 0.0
        %617 = vmatpush1.msra.mxu0 0.0
        %618 = vmatprep.subr.mxu0 0.0
        %619 = vmatpush1.msra.mxu0 0.0
        %620 = vmatprep.subr.mxu0 0.0
        %621 = vmatpush1.msra.mxu0 0.0
        %622 = vmatprep.subr.mxu0 0.0
        %623 = vmatpush1.msra.mxu0 0.0
        %624 = vmatprep.subr.mxu0 0.0
        %625 = vmatpush1.msra.mxu0 0.0
        %626 = vmatprep.mubr.f32.mxu0 0.0
        %627 = vmatmul.mubr.f32.gmra.mrb[0].mxu0 %v540
        %v628 = vpop.f32.mrb[0].mxu0
        %v629 = vadd.f32 %v561, %v628
        %v630 = vpop.f32.mrb[0].mxu0
        %631 = vdwg.mxu0
        %v632 = vld [vmem:[#allocation5 + $0x180] sm:$0xff]
        %v633 = vld [vmem:[#allocation5 + $0x188] sm:$0xff]
        %v634 = vld [vmem:[#allocation5 + $0x190] sm:$0xff]
        %v635 = vld [vmem:[#allocation5 + $0x198] sm:$0xff]
        %v636 = vld [vmem:[#allocation5 + $0x1a0] sm:$0xff]
        %v637 = vld [vmem:[#allocation5 + $0x1a8] sm:$0xff]
        %v638 = vld [vmem:[#allocation5 + $0x1b0] sm:$0xff]
        %v639 = vld [vmem:[#allocation5 + $0x1b8] sm:$0xff]
        %v640 = vld [vmem:[#allocation5 + $0x1c0] sm:$0xff]
        %v641 = vld [vmem:[#allocation5 + $0x1c8] sm:$0xff]
        %v642 = vld [vmem:[#allocation5 + $0x1d0] sm:$0xff]
        %v643 = vld [vmem:[#allocation5 + $0x1d8] sm:$0xff]
        %v644 = vld [vmem:[#allocation5 + $0x1e0] sm:$0xff]
        %v645 = vld [vmem:[#allocation5 + $0x1e8] sm:$0xff]
        %v646 = vld [vmem:[#allocation5 + $0x1f0] sm:$0xff]
        %v647 = vld [vmem:[#allocation5 + $0x1f8] sm:$0xff]
        %v648 = vld [vmem:[#allocation7 + $0x7] sm:$0x1]
        %v649 = vlaneseq
        %v650 = vshrl.u32 %v649, 7
        %v651 = vsub.s32 0, %v650
        %v652 = vrot.slane %v648, %v651
        %653 = vmatprep.subr.mxu0 0.0
        %654 = vmatpush1.msra.mxu0 %v632
        %655 = vmatprep.subr.mxu0 0.0
        %656 = vmatpush1.msra.mxu0 %v633
        %657 = vmatprep.subr.mxu0 0.0
        %658 = vmatpush1.msra.mxu0 %v634
        %659 = vmatprep.subr.mxu0 0.0
        %660 = vmatpush1.msra.mxu0 %v635
        %661 = vmatprep.subr.mxu0 0.0
        %662 = vmatpush1.msra.mxu0 %v636
        %663 = vmatprep.subr.mxu0 0.0
        %664 = vmatpush1.msra.mxu0 %v637
        %665 = vmatprep.subr.mxu0 0.0
        %666 = vmatpush1.msra.mxu0 %v638
        %667 = vmatprep.subr.mxu0 0.0
        %668 = vmatpush1.msra.mxu0 %v639
        %669 = vmatprep.subr.mxu0 0.0
        %670 = vmatpush1.msra.mxu0 %v640
        %671 = vmatprep.subr.mxu0 0.0
        %672 = vmatpush1.msra.mxu0 %v641
        %673 = vmatprep.subr.mxu0 0.0
        %674 = vmatpush1.msra.mxu0 %v642
        %675 = vmatprep.subr.mxu0 0.0
        %676 = vmatpush1.msra.mxu0 %v643
        %677 = vmatprep.subr.mxu0 0.0
        %678 = vmatpush1.msra.mxu0 %v644
        %679 = vmatprep.subr.mxu0 0.0
        %680 = vmatpush1.msra.mxu0 %v645
        %681 = vmatprep.subr.mxu0 0.0
        %682 = vmatpush1.msra.mxu0 %v646
        %683 = vmatprep.subr.mxu0 0.0
        %684 = vmatpush1.msra.mxu0 %v647
        %685 = vmatprep.subr.mxu0 0.0
        %686 = vmatpush1.msra.mxu0 0.0
        %687 = vmatprep.subr.mxu0 0.0
        %688 = vmatpush1.msra.mxu0 0.0
        %689 = vmatprep.subr.mxu0 0.0
        %690 = vmatpush1.msra.mxu0 0.0
        %691 = vmatprep.subr.mxu0 0.0
        %692 = vmatpush1.msra.mxu0 0.0
        %693 = vmatprep.subr.mxu0 0.0
        %694 = vmatpush1.msra.mxu0 0.0
        %695 = vmatprep.subr.mxu0 0.0
        %696 = vmatpush1.msra.mxu0 0.0
        %697 = vmatprep.subr.mxu0 0.0
        %698 = vmatpush1.msra.mxu0 0.0
        %699 = vmatprep.subr.mxu0 0.0
        %700 = vmatpush1.msra.mxu0 0.0
        %701 = vmatprep.subr.mxu0 0.0
        %702 = vmatpush1.msra.mxu0 0.0
        %703 = vmatprep.subr.mxu0 0.0
        %704 = vmatpush1.msra.mxu0 0.0
        %705 = vmatprep.subr.mxu0 0.0
        %706 = vmatpush1.msra.mxu0 0.0
        %707 = vmatprep.subr.mxu0 0.0
        %708 = vmatpush1.msra.mxu0 0.0
        %709 = vmatprep.subr.mxu0 0.0
        %710 = vmatpush1.msra.mxu0 0.0
        %711 = vmatprep.subr.mxu0 0.0
        %712 = vmatpush1.msra.mxu0 0.0
        %713 = vmatprep.subr.mxu0 0.0
        %714 = vmatpush1.msra.mxu0 0.0
        %715 = vmatprep.subr.mxu0 0.0
        %716 = vmatpush1.msra.mxu0 0.0
        %717 = vmatprep.mubr.f32.mxu0 0.0
        %718 = vmatmul.mubr.f32.gmra.mrb[0].mxu0 %v629
        %v719 = vpop.f32.mrb[0].mxu0
        %v720 = vadd.f32 %v652, %v719
        %v721 = vpop.f32.mrb[0].mxu0
        %722 = vdwg.mxu0
        %v723 = vld [vmem:[#allocation7 + $0x8] sm:$0x1]
        %v724 = vld [vmem:[#allocation7 + $0x9] sm:$0x1]
        %v725 = vrot.slane %v720, 4
        %v726 = vadd.f32 %v720, %v725
        %v727 = vrot.slane %v726, 2
        %v728 = vadd.f32 %v726, %v727
        %v729 = vrot.slane %v728, 1
        %v730 = vadd.f32 %v728, %v729
        %v731 = vmul.f32 %v730, %v387
        %v732 = vmul.f32 %v720, %v720
        %v733 = vrot.slane %v732, 4
        %v734 = vadd.f32 %v732, %v733
        %v735 = vrot.slane %v734, 2
        %v736 = vadd.f32 %v734, %v735
        %v737 = vrot.slane %v736, 1
        %v738 = vadd.f32 %v736, %v737
        %v739 = vmul.f32 %v738, %v387
        %v740 = vmul.f32 %v731, %v731
        %v741 = vsub.f32 %v739, %v740
        %v742 = vmax.f32 %v741, 0.0
        %v743 = vsub.f32 %v720, %v731
        %v744 = vadd.f32 %v742, 1e-05
        %v745 = vrsqrt.pop %v744
        %v746 = vmul.f32 %v743, %v745
        %v747 = vlaneseq
        %v748 = vshrl.u32 %v747, 7
        %v749 = vsub.s32 0, %v748
        %v750 = vrot.slane %v723, %v749
        %v751 = vmul.f32 %v746, %v750
        %v752 = vlaneseq
        %v753 = vshrl.u32 %v752, 7
        %v754 = vsub.s32 0, %v753
        %v755 = vrot.slane %v724, %v754
        %v756 = vadd.f32 %v751, %v755
        %v757 = vmax.f32 %v756, 0.0
        %v758 = vld [vmem:[#allocation5 + $0x200] sm:$0xff]
        %v759 = vld [vmem:[#allocation5 + $0x208] sm:$0xff]
        %v760 = vld [vmem:[#allocation5 + $0x210] sm:$0xff]
        %v761 = vld [vmem:[#allocation5 + $0x218] sm:$0xff]
        %v762 = vld [vmem:[#allocation5 + $0x220] sm:$0xff]
        %v763 = vld [vmem:[#allocation5 + $0x228] sm:$0xff]
        %v764 = vld [vmem:[#allocation5 + $0x230] sm:$0xff]
        %v765 = vld [vmem:[#allocation5 + $0x238] sm:$0xff]
        %v766 = vld [vmem:[#allocation5 + $0x240] sm:$0xff]
        %v767 = vld [vmem:[#allocation5 + $0x248] sm:$0xff]
        %v768 = vld [vmem:[#allocation5 + $0x250] sm:$0xff]
        %v769 = vld [vmem:[#allocation5 + $0x258] sm:$0xff]
        %v770 = vld [vmem:[#allocation5 + $0x260] sm:$0xff]
        %v771 = vld [vmem:[#allocation5 + $0x268] sm:$0xff]
        %v772 = vld [vmem:[#allocation5 + $0x270] sm:$0xff]
        %v773 = vld [vmem:[#allocation5 + $0x278] sm:$0xff]
        %v774 = vld [vmem:[#allocation7 + $0xa] sm:$0x1]
        %v775 = vlaneseq
        %v776 = vshrl.u32 %v775, 7
        %v777 = vsub.s32 0, %v776
        %v778 = vrot.slane %v774, %v777
        %779 = vmatprep.subr.mxu0 0.0
        %780 = vmatpush1.msra.mxu0 %v758
        %781 = vmatprep.subr.mxu0 0.0
        %782 = vmatpush1.msra.mxu0 %v759
        %783 = vmatprep.subr.mxu0 0.0
        %784 = vmatpush1.msra.mxu0 %v760
        %785 = vmatprep.subr.mxu0 0.0
        %786 = vmatpush1.msra.mxu0 %v761
        %787 = vmatprep.subr.mxu0 0.0
        %788 = vmatpush1.msra.mxu0 %v762
        %789 = vmatprep.subr.mxu0 0.0
        %790 = vmatpush1.msra.mxu0 %v763
        %791 = vmatprep.subr.mxu0 0.0
        %792 = vmatpush1.msra.mxu0 %v764
        %793 = vmatprep.subr.mxu0 0.0
        %794 = vmatpush1.msra.mxu0 %v765
        %795 = vmatprep.subr.mxu0 0.0
        %796 = vmatpush1.msra.mxu0 %v766
        %797 = vmatprep.subr.mxu0 0.0
        %798 = vmatpush1.msra.mxu0 %v767
        %799 = vmatprep.subr.mxu0 0.0
        %800 = vmatpush1.msra.mxu0 %v768
        %801 = vmatprep.subr.mxu0 0.0
        %802 = vmatpush1.msra.mxu0 %v769
        %803 = vmatprep.subr.mxu0 0.0
        %804 = vmatpush1.msra.mxu0 %v770
        %805 = vmatprep.subr.mxu0 0.0
        %806 = vmatpush1.msra.mxu0 %v771
        %807 = vmatprep.subr.mxu0 0.0
        %808 = vmatpush1.msra.mxu0 %v772
        %809 = vmatprep.subr.mxu0 0.0
        %810 = vmatpush1.msra.mxu0 %v773
        %811 = vmatprep.subr.mxu0 0.0
        %812 = vmatpush1.msra.mxu0 0.0
        %813 = vmatprep.subr.mxu0 0.0
        %814 = vmatpush1.msra.mxu0 0.0
        %815 = vmatprep.subr.mxu0 0.0
        %816 = vmatpush1.msra.mxu0 0.0
        %817 = vmatprep.subr.mxu0 0.0
        %818 = vmatpush1.msra.mxu0 0.0
        %819 = vmatprep.subr.mxu0 0.0
        %820 = vmatpush1.msra.mxu0 0.0
        %821 = vmatprep.subr.mxu0 0.0
        %822 = vmatpush1.msra.mxu0 0.0
        %823 = vmatprep.subr.mxu0 0.0
        %824 = vmatpush1.msra.mxu0 0.0
        %825 = vmatprep.subr.mxu0 0.0
        %826 = vmatpush1.msra.mxu0 0.0
        %827 = vmatprep.subr.mxu0 0.0
        %828 = vmatpush1.msra.mxu0 0.0
        %829 = vmatprep.subr.mxu0 0.0
        %830 = vmatpush1.msra.mxu0 0.0
        %831 = vmatprep.subr.mxu0 0.0
        %832 = vmatpush1.msra.mxu0 0.0
        %833 = vmatprep.subr.mxu0 0.0
        %834 = vmatpush1.msra.mxu0 0.0
        %835 = vmatprep.subr.mxu0 0.0
        %836 = vmatpush1.msra.mxu0 0.0
        %837 = vmatprep.subr.mxu0 0.0
        %838 = vmatpush1.msra.mxu0 0.0
        %839 = vmatprep.subr.mxu0 0.0
        %840 = vmatpush1.msra.mxu0 0.0
        %841 = vmatprep.subr.mxu0 0.0
        %842 = vmatpush1.msra.mxu0 0.0
        %843 = vmatprep.mubr.f32.mxu0 0.0
        %844 = vmatmul.mubr.f32.gmra.mrb[0].mxu0 %v757
        %v845 = vpop.f32.mrb[0].mxu0
        %v846 = vadd.f32 %v778, %v845
        %v847 = vpop.f32.mrb[0].mxu0
        %848 = vdwg.mxu0
        %v849 = vld [vmem:[#allocation7 + $0xb] sm:$0x1]
        %v850 = vld [vmem:[#allocation7 + $0xc] sm:$0x1]
        %v851 = vrot.slane %v846, 4
        %v852 = vadd.f32 %v846, %v851
        %v853 = vrot.slane %v852, 2
        %v854 = vadd.f32 %v852, %v853
        %v855 = vrot.slane %v854, 1
        %v856 = vadd.f32 %v854, %v855
        %v857 = vmul.f32 %v856, %v387
        %v858 = vmul.f32 %v846, %v846
        %v859 = vrot.slane %v858, 4
        %v860 = vadd.f32 %v858, %v859
        %v861 = vrot.slane %v860, 2
        %v862 = vadd.f32 %v860, %v861
        %v863 = vrot.slane %v862, 1
        %v864 = vadd.f32 %v862, %v863
        %v865 = vmul.f32 %v864, %v387
        %v866 = vmul.f32 %v857, %v857
        %v867 = vsub.f32 %v865, %v866
        %v868 = vmax.f32 %v867, 0.0
        %v869 = vsub.f32 %v846, %v857
        %v870 = vadd.f32 %v868, 1e-05
        %v871 = vrsqrt.pop %v870
        %v872 = vmul.f32 %v869, %v871
        %v873 = vlaneseq
        %v874 = vshrl.u32 %v873, 7
        %v875 = vsub.s32 0, %v874
        %v876 = vrot.slane %v849, %v875
        %v877 = vmul.f32 %v872, %v876
        %v878 = vlaneseq
        %v879 = vshrl.u32 %v878, 7
        %v880 = vsub.s32 0, %v879
        %v881 = vrot.slane %v850, %v880
        %v882 = vadd.f32 %v877, %v881
        %v883 = vmax.f32 %v882, 0.0
        %v884 = vld [vmem:[#allocation5 + $0x280] sm:$0xff]
        %v885 = vld [vmem:[#allocation5 + $0x288] sm:$0xff]
        %v886 = vld [vmem:[#allocation5 + $0x290] sm:$0xff]
        %v887 = vld [vmem:[#allocation5 + $0x298] sm:$0xff]
        %v888 = vld [vmem:[#allocation5 + $0x2a0] sm:$0xff]
        %v889 = vld [vmem:[#allocation5 + $0x2a8] sm:$0xff]
        %v890 = vld [vmem:[#allocation5 + $0x2b0] sm:$0xff]
        %v891 = vld [vmem:[#allocation5 + $0x2b8] sm:$0xff]
        %v892 = vld [vmem:[#allocation5 + $0x2c0] sm:$0xff]
        %v893 = vld [vmem:[#allocation5 + $0x2c8] sm:$0xff]
        %v894 = vld [vmem:[#allocation5 + $0x2d0] sm:$0xff]
        %v895 = vld [vmem:[#allocation5 + $0x2d8] sm:$0xff]
        %v896 = vld [vmem:[#allocation5 + $0x2e0] sm:$0xff]
        %v897 = vld [vmem:[#allocation5 + $0x2e8] sm:$0xff]
        %v898 = vld [vmem:[#allocation5 + $0x2f0] sm:$0xff]
        %v899 = vld [vmem:[#allocation5 + $0x2f8] sm:$0xff]
        %v900 = vld [vmem:[#allocation7 + $0xd] sm:$0x1]
        %v901 = vlaneseq
        %v902 = vshrl.u32 %v901, 7
        %v903 = vsub.s32 0, %v902
        %v904 = vrot.slane %v900, %v903
        %905 = vmatprep.subr.mxu0 0.0
        %906 = vmatpush1.msra.mxu0 %v884
        %907 = vmatprep.subr.mxu0 0.0
        %908 = vmatpush1.msra.mxu0 %v885
        %909 = vmatprep.subr.mxu0 0.0
        %910 = vmatpush1.msra.mxu0 %v886
        %911 = vmatprep.subr.mxu0 0.0
        %912 = vmatpush1.msra.mxu0 %v887
        %913 = vmatprep.subr.mxu0 0.0
        %914 = vmatpush1.msra.mxu0 %v888
        %915 = vmatprep.subr.mxu0 0.0
        %916 = vmatpush1.msra.mxu0 %v889
        %917 = vmatprep.subr.mxu0 0.0
        %918 = vmatpush1.msra.mxu0 %v890
        %919 = vmatprep.subr.mxu0 0.0
        %920 = vmatpush1.msra.mxu0 %v891
        %921 = vmatprep.subr.mxu0 0.0
        %922 = vmatpush1.msra.mxu0 %v892
        %923 = vmatprep.subr.mxu0 0.0
        %924 = vmatpush1.msra.mxu0 %v893
        %925 = vmatprep.subr.mxu0 0.0
        %926 = vmatpush1.msra.mxu0 %v894
        %927 = vmatprep.subr.mxu0 0.0
        %928 = vmatpush1.msra.mxu0 %v895
        %929 = vmatprep.subr.mxu0 0.0
        %930 = vmatpush1.msra.mxu0 %v896
        %931 = vmatprep.subr.mxu0 0.0
        %932 = vmatpush1.msra.mxu0 %v897
        %933 = vmatprep.subr.mxu0 0.0
        %934 = vmatpush1.msra.mxu0 %v898
        %935 = vmatprep.subr.mxu0 0.0
        %936 = vmatpush1.msra.mxu0 %v899
        %937 = vmatprep.subr.mxu0 0.0
        %938 = vmatpush1.msra.mxu0 0.0
        %939 = vmatprep.subr.mxu0 0.0
        %940 = vmatpush1.msra.mxu0 0.0
        %941 = vmatprep.subr.mxu0 0.0
        %942 = vmatpush1.msra.mxu0 0.0
        %943 = vmatprep.subr.mxu0 0.0
        %944 = vmatpush1.msra.mxu0 0.0
        %945 = vmatprep.subr.mxu0 0.0
        %946 = vmatpush1.msra.mxu0 0.0
        %947 = vmatprep.subr.mxu0 0.0
        %948 = vmatpush1.msra.mxu0 0.0
        %949 = vmatprep.subr.mxu0 0.0
        %950 = vmatpush1.msra.mxu0 0.0
        %951 = vmatprep.subr.mxu0 0.0
        %952 = vmatpush1.msra.mxu0 0.0
        %953 = vmatprep.subr.mxu0 0.0
        %954 = vmatpush1.msra.mxu0 0.0
        %955 = vmatprep.subr.mxu0 0.0
        %956 = vmatpush1.msra.mxu0 0.0
        %957 = vmatprep.subr.mxu0 0.0
        %958 = vmatpush1.msra.mxu0 0.0
        %959 = vmatprep.subr.mxu0 0.0
        %960 = vmatpush1.msra.mxu0 0.0
        %961 = vmatprep.subr.mxu0 0.0
        %962 = vmatpush1.msra.mxu0 0.0
        %963 = vmatprep.subr.mxu0 0.0
        %964 = vmatpush1.msra.mxu0 0.0
        %965 = vmatprep.subr.mxu0 0.0
        %966 = vmatpush1.msra.mxu0 0.0
        %967 = vmatprep.subr.mxu0 0.0
        %968 = vmatpush1.msra.mxu0 0.0
        %969 = vmatprep.mubr.f32.mxu0 0.0
        %970 = vmatmul.mubr.f32.gmra.mrb[0].mxu0 %v883
        %v971 = vpop.f32.mrb[0].mxu0
        %v972 = vadd.f32 %v904, %v971
        %v973 = vpop.f32.mrb[0].mxu0
        %974 = vdwg.mxu0
        %975 = vst [vmem:[%s272] sm:$0xff] %v972
        %976 = vst [vmem:[%s279] sm:$0xff] %v629
        %v977 = vsub.f32 %v287, %v972
        %v978 = vmul.f32 %v977, %v977
        %979 = vadd.xlane.f32.xlu0 %v978
        %v980 = vpop.xlane.xlu0 %979
        %v981 = vrot.slane %v980, 4
        %v982 = vadd.f32 %v980, %v981
        %v983 = vrot.slane %v982, 2
        %v984 = vadd.f32 %v982, %v983
        %v985 = vrot.slane %v984, 1
        %v986 = vadd.f32 %v984, %v985
        %s987 = vtos %v986
        %s988 = smul.f32 %s987, 0.00390625
        %v989 = vlaneseq
        %v990 = vshrl.u32 %v989, 7
        %v991 = vlaneseq
        %v992 = vand.u32 %v991, 127
        %vm993 = vcmp.eq.s32.totalorder %v990, %v992
        %v994 = vrot.slane %v287, 4
        %v995 = vadd.f32 %v287, %v994
        %v996 = vrot.slane %v995, 2
        %v997 = vadd.f32 %v995, %v996
        %v998 = vrot.slane %v997, 1
        %v999 = vadd.f32 %v997, %v998
        %v1000 = vmul.f32 %v999, %v387
        %v1001 = vsub.f32 %v287, %v1000
        %1002 = vmatprep.subr.mxu0 0.0
        %1003 = vmatpush1.xpose.msra.mxu0 %v1001
        %1004 = vmatprep.subr.mxu0 0.0
        %1005 = vmatpush1.xpose.msra.mxu0 0.0
        %1006 = vmatprep.subr.mxu0 0.0
        %1007 = vmatpush1.xpose.msra.mxu0 0.0
        %1008 = vmatprep.subr.mxu0 0.0
        %1009 = vmatpush1.xpose.msra.mxu0 0.0
        %1010 = vmatprep.subr.mxu0 0.0
        %1011 = vmatpush1.xpose.msra.mxu0 0.0
        %1012 = vmatprep.subr.mxu0 0.0
        %1013 = vmatpush1.xpose.msra.mxu0 0.0
        %1014 = vmatprep.subr.mxu0 0.0
        %1015 = vmatpush1.xpose.msra.mxu0 0.0
        %1016 = vmatprep.subr.mxu0 0.0
        %1017 = vmatpush1.xpose.msra.mxu0 0.0
        %1018 = vmatprep.subr.mxu0 0.0
        %1019 = vmatpush1.xpose.msra.mxu0 0.0
        %1020 = vmatprep.subr.mxu0 0.0
        %1021 = vmatpush1.xpose.msra.mxu0 0.0
        %1022 = vmatprep.subr.mxu0 0.0
        %1023 = vmatpush1.xpose.msra.mxu0 0.0
        %1024 = vmatprep.subr.mxu0 0.0
        %1025 = vmatpush1.xpose.msra.mxu0 0.0
        %1026 = vmatprep.subr.mxu0 0.0
        %1027 = vmatpush1.xpose.msra.mxu0 0.0
        %1028 = vmatprep.subr.mxu0 0.0
        %1029 = vmatpush1.xpose.msra.mxu0 0.0
        %1030 = vmatprep.subr.mxu0 0.0
        %1031 = vmatpush1.xpose.msra.mxu0 0.0
        %1032 = vmatprep.subr.mxu0 0.0
        %1033 = vmatpush1.xpose.msra.mxu0 0.0
        %1034 = vmatprep.subr.mxu0 0.0
        %1035 = vmatpush1.xpose.msra.mxu0 0.0
        %1036 = vmatprep.subr.mxu0 0.0
        %1037 = vmatpush1.xpose.msra.mxu0 0.0
        %1038 = vmatprep.subr.mxu0 0.0
        %1039 = vmatpush1.xpose.msra.mxu0 0.0
        %1040 = vmatprep.subr.mxu0 0.0
        %1041 = vmatpush1.xpose.msra.mxu0 0.0
        %1042 = vmatprep.subr.mxu0 0.0
        %1043 = vmatpush1.xpose.msra.mxu0 0.0
        %1044 = vmatprep.subr.mxu0 0.0
        %1045 = vmatpush1.xpose.msra.mxu0 0.0
        %1046 = vmatprep.subr.mxu0 0.0
        %1047 = vmatpush1.xpose.msra.mxu0 0.0
        %1048 = vmatprep.subr.mxu0 0.0
        %1049 = vmatpush1.xpose.msra.mxu0 0.0
        %1050 = vmatprep.subr.mxu0 0.0
        %1051 = vmatpush1.xpose.msra.mxu0 0.0
        %1052 = vmatprep.subr.mxu0 0.0
        %1053 = vmatpush1.xpose.msra.mxu0 0.0
        %1054 = vmatprep.subr.mxu0 0.0
        %1055 = vmatpush1.xpose.msra.mxu0 0.0
        %1056 = vmatprep.subr.mxu0 0.0
        %1057 = vmatpush1.xpose.msra.mxu0 0.0
        %1058 = vmatprep.subr.mxu0 0.0
        %1059 = vmatpush1.xpose.msra.mxu0 0.0
        %1060 = vmatprep.subr.mxu0 0.0
        %1061 = vmatpush1.xpose.msra.mxu0 0.0
        %1062 = vmatprep.subr.mxu0 0.0
        %1063 = vmatpush1.xpose.msra.mxu0 0.0
        %1064 = vmatprep.subr.mxu0 0.0
        %1065 = vmatpush1.xpose.msra.mxu0 0.0
        %1066 = vmatprep.mubr.f32.mxu0 0.0
        %1067 = vmatmul.mubr.f32.gmra.mrb[0].mxu0 %v1001
        %v1068 = vpop.f32.mrb[0].mxu0
        %v1069 = vadd.f32 0.0, %v1068
        %v1070 = vpop.f32.mrb[0].mxu0
        %1071 = vdwg.mxu0
        %v1072 = vmul.f32 %v1001, %v1001
        %1073 = vadd.xlane.f32.xlu0 %v1072
        %v1074 = vpop.xlane.xlu0 %1073
        %v1075 = vsel %vm993, %v1069, 0.0
        %vm1076 = vcmask 64512
        %v1077 = vsel %vm1076, %v1075, 0.0
        %v1078 = vrot.slane %v1077, 4
        %v1079 = vadd.f32 %v1077, %v1078
        %v1080 = vrot.slane %v1079, 2
        %v1081 = vadd.f32 %v1079, %v1080
        %v1082 = vrot.slane %v1081, 1
        %v1083 = vadd.f32 %v1081, %v1082
        %v1084 = vadd.f32 %v1074, %v1083
        %v1085 = vmul.f32 %v1069, 2.0
        %v1086 = vsub.f32 %v1084, %v1085
        %v1087 = vmax.f32 %v1086, 0.0
        %v1088 = vrot.slane %v1074, 4
        %v1089 = vmax.f32 %v1074, %v1088
        %v1090 = vrot.slane %v1089, 2
        %v1091 = vmax.f32 %v1089, %v1090
        %v1092 = vrot.slane %v1091, 1
        %v1093 = vmax.f32 %v1091, %v1092
        %s1094 = vtos %v1093
        %v1095 = vstv %s1094
        %v1096 = vrsqrt.pop %v1095
        %v1097 = vmul.f32 %v1095, %v1096
        %vm1098 = vcmp.eq.f32.partialorder %v1095, inf
        %v1099 = vsel %vm1098, %v1095, %v1097
        %vm1100 = vcmp.eq.f32.partialorder %v1095, 0.0
        %v1101 = vand.u32 %v1095, 2147483648
        %v1102 = vsel %vm1100, %v1101, %v1099
        %s1103 = vtos %v1102
        %s1104 = smax.f32 %s1103, 1e-20
        %v1105 = vstv %s1104
        %v1106 = vrcp.pop %v1105
        %s1107 = vtos %v1106
        %v1108 = vrsqrt.pop %v1087
        %v1109 = vmul.f32 %v1087, %v1108
        %vm1110 = vcmp.eq.f32.partialorder %v1087, inf
        %v1111 = vsel %vm1110, %v1087, %v1109
        %vm1112 = vcmp.eq.f32.partialorder %v1087, 0.0
        %v1113 = vand.u32 %v1087, 2147483648
        %v1114 = vsel %vm1112, %v1113, %v1111
        %v1115 = vstv %s1107
        %v1116 = vmul.f32 %v1114, %v1115
        %v1117 = vsel %vm993, 0.0, %v1116
        %v1118 = vrot.slane %v629, 4
        %v1119 = vadd.f32 %v629, %v1118
        %v1120 = vrot.slane %v1119, 2
        %v1121 = vadd.f32 %v1119, %v1120
        %v1122 = vrot.slane %v1121, 1
        %v1123 = vadd.f32 %v1121, %v1122
        %v1124 = vmul.f32 %v1123, %v387
        %v1125 = vsub.f32 %v629, %v1124
        %1126 = vmatprep.subr.mxu0 0.0
        %1127 = vmatpush1.xpose.msra.mxu0 %v1125
        %1128 = vmatprep.subr.mxu0 0.0
        %1129 = vmatpush1.xpose.msra.mxu0 0.0
        %1130 = vmatprep.subr.mxu0 0.0
        %1131 = vmatpush1.xpose.msra.mxu0 0.0
        %1132 = vmatprep.subr.mxu0 0.0
        %1133 = vmatpush1.xpose.msra.mxu0 0.0
        %1134 = vmatprep.subr.mxu0 0.0
        %1135 = vmatpush1.xpose.msra.mxu0 0.0
        %1136 = vmatprep.subr.mxu0 0.0
        %1137 = vmatpush1.xpose.msra.mxu0 0.0
        %1138 = vmatprep.subr.mxu0 0.0
        %1139 = vmatpush1.xpose.msra.mxu0 0.0
        %1140 = vmatprep.subr.mxu0 0.0
        %1141 = vmatpush1.xpose.msra.mxu0 0.0
        %1142 = vmatprep.subr.mxu0 0.0
        %1143 = vmatpush1.xpose.msra.mxu0 0.0
        %1144 = vmatprep.subr.mxu0 0.0
        %1145 = vmatpush1.xpose.msra.mxu0 0.0
        %1146 = vmatprep.subr.mxu0 0.0
        %1147 = vmatpush1.xpose.msra.mxu0 0.0
        %1148 = vmatprep.subr.mxu0 0.0
        %1149 = vmatpush1.xpose.msra.mxu0 0.0
        %1150 = vmatprep.subr.mxu0 0.0
        %1151 = vmatpush1.xpose.msra.mxu0 0.0
        %1152 = vmatprep.subr.mxu0 0.0
        %1153 = vmatpush1.xpose.msra.mxu0 0.0
        %1154 = vmatprep.subr.mxu0 0.0
        %1155 = vmatpush1.xpose.msra.mxu0 0.0
        %1156 = vmatprep.subr.mxu0 0.0
        %1157 = vmatpush1.xpose.msra.mxu0 0.0
        %1158 = vmatprep.subr.mxu0 0.0
        %1159 = vmatpush1.xpose.msra.mxu0 0.0
        %1160 = vmatprep.subr.mxu0 0.0
        %1161 = vmatpush1.xpose.msra.mxu0 0.0
        %1162 = vmatprep.subr.mxu0 0.0
        %1163 = vmatpush1.xpose.msra.mxu0 0.0
        %1164 = vmatprep.subr.mxu0 0.0
        %1165 = vmatpush1.xpose.msra.mxu0 0.0
        %1166 = vmatprep.subr.mxu0 0.0
        %1167 = vmatpush1.xpose.msra.mxu0 0.0
        %1168 = vmatprep.subr.mxu0 0.0
        %1169 = vmatpush1.xpose.msra.mxu0 0.0
        %1170 = vmatprep.subr.mxu0 0.0
        %1171 = vmatpush1.xpose.msra.mxu0 0.0
        %1172 = vmatprep.subr.mxu0 0.0
        %1173 = vmatpush1.xpose.msra.mxu0 0.0
        %1174 = vmatprep.subr.mxu0 0.0
        %1175 = vmatpush1.xpose.msra.mxu0 0.0
        %1176 = vmatprep.subr.mxu0 0.0
        %1177 = vmatpush1.xpose.msra.mxu0 0.0
        %1178 = vmatprep.subr.mxu0 0.0
        %1179 = vmatpush1.xpose.msra.mxu0 0.0
        %1180 = vmatprep.subr.mxu0 0.0
        %1181 = vmatpush1.xpose.msra.mxu0 0.0
        %1182 = vmatprep.subr.mxu0 0.0
        %1183 = vmatpush1.xpose.msra.mxu0 0.0
        %1184 = vmatprep.subr.mxu0 0.0
        %1185 = vmatpush1.xpose.msra.mxu0 0.0
        %1186 = vmatprep.subr.mxu0 0.0
        %1187 = vmatpush1.xpose.msra.mxu0 0.0
        %1188 = vmatprep.subr.mxu0 0.0
        %1189 = vmatpush1.xpose.msra.mxu0 0.0
        %1190 = vmatprep.mubr.f32.mxu0 0.0
        %1191 = vmatmul.mubr.f32.gmra.mrb[0].mxu0 %v1125
        %v1192 = vpop.f32.mrb[0].mxu0
        %v1193 = vadd.f32 0.0, %v1192
        %v1194 = vpop.f32.mrb[0].mxu0
        %1195 = vdwg.mxu0
        %v1196 = vmul.f32 %v1125, %v1125
        %1197 = vadd.xlane.f32.xlu0 %v1196
        %v1198 = vpop.xlane.xlu0 %1197
        %v1199 = vsel %vm993, %v1193, 0.0
        %v1200 = vsel %vm1076, %v1199, 0.0
        %v1201 = vrot.slane %v1200, 4
        %v1202 = vadd.f32 %v1200, %v1201
        %v1203 = vrot.slane %v1202, 2
        %v1204 = vadd.f32 %v1202, %v1203
        %v1205 = vrot.slane %v1204, 1
        %v1206 = vadd.f32 %v1204, %v1205
        %v1207 = vadd.f32 %v1198, %v1206
        %v1208 = vmul.f32 %v1193, 2.0
        %v1209 = vsub.f32 %v1207, %v1208
        %v1210 = vmax.f32 %v1209, 0.0
        %v1211 = vrot.slane %v1198, 4
        %v1212 = vmax.f32 %v1198, %v1211
        %v1213 = vrot.slane %v1212, 2
        %v1214 = vmax.f32 %v1212, %v1213
        %v1215 = vrot.slane %v1214, 1
        %v1216 = vmax.f32 %v1214, %v1215
        %s1217 = vtos %v1216
        %v1218 = vstv %s1217
        %v1219 = vrsqrt.pop %v1218
        %v1220 = vmul.f32 %v1218, %v1219
        %vm1221 = vcmp.eq.f32.partialorder %v1218, inf
        %v1222 = vsel %vm1221, %v1218, %v1220
        %vm1223 = vcmp.eq.f32.partialorder %v1218, 0.0
        %v1224 = vand.u32 %v1218, 2147483648
        %v1225 = vsel %vm1223, %v1224, %v1222
        %s1226 = vtos %v1225
        %s1227 = smax.f32 %s1226, 1e-20
        %v1228 = vstv %s1227
        %v1229 = vrcp.pop %v1228
        %s1230 = vtos %v1229
        %v1231 = vrsqrt.pop %v1210
        %v1232 = vmul.f32 %v1210, %v1231
        %vm1233 = vcmp.eq.f32.partialorder %v1210, inf
        %v1234 = vsel %vm1233, %v1210, %v1232
        %vm1235 = vcmp.eq.f32.partialorder %v1210, 0.0
        %v1236 = vand.u32 %v1210, 2147483648
        %v1237 = vsel %vm1235, %v1236, %v1234
        %v1238 = vstv %s1230
        %v1239 = vmul.f32 %v1237, %v1238
        %v1240 = vsel %vm993, 0.0, %v1239
        %v1241 = vsub.f32 0.0, %v1117
        %v1242 = vmul.f32 %v1241, 50.0
        %v1243 = vtanh.pop %v1242
        %v1244 = vsub.f32 0.0, %v1240
        %v1245 = vmul.f32 %v1244, 50.0
        %v1246 = vtanh.pop %v1245
        %v1247 = vsub.f32 %v1243, %v1246
        %v1248 = vsel %vm1076, %v1247, 0.0
        %1249 = vadd.xlane.f32.xlu0 %v1248
        %v1250 = vpop.xlane.xlu0 %1249
        %v1251 = vrot.slane %v1250, 4
        %v1252 = vadd.f32 %v1250, %v1251
        %v1253 = vrot.slane %v1252, 2
        %v1254 = vadd.f32 %v1252, %v1253
        %v1255 = vrot.slane %v1254, 1
        %v1256 = vadd.f32 %v1254, %v1255
        %s1257 = vtos %v1256
        %s1258 = sand.u32 2147483647, %s1257
        %s1259 = sadd.f32 %s1258, 0.0
        %v1260 = vsub.f32 0.06451613, %v1117
        %v1261 = vmul.f32 %v1260, 50.0
        %v1262 = vtanh.pop %v1261
        %v1263 = vsub.f32 0.06451613, %v1240
        %v1264 = vmul.f32 %v1263, 50.0
        %v1265 = vtanh.pop %v1264
        %v1266 = vsub.f32 %v1262, %v1265
        %v1267 = vsel %vm1076, %v1266, 0.0
        %1268 = vadd.xlane.f32.xlu0 %v1267
        %v1269 = vpop.xlane.xlu0 %1268
        %v1270 = vrot.slane %v1269, 4
        %v1271 = vadd.f32 %v1269, %v1270
        %v1272 = vrot.slane %v1271, 2
        %v1273 = vadd.f32 %v1271, %v1272
        %v1274 = vrot.slane %v1273, 1
        %v1275 = vadd.f32 %v1273, %v1274
        %s1276 = vtos %v1275
        %s1277 = sand.u32 2147483647, %s1276
        %s1278 = sadd.f32 %s1259, %s1277
        %v1279 = vsub.f32 0.12903225, %v1117
        %v1280 = vmul.f32 %v1279, 50.0
        %v1281 = vtanh.pop %v1280
        %v1282 = vsub.f32 0.12903225, %v1240
        %v1283 = vmul.f32 %v1282, 50.0
        %v1284 = vtanh.pop %v1283
        %v1285 = vsub.f32 %v1281, %v1284
        %v1286 = vsel %vm1076, %v1285, 0.0
        %1287 = vadd.xlane.f32.xlu0 %v1286
        %v1288 = vpop.xlane.xlu0 %1287
        %v1289 = vrot.slane %v1288, 4
        %v1290 = vadd.f32 %v1288, %v1289
        %v1291 = vrot.slane %v1290, 2
        %v1292 = vadd.f32 %v1290, %v1291
        %v1293 = vrot.slane %v1292, 1
        %v1294 = vadd.f32 %v1292, %v1293
        %s1295 = vtos %v1294
        %s1296 = sand.u32 2147483647, %s1295
        %s1297 = sadd.f32 %s1278, %s1296
        %v1298 = vsub.f32 0.19354838, %v1117
        %v1299 = vmul.f32 %v1298, 50.0
        %v1300 = vtanh.pop %v1299
        %v1301 = vsub.f32 0.19354838, %v1240
        %v1302 = vmul.f32 %v1301, 50.0
        %v1303 = vtanh.pop %v1302
        %v1304 = vsub.f32 %v1300, %v1303
        %v1305 = vsel %vm1076, %v1304, 0.0
        %1306 = vadd.xlane.f32.xlu0 %v1305
        %v1307 = vpop.xlane.xlu0 %1306
        %v1308 = vrot.slane %v1307, 4
        %v1309 = vadd.f32 %v1307, %v1308
        %v1310 = vrot.slane %v1309, 2
        %v1311 = vadd.f32 %v1309, %v1310
        %v1312 = vrot.slane %v1311, 1
        %v1313 = vadd.f32 %v1311, %v1312
        %s1314 = vtos %v1313
        %s1315 = sand.u32 2147483647, %s1314
        %s1316 = sadd.f32 %s1297, %s1315
        %v1317 = vsub.f32 0.2580645, %v1117
        %v1318 = vmul.f32 %v1317, 50.0
        %v1319 = vtanh.pop %v1318
        %v1320 = vsub.f32 0.2580645, %v1240
        %v1321 = vmul.f32 %v1320, 50.0
        %v1322 = vtanh.pop %v1321
        %v1323 = vsub.f32 %v1319, %v1322
        %v1324 = vsel %vm1076, %v1323, 0.0
        %1325 = vadd.xlane.f32.xlu0 %v1324
        %v1326 = vpop.xlane.xlu0 %1325
        %v1327 = vrot.slane %v1326, 4
        %v1328 = vadd.f32 %v1326, %v1327
        %v1329 = vrot.slane %v1328, 2
        %v1330 = vadd.f32 %v1328, %v1329
        %v1331 = vrot.slane %v1330, 1
        %v1332 = vadd.f32 %v1330, %v1331
        %s1333 = vtos %v1332
        %s1334 = sand.u32 2147483647, %s1333
        %s1335 = sadd.f32 %s1316, %s1334
        %v1336 = vsub.f32 0.32258064, %v1117
        %v1337 = vmul.f32 %v1336, 50.0
        %v1338 = vtanh.pop %v1337
        %v1339 = vsub.f32 0.32258064, %v1240
        %v1340 = vmul.f32 %v1339, 50.0
        %v1341 = vtanh.pop %v1340
        %v1342 = vsub.f32 %v1338, %v1341
        %v1343 = vsel %vm1076, %v1342, 0.0
        %1344 = vadd.xlane.f32.xlu0 %v1343
        %v1345 = vpop.xlane.xlu0 %1344
        %v1346 = vrot.slane %v1345, 4
        %v1347 = vadd.f32 %v1345, %v1346
        %v1348 = vrot.slane %v1347, 2
        %v1349 = vadd.f32 %v1347, %v1348
        %v1350 = vrot.slane %v1349, 1
        %v1351 = vadd.f32 %v1349, %v1350
        %s1352 = vtos %v1351
        %s1353 = sand.u32 2147483647, %s1352
        %s1354 = sadd.f32 %s1335, %s1353
        %v1355 = vsub.f32 0.38709676, %v1117
        %v1356 = vmul.f32 %v1355, 50.0
        %v1357 = vtanh.pop %v1356
        %v1358 = vsub.f32 0.38709676, %v1240
        %v1359 = vmul.f32 %v1358, 50.0
        %v1360 = vtanh.pop %v1359
        %v1361 = vsub.f32 %v1357, %v1360
        %v1362 = vsel %vm1076, %v1361, 0.0
        %1363 = vadd.xlane.f32.xlu0 %v1362
        %v1364 = vpop.xlane.xlu0 %1363
        %v1365 = vrot.slane %v1364, 4
        %v1366 = vadd.f32 %v1364, %v1365
        %v1367 = vrot.slane %v1366, 2
        %v1368 = vadd.f32 %v1366, %v1367
        %v1369 = vrot.slane %v1368, 1
        %v1370 = vadd.f32 %v1368, %v1369
        %s1371 = vtos %v1370
        %s1372 = sand.u32 2147483647, %s1371
        %s1373 = sadd.f32 %s1354, %s1372
        %v1374 = vsub.f32 0.4516129, %v1117
        %v1375 = vmul.f32 %v1374, 50.0
        %v1376 = vtanh.pop %v1375
        %v1377 = vsub.f32 0.4516129, %v1240
        %v1378 = vmul.f32 %v1377, 50.0
        %v1379 = vtanh.pop %v1378
        %v1380 = vsub.f32 %v1376, %v1379
        %v1381 = vsel %vm1076, %v1380, 0.0
        %1382 = vadd.xlane.f32.xlu0 %v1381
        %v1383 = vpop.xlane.xlu0 %1382
        %v1384 = vrot.slane %v1383, 4
        %v1385 = vadd.f32 %v1383, %v1384
        %v1386 = vrot.slane %v1385, 2
        %v1387 = vadd.f32 %v1385, %v1386
        %v1388 = vrot.slane %v1387, 1
        %v1389 = vadd.f32 %v1387, %v1388
        %s1390 = vtos %v1389
        %s1391 = sand.u32 2147483647, %s1390
        %s1392 = sadd.f32 %s1373, %s1391
        %v1393 = vsub.f32 0.516129, %v1117
        %v1394 = vmul.f32 %v1393, 50.0
        %v1395 = vtanh.pop %v1394
        %v1396 = vsub.f32 0.516129, %v1240
        %v1397 = vmul.f32 %v1396, 50.0
        %v1398 = vtanh.pop %v1397
        %v1399 = vsub.f32 %v1395, %v1398
        %v1400 = vsel %vm1076, %v1399, 0.0
        %1401 = vadd.xlane.f32.xlu0 %v1400
        %v1402 = vpop.xlane.xlu0 %1401
        %v1403 = vrot.slane %v1402, 4
        %v1404 = vadd.f32 %v1402, %v1403
        %v1405 = vrot.slane %v1404, 2
        %v1406 = vadd.f32 %v1404, %v1405
        %v1407 = vrot.slane %v1406, 1
        %v1408 = vadd.f32 %v1406, %v1407
        %s1409 = vtos %v1408
        %s1410 = sand.u32 2147483647, %s1409
        %s1411 = sadd.f32 %s1392, %s1410
        %v1412 = vsub.f32 0.58064514, %v1117
        %v1413 = vmul.f32 %v1412, 50.0
        %v1414 = vtanh.pop %v1413
        %v1415 = vsub.f32 0.58064514, %v1240
        %v1416 = vmul.f32 %v1415, 50.0
        %v1417 = vtanh.pop %v1416
        %v1418 = vsub.f32 %v1414, %v1417
        %v1419 = vsel %vm1076, %v1418, 0.0
        %1420 = vadd.xlane.f32.xlu0 %v1419
        %v1421 = vpop.xlane.xlu0 %1420
        %v1422 = vrot.slane %v1421, 4
        %v1423 = vadd.f32 %v1421, %v1422
        %v1424 = vrot.slane %v1423, 2
        %v1425 = vadd.f32 %v1423, %v1424
        %v1426 = vrot.slane %v1425, 1
        %v1427 = vadd.f32 %v1425, %v1426
        %s1428 = vtos %v1427
        %s1429 = sand.u32 2147483647, %s1428
        %s1430 = sadd.f32 %s1411, %s1429
        %v1431 = vsub.f32 0.6451613, %v1117
        %v1432 = vmul.f32 %v1431, 50.0
        %v1433 = vtanh.pop %v1432
        %v1434 = vsub.f32 0.6451613, %v1240
        %v1435 = vmul.f32 %v1434, 50.0
        %v1436 = vtanh.pop %v1435
        %v1437 = vsub.f32 %v1433, %v1436
        %v1438 = vsel %vm1076, %v1437, 0.0
        %1439 = vadd.xlane.f32.xlu0 %v1438
        %v1440 = vpop.xlane.xlu0 %1439
        %v1441 = vrot.slane %v1440, 4
        %v1442 = vadd.f32 %v1440, %v1441
        %v1443 = vrot.slane %v1442, 2
        %v1444 = vadd.f32 %v1442, %v1443
        %v1445 = vrot.slane %v1444, 1
        %v1446 = vadd.f32 %v1444, %v1445
        %s1447 = vtos %v1446
        %s1448 = sand.u32 2147483647, %s1447
        %s1449 = sadd.f32 %s1430, %s1448
        %v1450 = vsub.f32 0.7096774, %v1117
        %v1451 = vmul.f32 %v1450, 50.0
        %v1452 = vtanh.pop %v1451
        %v1453 = vsub.f32 0.7096774, %v1240
        %v1454 = vmul.f32 %v1453, 50.0
        %v1455 = vtanh.pop %v1454
        %v1456 = vsub.f32 %v1452, %v1455
        %v1457 = vsel %vm1076, %v1456, 0.0
        %1458 = vadd.xlane.f32.xlu0 %v1457
        %v1459 = vpop.xlane.xlu0 %1458
        %v1460 = vrot.slane %v1459, 4
        %v1461 = vadd.f32 %v1459, %v1460
        %v1462 = vrot.slane %v1461, 2
        %v1463 = vadd.f32 %v1461, %v1462
        %v1464 = vrot.slane %v1463, 1
        %v1465 = vadd.f32 %v1463, %v1464
        %s1466 = vtos %v1465
        %s1467 = sand.u32 2147483647, %s1466
        %s1468 = sadd.f32 %s1449, %s1467
        %v1469 = vsub.f32 0.7741935, %v1117
        %v1470 = vmul.f32 %v1469, 50.0
        %v1471 = vtanh.pop %v1470
        %v1472 = vsub.f32 0.7741935, %v1240
        %v1473 = vmul.f32 %v1472, 50.0
        %v1474 = vtanh.pop %v1473
        %v1475 = vsub.f32 %v1471, %v1474
        %v1476 = vsel %vm1076, %v1475, 0.0
        %1477 = vadd.xlane.f32.xlu0 %v1476
        %v1478 = vpop.xlane.xlu0 %1477
        %v1479 = vrot.slane %v1478, 4
        %v1480 = vadd.f32 %v1478, %v1479
        %v1481 = vrot.slane %v1480, 2
        %v1482 = vadd.f32 %v1480, %v1481
        %v1483 = vrot.slane %v1482, 1
        %v1484 = vadd.f32 %v1482, %v1483
        %s1485 = vtos %v1484
        %s1486 = sand.u32 2147483647, %s1485
        %s1487 = sadd.f32 %s1468, %s1486
        %v1488 = vsub.f32 0.83870965, %v1117
        %v1489 = vmul.f32 %v1488, 50.0
        %v1490 = vtanh.pop %v1489
        %v1491 = vsub.f32 0.83870965, %v1240
        %v1492 = vmul.f32 %v1491, 50.0
        %v1493 = vtanh.pop %v1492
        %v1494 = vsub.f32 %v1490, %v1493
        %v1495 = vsel %vm1076, %v1494, 0.0
        %1496 = vadd.xlane.f32.xlu0 %v1495
        %v1497 = vpop.xlane.xlu0 %1496
        %v1498 = vrot.slane %v1497, 4
        %v1499 = vadd.f32 %v1497, %v1498
        %v1500 = vrot.slane %v1499, 2
        %v1501 = vadd.f32 %v1499, %v1500
        %v1502 = vrot.slane %v1501, 1
        %v1503 = vadd.f32 %v1501, %v1502
        %s1504 = vtos %v1503
        %s1505 = sand.u32 2147483647, %s1504
        %s1506 = sadd.f32 %s1487, %s1505
        %v1507 = vsub.f32 0.9032258, %v1117
        %v1508 = vmul.f32 %v1507, 50.0
        %v1509 = vtanh.pop %v1508
        %v1510 = vsub.f32 0.9032258, %v1240
        %v1511 = vmul.f32 %v1510, 50.0
        %v1512 = vtanh.pop %v1511
        %v1513 = vsub.f32 %v1509, %v1512
        %v1514 = vsel %vm1076, %v1513, 0.0
        %1515 = vadd.xlane.f32.xlu0 %v1514
        %v1516 = vpop.xlane.xlu0 %1515
        %v1517 = vrot.slane %v1516, 4
        %v1518 = vadd.f32 %v1516, %v1517
        %v1519 = vrot.slane %v1518, 2
        %v1520 = vadd.f32 %v1518, %v1519
        %v1521 = vrot.slane %v1520, 1
        %v1522 = vadd.f32 %v1520, %v1521
        %s1523 = vtos %v1522
        %s1524 = sand.u32 2147483647, %s1523
        %s1525 = sadd.f32 %s1506, %s1524
        %v1526 = vsub.f32 0.9677419, %v1117
        %v1527 = vmul.f32 %v1526, 50.0
        %v1528 = vtanh.pop %v1527
        %v1529 = vsub.f32 0.9677419, %v1240
        %v1530 = vmul.f32 %v1529, 50.0
        %v1531 = vtanh.pop %v1530
        %v1532 = vsub.f32 %v1528, %v1531
        %v1533 = vsel %vm1076, %v1532, 0.0
        %1534 = vadd.xlane.f32.xlu0 %v1533
        %v1535 = vpop.xlane.xlu0 %1534
        %v1536 = vrot.slane %v1535, 4
        %v1537 = vadd.f32 %v1535, %v1536
        %v1538 = vrot.slane %v1537, 2
        %v1539 = vadd.f32 %v1537, %v1538
        %v1540 = vrot.slane %v1539, 1
        %v1541 = vadd.f32 %v1539, %v1540
        %s1542 = vtos %v1541
        %s1543 = sand.u32 2147483647, %s1542
        %s1544 = sadd.f32 %s1525, %s1543
        %v1545 = vsub.f32 1.032258, %v1117
        %v1546 = vmul.f32 %v1545, 50.0
        %v1547 = vtanh.pop %v1546
        %v1548 = vsub.f32 1.032258, %v1240
        %v1549 = vmul.f32 %v1548, 50.0
        %v1550 = vtanh.pop %v1549
        %v1551 = vsub.f32 %v1547, %v1550
        %v1552 = vsel %vm1076, %v1551, 0.0
        %1553 = vadd.xlane.f32.xlu0 %v1552
        %v1554 = vpop.xlane.xlu0 %1553
        %v1555 = vrot.slane %v1554, 4
        %v1556 = vadd.f32 %v1554, %v1555
        %v1557 = vrot.slane %v1556, 2
        %v1558 = vadd.f32 %v1556, %v1557
        %v1559 = vrot.slane %v1558, 1
        %v1560 = vadd.f32 %v1558, %v1559
        %s1561 = vtos %v1560
        %s1562 = sand.u32 2147483647, %s1561
        %s1563 = sadd.f32 %s1544, %s1562
        %v1564 = vsub.f32 1.0967742, %v1117
        %v1565 = vmul.f32 %v1564, 50.0
        %v1566 = vtanh.pop %v1565
        %v1567 = vsub.f32 1.0967742, %v1240
        %v1568 = vmul.f32 %v1567, 50.0
        %v1569 = vtanh.pop %v1568
        %v1570 = vsub.f32 %v1566, %v1569
        %v1571 = vsel %vm1076, %v1570, 0.0
        %1572 = vadd.xlane.f32.xlu0 %v1571
        %v1573 = vpop.xlane.xlu0 %1572
        %v1574 = vrot.slane %v1573, 4
        %v1575 = vadd.f32 %v1573, %v1574
        %v1576 = vrot.slane %v1575, 2
        %v1577 = vadd.f32 %v1575, %v1576
        %v1578 = vrot.slane %v1577, 1
        %v1579 = vadd.f32 %v1577, %v1578
        %s1580 = vtos %v1579
        %s1581 = sand.u32 2147483647, %s1580
        %s1582 = sadd.f32 %s1563, %s1581
        %v1583 = vsub.f32 1.1612903, %v1117
        %v1584 = vmul.f32 %v1583, 50.0
        %v1585 = vtanh.pop %v1584
        %v1586 = vsub.f32 1.1612903, %v1240
        %v1587 = vmul.f32 %v1586, 50.0
        %v1588 = vtanh.pop %v1587
        %v1589 = vsub.f32 %v1585, %v1588
        %v1590 = vsel %vm1076, %v1589, 0.0
        %1591 = vadd.xlane.f32.xlu0 %v1590
        %v1592 = vpop.xlane.xlu0 %1591
        %v1593 = vrot.slane %v1592, 4
        %v1594 = vadd.f32 %v1592, %v1593
        %v1595 = vrot.slane %v1594, 2
        %v1596 = vadd.f32 %v1594, %v1595
        %v1597 = vrot.slane %v1596, 1
        %v1598 = vadd.f32 %v1596, %v1597
        %s1599 = vtos %v1598
        %s1600 = sand.u32 2147483647, %s1599
        %s1601 = sadd.f32 %s1582, %s1600
        %v1602 = vsub.f32 1.2258065, %v1117
        %v1603 = vmul.f32 %v1602, 50.0
        %v1604 = vtanh.pop %v1603
        %v1605 = vsub.f32 1.2258065, %v1240
        %v1606 = vmul.f32 %v1605, 50.0
        %v1607 = vtanh.pop %v1606
        %v1608 = vsub.f32 %v1604, %v1607
        %v1609 = vsel %vm1076, %v1608, 0.0
        %1610 = vadd.xlane.f32.xlu0 %v1609
        %v1611 = vpop.xlane.xlu0 %1610
        %v1612 = vrot.slane %v1611, 4
        %v1613 = vadd.f32 %v1611, %v1612
        %v1614 = vrot.slane %v1613, 2
        %v1615 = vadd.f32 %v1613, %v1614
        %v1616 = vrot.slane %v1615, 1
        %v1617 = vadd.f32 %v1615, %v1616
        %s1618 = vtos %v1617
        %s1619 = sand.u32 2147483647, %s1618
        %s1620 = sadd.f32 %s1601, %s1619
        %v1621 = vsub.f32 1.2903225, %v1117
        %v1622 = vmul.f32 %v1621, 50.0
        %v1623 = vtanh.pop %v1622
        %v1624 = vsub.f32 1.2903225, %v1240
        %v1625 = vmul.f32 %v1624, 50.0
        %v1626 = vtanh.pop %v1625
        %v1627 = vsub.f32 %v1623, %v1626
        %v1628 = vsel %vm1076, %v1627, 0.0
        %1629 = vadd.xlane.f32.xlu0 %v1628
        %v1630 = vpop.xlane.xlu0 %1629
        %v1631 = vrot.slane %v1630, 4
        %v1632 = vadd.f32 %v1630, %v1631
        %v1633 = vrot.slane %v1632, 2
        %v1634 = vadd.f32 %v1632, %v1633
        %v1635 = vrot.slane %v1634, 1
        %v1636 = vadd.f32 %v1634, %v1635
        %s1637 = vtos %v1636
        %s1638 = sand.u32 2147483647, %s1637
        %s1639 = sadd.f32 %s1620, %s1638
        %v1640 = vsub.f32 1.3548387, %v1117
        %v1641 = vmul.f32 %v1640, 50.0
        %v1642 = vtanh.pop %v1641
        %v1643 = vsub.f32 1.3548387, %v1240
        %v1644 = vmul.f32 %v1643, 50.0
        %v1645 = vtanh.pop %v1644
        %v1646 = vsub.f32 %v1642, %v1645
        %v1647 = vsel %vm1076, %v1646, 0.0
        %1648 = vadd.xlane.f32.xlu0 %v1647
        %v1649 = vpop.xlane.xlu0 %1648
        %v1650 = vrot.slane %v1649, 4
        %v1651 = vadd.f32 %v1649, %v1650
        %v1652 = vrot.slane %v1651, 2
        %v1653 = vadd.f32 %v1651, %v1652
        %v1654 = vrot.slane %v1653, 1
        %v1655 = vadd.f32 %v1653, %v1654
        %s1656 = vtos %v1655
        %s1657 = sand.u32 2147483647, %s1656
        %s1658 = sadd.f32 %s1639, %s1657
        %v1659 = vsub.f32 1.4193548, %v1117
        %v1660 = vmul.f32 %v1659, 50.0
        %v1661 = vtanh.pop %v1660
        %v1662 = vsub.f32 1.4193548, %v1240
        %v1663 = vmul.f32 %v1662, 50.0
        %v1664 = vtanh.pop %v1663
        %v1665 = vsub.f32 %v1661, %v1664
        %v1666 = vsel %vm1076, %v1665, 0.0
        %1667 = vadd.xlane.f32.xlu0 %v1666
        %v1668 = vpop.xlane.xlu0 %1667
        %v1669 = vrot.slane %v1668, 4
        %v1670 = vadd.f32 %v1668, %v1669
        %v1671 = vrot.slane %v1670, 2
        %v1672 = vadd.f32 %v1670, %v1671
        %v1673 = vrot.slane %v1672, 1
        %v1674 = vadd.f32 %v1672, %v1673
        %s1675 = vtos %v1674
        %s1676 = sand.u32 2147483647, %s1675
        %s1677 = sadd.f32 %s1658, %s1676
        %v1678 = vsub.f32 1.483871, %v1117
        %v1679 = vmul.f32 %v1678, 50.0
        %v1680 = vtanh.pop %v1679
        %v1681 = vsub.f32 1.483871, %v1240
        %v1682 = vmul.f32 %v1681, 50.0
        %v1683 = vtanh.pop %v1682
        %v1684 = vsub.f32 %v1680, %v1683
        %v1685 = vsel %vm1076, %v1684, 0.0
        %1686 = vadd.xlane.f32.xlu0 %v1685
        %v1687 = vpop.xlane.xlu0 %1686
        %v1688 = vrot.slane %v1687, 4
        %v1689 = vadd.f32 %v1687, %v1688
        %v1690 = vrot.slane %v1689, 2
        %v1691 = vadd.f32 %v1689, %v1690
        %v1692 = vrot.slane %v1691, 1
        %v1693 = vadd.f32 %v1691, %v1692
        %s1694 = vtos %v1693
        %s1695 = sand.u32 2147483647, %s1694
        %s1696 = sadd.f32 %s1677, %s1695
        %v1697 = vsub.f32 1.548387, %v1117
        %v1698 = vmul.f32 %v1697, 50.0
        %v1699 = vtanh.pop %v1698
        %v1700 = vsub.f32 1.548387, %v1240
        %v1701 = vmul.f32 %v1700, 50.0
        %v1702 = vtanh.pop %v1701
        %v1703 = vsub.f32 %v1699, %v1702
        %v1704 = vsel %vm1076, %v1703, 0.0
        %1705 = vadd.xlane.f32.xlu0 %v1704
        %v1706 = vpop.xlane.xlu0 %1705
        %v1707 = vrot.slane %v1706, 4
        %v1708 = vadd.f32 %v1706, %v1707
        %v1709 = vrot.slane %v1708, 2
        %v1710 = vadd.f32 %v1708, %v1709
        %v1711 = vrot.slane %v1710, 1
        %v1712 = vadd.f32 %v1710, %v1711
        %s1713 = vtos %v1712
        %s1714 = sand.u32 2147483647, %s1713
        %s1715 = sadd.f32 %s1696, %s1714
        %v1716 = vsub.f32 1.6129032, %v1117
        %v1717 = vmul.f32 %v1716, 50.0
        %v1718 = vtanh.pop %v1717
        %v1719 = vsub.f32 1.6129032, %v1240
        %v1720 = vmul.f32 %v1719, 50.0
        %v1721 = vtanh.pop %v1720
        %v1722 = vsub.f32 %v1718, %v1721
        %v1723 = vsel %vm1076, %v1722, 0.0
        %1724 = vadd.xlane.f32.xlu0 %v1723
        %v1725 = vpop.xlane.xlu0 %1724
        %v1726 = vrot.slane %v1725, 4
        %v1727 = vadd.f32 %v1725, %v1726
        %v1728 = vrot.slane %v1727, 2
        %v1729 = vadd.f32 %v1727, %v1728
        %v1730 = vrot.slane %v1729, 1
        %v1731 = vadd.f32 %v1729, %v1730
        %s1732 = vtos %v1731
        %s1733 = sand.u32 2147483647, %s1732
        %s1734 = sadd.f32 %s1715, %s1733
        %v1735 = vsub.f32 1.6774193, %v1117
        %v1736 = vmul.f32 %v1735, 50.0
        %v1737 = vtanh.pop %v1736
        %v1738 = vsub.f32 1.6774193, %v1240
        %v1739 = vmul.f32 %v1738, 50.0
        %v1740 = vtanh.pop %v1739
        %v1741 = vsub.f32 %v1737, %v1740
        %v1742 = vsel %vm1076, %v1741, 0.0
        %1743 = vadd.xlane.f32.xlu0 %v1742
        %v1744 = vpop.xlane.xlu0 %1743
        %v1745 = vrot.slane %v1744, 4
        %v1746 = vadd.f32 %v1744, %v1745
        %v1747 = vrot.slane %v1746, 2
        %v1748 = vadd.f32 %v1746, %v1747
        %v1749 = vrot.slane %v1748, 1
        %v1750 = vadd.f32 %v1748, %v1749
        %s1751 = vtos %v1750
        %s1752 = sand.u32 2147483647, %s1751
        %s1753 = sadd.f32 %s1734, %s1752
        %v1754 = vsub.f32 1.7419355, %v1117
        %v1755 = vmul.f32 %v1754, 50.0
        %v1756 = vtanh.pop %v1755
        %v1757 = vsub.f32 1.7419355, %v1240
        %v1758 = vmul.f32 %v1757, 50.0
        %v1759 = vtanh.pop %v1758
        %v1760 = vsub.f32 %v1756, %v1759
        %v1761 = vsel %vm1076, %v1760, 0.0
        %1762 = vadd.xlane.f32.xlu0 %v1761
        %v1763 = vpop.xlane.xlu0 %1762
        %v1764 = vrot.slane %v1763, 4
        %v1765 = vadd.f32 %v1763, %v1764
        %v1766 = vrot.slane %v1765, 2
        %v1767 = vadd.f32 %v1765, %v1766
        %v1768 = vrot.slane %v1767, 1
        %v1769 = vadd.f32 %v1767, %v1768
        %s1770 = vtos %v1769
        %s1771 = sand.u32 2147483647, %s1770
        %s1772 = sadd.f32 %s1753, %s1771
        %v1773 = vsub.f32 1.8064516, %v1117
        %v1774 = vmul.f32 %v1773, 50.0
        %v1775 = vtanh.pop %v1774
        %v1776 = vsub.f32 1.8064516, %v1240
        %v1777 = vmul.f32 %v1776, 50.0
        %v1778 = vtanh.pop %v1777
        %v1779 = vsub.f32 %v1775, %v1778
        %v1780 = vsel %vm1076, %v1779, 0.0
        %1781 = vadd.xlane.f32.xlu0 %v1780
        %v1782 = vpop.xlane.xlu0 %1781
        %v1783 = vrot.slane %v1782, 4
        %v1784 = vadd.f32 %v1782, %v1783
        %v1785 = vrot.slane %v1784, 2
        %v1786 = vadd.f32 %v1784, %v1785
        %v1787 = vrot.slane %v1786, 1
        %v1788 = vadd.f32 %v1786, %v1787
        %s1789 = vtos %v1788
        %s1790 = sand.u32 2147483647, %s1789
        %s1791 = sadd.f32 %s1772, %s1790
        %v1792 = vsub.f32 1.8709677, %v1117
        %v1793 = vmul.f32 %v1792, 50.0
        %v1794 = vtanh.pop %v1793
        %v1795 = vsub.f32 1.8709677, %v1240
        %v1796 = vmul.f32 %v1795, 50.0
        %v1797 = vtanh.pop %v1796
        %v1798 = vsub.f32 %v1794, %v1797
        %v1799 = vsel %vm1076, %v1798, 0.0
        %1800 = vadd.xlane.f32.xlu0 %v1799
        %v1801 = vpop.xlane.xlu0 %1800
        %v1802 = vrot.slane %v1801, 4
        %v1803 = vadd.f32 %v1801, %v1802
        %v1804 = vrot.slane %v1803, 2
        %v1805 = vadd.f32 %v1803, %v1804
        %v1806 = vrot.slane %v1805, 1
        %v1807 = vadd.f32 %v1805, %v1806
        %s1808 = vtos %v1807
        %s1809 = sand.u32 2147483647, %s1808
        %s1810 = sadd.f32 %s1791, %s1809
        %v1811 = vsub.f32 1.9354838, %v1117
        %v1812 = vmul.f32 %v1811, 50.0
        %v1813 = vtanh.pop %v1812
        %v1814 = vsub.f32 1.9354838, %v1240
        %v1815 = vmul.f32 %v1814, 50.0
        %v1816 = vtanh.pop %v1815
        %v1817 = vsub.f32 %v1813, %v1816
        %v1818 = vsel %vm1076, %v1817, 0.0
        %1819 = vadd.xlane.f32.xlu0 %v1818
        %v1820 = vpop.xlane.xlu0 %1819
        %v1821 = vrot.slane %v1820, 4
        %v1822 = vadd.f32 %v1820, %v1821
        %v1823 = vrot.slane %v1822, 2
        %v1824 = vadd.f32 %v1822, %v1823
        %v1825 = vrot.slane %v1824, 1
        %v1826 = vadd.f32 %v1824, %v1825
        %s1827 = vtos %v1826
        %s1828 = sand.u32 2147483647, %s1827
        %s1829 = sadd.f32 %s1810, %s1828
        %v1830 = vsub.f32 2.0, %v1117
        %v1831 = vmul.f32 %v1830, 50.0
        %v1832 = vtanh.pop %v1831
        %v1833 = vsub.f32 2.0, %v1240
        %v1834 = vmul.f32 %v1833, 50.0
        %v1835 = vtanh.pop %v1834
        %v1836 = vsub.f32 %v1832, %v1835
        %v1837 = vsel %vm1076, %v1836, 0.0
        %1838 = vadd.xlane.f32.xlu0 %v1837
        %v1839 = vpop.xlane.xlu0 %1838
        %v1840 = vrot.slane %v1839, 4
        %v1841 = vadd.f32 %v1839, %v1840
        %v1842 = vrot.slane %v1841, 2
        %v1843 = vadd.f32 %v1841, %v1842
        %v1844 = vrot.slane %v1843, 1
        %v1845 = vadd.f32 %v1843, %v1844
        %s1846 = vtos %v1845
        %s1847 = sand.u32 2147483647, %s1846
        %s1848 = sadd.f32 %s1829, %s1847
        %s1849 = smul.f32 %s1848, 0.0078125
        %s1850 = smul.f32 %s1849, 0.1
        %s1851 = sadd.f32 %s988, %s1850
        %vm1852 = vcmp.eq.s32.totalorder %v992, 0
        %vm1853 = vcmp.eq.s32.totalorder %v992, 1
        %v1854 = vstv %s988
        %v1855 = vstv %s1850
        %v1856 = vsel %vm1853, %v1854, %v1855
        %v1857 = vstv %s1851
        %v1858 = vsel %vm1852, %v1857, %v1856
        %1859 = vst [vmem:[%s286] sm:$0xff] %v1858
        %s1860 = sand.u32 %s103, 1
        %s1861 = scalar_lea.sflag [#allocation4], %s1860
        %s1862 = sand.u32 %s103, 1
        %s1863 = smul.addr %s1862, 8
        %s1864 = scalar_lea.vmem [#allocation8], %s1863
        %s1865 = sand.u32 %s27, 1
        %s1866 = scalar_lea.sflag [#allocation10], %s1865
        %s1867 = sand.u32 %s129, 1
        %s1868 = smul.addr %s1867, 8
        %s1869 = scalar_lea.vmem [#allocation9], %s1868
        %s1870 = sand.u32 %s27, 1
        %s1871 = scalar_lea.sflag [#allocation10], %s1870
        %s1872 = sand.u32 %s155, 1
        %s1873 = smul.addr %s1872, 8
        %s1874 = scalar_lea.vmem [#allocation11], %s1873
        // Predicated region
        $region45: #{tpu_custom_call.1} parent=31 // pred_check
          %p1875 = pneg %p113
        $region46: #{tpu_custom_call.1} parent=31 // pred_check_branch
          %1877 = sbr.rel (%p1875) target = $region48
        $region47: #{tpu_custom_call.1} parent=31 // pred_region
          %s1879 = ssub.s32 128, 128
          %1880 = vsyncadd %s1861, %s1879
          %s1881 = smul.addr %s27, 128
          %s1882 = scalar_lea.hbm %s3, %s1881
          %s1884 = sshll.u32 %s1864, 4
          %s1885 = int_to_ptr.vmem [resolvable:$true] %s1884
          %1887 = dma.vmem_to_hbm [thread:$0]  %s1885, 128, %s1882, %s1861
        $region48: #{tpu_custom_call.1} parent=31 // pred_fallthru
          _
        // Predicated region
        $region49: #{tpu_custom_call.1} parent=31 // pred_check
          %p1888 = pneg %p139
        $region50: #{tpu_custom_call.1} parent=31 // pred_check_branch
          %1890 = sbr.rel (%p1888) target = $region52
        $region51: #{tpu_custom_call.1} parent=31 // pred_region
          %s1892 = ssub.s32 128, 128
          %1893 = vsyncadd %s1866, %s1892
          %s1894 = smul.addr %s27, 128
          %s1895 = scalar_lea.hbm %s4, %s1894
          %s1897 = sshll.u32 %s1869, 4
          %s1898 = int_to_ptr.vmem [resolvable:$true] %s1897
          %1900 = dma.vmem_to_hbm [thread:$0]  %s1898, 128, %s1895, %s1866
        $region52: #{tpu_custom_call.1} parent=31 // pred_fallthru
          _
        // Predicated region
        $region53: #{tpu_custom_call.1} parent=31 // pred_check
          %p1901 = pneg %p165
        $region54: #{tpu_custom_call.1} parent=31 // pred_check_branch
          %1903 = sbr.rel (%p1901) target = $region56
        $region55: #{tpu_custom_call.1} parent=31 // pred_region
          %s1905 = ssub.s32 128, 128
          %1906 = vsyncadd %s1871, %s1905
          %s1907 = smul.addr %s27, 128
          %s1908 = scalar_lea.hbm %s5, %s1907
          %s1910 = sshll.u32 %s1874, 4
          %s1911 = int_to_ptr.vmem [resolvable:$true] %s1910
          %1913 = dma.vmem_to_hbm [thread:$0]  %s1911, 128, %s1908, %s1871
        $region56: #{tpu_custom_call.1} parent=31 // pred_fallthru
          _
      $region32: #{tpu_custom_call.1} parent=5 // pred_fallthru
        _
      %p1914 = scmp.le.s32.totalorder 2, %s22
      // Predicated region
      $region57: #{tpu_custom_call.1} parent=5 // pred_check
        %p1915 = pneg %p1914
      $region58: #{tpu_custom_call.1} parent=5 // pred_check_branch
        %1917 = sbr.rel (%p1915) target = $region60
      $region59: #{tpu_custom_call.1} parent=5 // pred_region
        %s1918 = ssub.s32 %s22, 2
        // Predicated region
        $region61: #{tpu_custom_call.1} parent=59 // pred_check
          %p1919 = pneg %p119
        $region62: #{tpu_custom_call.1} parent=59 // pred_check_branch
          %1921 = sbr.rel (%p1919) target = $region64
        $region63: #{tpu_custom_call.1} parent=59 // pred_region
          %s1922 = sand.u32 %s104, 1
          %s1923 = scalar_lea.sflag [#allocation4], %s1922
          %s1924 = sand.u32 %s104, 1
          %s1925 = smul.addr %s1924, 8
          %s1926 = scalar_lea.vmem [#allocation8], %s1925
          %1927 = dma.done %s1923, 128
        $region64: #{tpu_custom_call.1} parent=59 // pred_fallthru
          _
        // Predicated region
        $region65: #{tpu_custom_call.1} parent=59 // pred_check
          %p1928 = pneg %p145
        $region66: #{tpu_custom_call.1} parent=59 // pred_check_branch
          %1930 = sbr.rel (%p1928) target = $region68
        $region67: #{tpu_custom_call.1} parent=59 // pred_region
          %s1931 = sand.u32 %s28, 1
          %s1932 = scalar_lea.sflag [#allocation10], %s1931
          %s1933 = sand.u32 %s130, 1
          %s1934 = smul.addr %s1933, 8
          %s1935 = scalar_lea.vmem [#allocation9], %s1934
          %1936 = dma.done %s1932, 128
        $region68: #{tpu_custom_call.1} parent=59 // pred_fallthru
          _
        // Predicated region
        $region69: #{tpu_custom_call.1} parent=59 // pred_check
          %p1937 = pneg %p171
        $region70: #{tpu_custom_call.1} parent=59 // pred_check_branch
          %1939 = sbr.rel (%p1937) target = $region72
        $region71: #{tpu_custom_call.1} parent=59 // pred_region
          %s1940 = sand.u32 %s28, 1
          %s1941 = scalar_lea.sflag [#allocation10], %s1940
          %s1942 = sand.u32 %s156, 1
          %s1943 = smul.addr %s1942, 8
          %s1944 = scalar_lea.vmem [#allocation11], %s1943
          %1945 = dma.done %s1941, 128
        $region72: #{tpu_custom_call.1} parent=59 // pred_fallthru
          _
      $region60: #{tpu_custom_call.1} parent=5 // pred_fallthru
        _
    $region6: #{tpu_custom_call.1} parent=1 // loop_footer
      %s26 = sadd.s32 1, %s22
    $region7: #{tpu_custom_call.1} parent=1 // loop_footer_branch
      %21 = sbr.rel target = $region3
    $region8: #{tpu_custom_call.1} parent=1 // loop_exit
      _
    %1946 = vsyncpa [#allocation3], 1
    %s1947 = scalar_lea.sflag [#allocation3], 1
    %1948 = vsyncpa %s1947, 1
    %1949 = vsyncpa [#allocation6], 1
    %1950 = vsyncpa [#allocation4], 1
    %s1951 = scalar_lea.sflag [#allocation4], 1
    %1952 = vsyncpa %s1951, 1
    %1953 = vsyncpa [#allocation10], 1
    %s1954 = scalar_lea.sflag [#allocation10], 1
    %1955 = vsyncpa %s1954, 1

</llo_original>
